<compile_context>
chip_gen: v5e
topology: v5e:2x2
jax: 0.10.0
libtpu: 0.0.40
codegen_flags: <defaults>
</compile_context>

<pallas_src>
import functools
import math

import jax
import jax.numpy as jnp
import numpy as np
from jax import lax
from jax.experimental import pallas as pl
from jax.experimental.pallas import tpu as pltpu

D_MODEL = 32
N_HEADS = 4
HEAD_DIM = D_MODEL // N_HEADS
D_FF = 64
LN_EPS = 1e-5

# Bias / LN slab layout (per layer): (SLAB_ROWS, SLAB_LANES) f32
#   row 0  lanes [0,3D) : fused QKV bias, self-attn
#   row 1  lanes [0,D)  : output-proj bias, self-attn
#   row 2  lanes [0,3D) : fused QKV bias, cross-attn
#   row 3  lanes [0,D)  : output-proj bias, cross-attn
#   row 4  lanes [0,Dff): FFN bias 1
#   row 5  lanes [0,D)  : FFN bias 2
#   rows 6..8  lanes [0,D): LN gains (3)
#   rows 9..11 lanes [0,D): LN biases (3)
SLAB_ROWS = 16
SLAB_LANES = 128


# ---------------------------------------------------------------------------
# Pallas kernel: the FULL decoder stack.  Grid axis = layer index (sequential).
# ---------------------------------------------------------------------------
def _decoder_stack_kernel(x_ref, y_ref, mask_ref,
                          wqkv_s_ref, wo_s_ref, wqkv_c_ref, wo_c_ref,
                          w1_ref, w2_ref, slab_ref,
                          o_ref, attn_ref, *, B, S, Se):
    # Initialize the resident activation from the input at layer 0.
    @pl.when(pl.program_id(0) == 0)
    def _():
        o_ref[...] = x_ref[...]

    x = o_ref[...]            # (B*S, D)   running activation
    y = y_ref[...]            # (B*Se, D)  encoder output (resident, DMA'd once)
    mask = mask_ref[...]      # (S, S)     additive target mask (0 / -1e9)

    # --- unpack the coalesced small-operand slab (static slices, one DMA) ---
    slab = slab_ref[...]                            # (16, 128)
    bqkv_self = slab[0:1, 0:3 * D_MODEL]
    bo_self = slab[1:2, 0:D_MODEL]
    bqkv_cross = slab[2:3, 0:3 * D_MODEL]
    bo_cross = slab[3:4, 0:D_MODEL]
    b1 = slab[4:5, 0:D_FF]
    b2 = slab[5:6, 0:D_MODEL]
    ln_params = [(slab[6 + i:7 + i, 0:D_MODEL], slab[9 + i:10 + i, 0:D_MODEL])
                 for i in range(3)]

    def layer_norm(h, idx):
        g, b = ln_params[idx]
        mu = jnp.mean(h, axis=-1, keepdims=True)
        ms = jnp.mean(h * h, axis=-1, keepdims=True)
        var = ms - mu * mu                          # single-pass variance
        return (h - mu) * lax.rsqrt(var + LN_EPS) * g + b

    scale = 1.0 / math.sqrt(HEAD_DIM)

    def mha(q_in, kv_in, wqkv, wo, bqkv, bo, kv_len, masked, fused_qkv):
        if fused_qkv:
            # single wide projection: (rows, D) @ (D, 3D)
            qkv = jnp.dot(q_in, wqkv, preferred_element_type=jnp.float32) + bqkv
            q = qkv[:, 0:D_MODEL]
            k = qkv[:, D_MODEL:2 * D_MODEL]
            v = qkv[:, 2 * D_MODEL:3 * D_MODEL]
        else:
            # cross-attention: Q from decoder stream, fused KV from encoder
            q = jnp.dot(q_in, wqkv[:, 0:D_MODEL],
                        preferred_element_type=jnp.float32) + bqkv[:, 0:D_MODEL]
            kv = jnp.dot(kv_in, wqkv[:, D_MODEL:],
                         preferred_element_type=jnp.float32) + bqkv[:, D_MODEL:]
            k = kv[:, 0:D_MODEL]
            v = kv[:, D_MODEL:]

        for bi in range(B):            # static loop: sublane-aligned row slices
            qb = q[bi * S:(bi + 1) * S, :]
            kbT = k[bi * kv_len:(bi + 1) * kv_len, :].T     # (D, kv_len): one
            vb = v[bi * kv_len:(bi + 1) * kv_len, :]        # transpose / batch
            acc = jnp.zeros((S, D_MODEL), jnp.float32)
            for h in range(N_HEADS):   # static head loop; no lane concat
                lo, hi = h * HEAD_DIM, (h + 1) * HEAD_DIM
                s = jnp.dot(qb[:, lo:hi], kbT[lo:hi, :],
                            preferred_element_type=jnp.float32) * scale
                if masked:
                    s = s + mask
                s = s - jnp.max(s, axis=-1, keepdims=True)
                p = jnp.exp(s)
                p = p * pl.reciprocal(jnp.sum(p, axis=-1, keepdims=True),
                                      approx=True)
                oh = jnp.dot(p, vb[:, lo:hi],
                             preferred_element_type=jnp.float32)       # (S, hd)
                # fold the output projection in per head -> no head concat
                acc = acc + jnp.dot(oh, wo[lo:hi, :],
                                    preferred_element_type=jnp.float32)
            attn_ref[bi * S:(bi + 1) * S, :] = acc   # direct scratch write
        return attn_ref[...] + bo

    # masked self-attention + residual + LN
    sa = mha(x, x, wqkv_s_ref[...], wo_s_ref[...], bqkv_self, bo_self,
             S, True, True)
    x1 = layer_norm(x + sa, 0)
    # cross-attention over encoder output + residual + LN
    ca = mha(x1, y, wqkv_c_ref[...], wo_c_ref[...], bqkv_cross, bo_cross,
             Se, False, False)
    x2 = layer_norm(x1 + ca, 1)
    # position-wise feed-forward + residual + LN
    h = jnp.maximum(
        jnp.dot(x2, w1_ref[...], preferred_element_type=jnp.float32) + b1, 0.0)
    ff = jnp.dot(h, w2_ref[...], preferred_element_type=jnp.float32) + b2
    o_ref[...] = layer_norm(x2 + ff, 2)


# ---------------------------------------------------------------------------
# Weight repacking: fused QKV weights + coalesced small-operand slab.
# ---------------------------------------------------------------------------
def pack_decoder_params(stacked):
    L = stacked["w_self"].shape[0]

    def fuse_wqkv(w):          # (L, 4, D, D) -> (L, D, 3D)
        return jnp.concatenate([w[:, 0], w[:, 1], w[:, 2]], axis=-1)

    def fuse_bqkv(b):          # (L, 4, D) -> (L, 3D)
        return jnp.concatenate([b[:, 0], b[:, 1], b[:, 2]], axis=-1)

    slab = jnp.zeros((L, SLAB_ROWS, SLAB_LANES), jnp.float32)
    slab = slab.at[:, 0, 0:3 * D_MODEL].set(fuse_bqkv(stacked["b_self"]))
    slab = slab.at[:, 1, 0:D_MODEL].set(stacked["b_self"][:, 3])
    slab = slab.at[:, 2, 0:3 * D_MODEL].set(fuse_bqkv(stacked["b_cross"]))
    slab = slab.at[:, 3, 0:D_MODEL].set(stacked["b_cross"][:, 3])
    slab = slab.at[:, 4, 0:D_FF].set(stacked["b1"][:, 0])
    slab = slab.at[:, 5, 0:D_MODEL].set(stacked["b2"][:, 0])
    slab = slab.at[:, 6:9, 0:D_MODEL].set(stacked["ln_g"])
    slab = slab.at[:, 9:12, 0:D_MODEL].set(stacked["ln_b"])

    return dict(
        wqkv_self=fuse_wqkv(stacked["w_self"]),      # (L, D, 3D)
        wo_self=stacked["w_self"][:, 3],             # (L, D, D)
        wqkv_cross=fuse_wqkv(stacked["w_cross"]),    # (L, D, 3D)
        wo_cross=stacked["w_cross"][:, 3],           # (L, D, D)
        w1=stacked["w1"],                            # (L, D, Dff)
        w2=stacked["w2"],                            # (L, Dff, D)
        slab=slab,                                   # (L, 16, 128)
    )


# ---------------------------------------------------------------------------
# Wrapper: one pallas_call for the whole decoder stack.
# ---------------------------------------------------------------------------
def decoder_forward(x, y, tgt_mask, packed):
    B, S, D = x.shape
    _, Se, _ = y.shape
    L = packed["wqkv_self"].shape[0]

    x_flat = x.reshape(B * S, D)
    y_flat = y.reshape(B * Se, D)

    def const_spec(arr):
        nd = arr.ndim
        return pl.BlockSpec(arr.shape, lambda l, _nd=nd: (0,) * _nd)

    def layer_spec(arr):
        tail = arr.shape[1:]
        nd = len(tail)
        return pl.BlockSpec((None,) + tail, lambda l, _nd=nd: (l,) + (0,) * _nd)

    kernel = functools.partial(_decoder_stack_kernel, B=B, S=S, Se=Se)

    out_flat = pl.pallas_call(
        kernel,
        out_shape=jax.ShapeDtypeStruct((B * S, D), jnp.float32),
        grid=(L,),
        in_specs=[
            const_spec(x_flat),                      # x: resident across layers
            const_spec(y_flat),                      # y: DMA'd once
            const_spec(tgt_mask),                    # mask: DMA'd once
            layer_spec(packed["wqkv_self"]), layer_spec(packed["wo_self"]),
            layer_spec(packed["wqkv_cross"]), layer_spec(packed["wo_cross"]),
            layer_spec(packed["w1"]), layer_spec(packed["w2"]),
            layer_spec(packed["slab"]),
        ],
        out_specs=pl.BlockSpec((B * S, D), lambda l: (0, 0)),  # resident accum
        scratch_shapes=[pltpu.VMEM((B * S, D), jnp.float32)],  # attn accumulator
        compiler_params=pltpu.CompilerParams(
            dimension_semantics=("arbitrary",)),
        # NOTE: if a trace ever shows per-layer weight-DMA stalls, add
        # pipeline_mode=pl.Buffered(3) to the heavy weight layer_specs.
    )(x_flat, y_flat, tgt_mask,
      packed["wqkv_self"], packed["wo_self"],
      packed["wqkv_cross"], packed["wo_cross"],
      packed["w1"], packed["w2"], packed["slab"])

    return out_flat.reshape(B, S, D)


class PallasDecoder:
    """Mirrors the PyTorch Decoder: sequentially applies decoder blocks
    (fused into a single Pallas kernel with a layer grid axis)."""

    def __init__(self, stacked_params):
        self.packed = pack_decoder_params(stacked_params)

    def __call__(self, x, y, tgt_mask):
        return decoder_forward(x, y, tgt_mask, self.packed)


# ---------------------------------------------------------------------------
# Deterministic parameter init (synthetic; no checkpoint loading).
# ---------------------------------------------------------------------------
def init_block_params(key):
    ks = jax.random.split(key, 8)
    sc = 0.02
    return dict(
        w_self=sc * jax.random.normal(ks[0], (4, D_MODEL, D_MODEL), jnp.float32),
        b_self=sc * jax.random.normal(ks[1], (4, D_MODEL), jnp.float32),
        w_cross=sc * jax.random.normal(ks[2], (4, D_MODEL, D_MODEL), jnp.float32),
        b_cross=sc * jax.random.normal(ks[3], (4, D_MODEL), jnp.float32),
        w1=sc * jax.random.normal(ks[4], (D_MODEL, D_FF), jnp.float32),
        b1=sc * jax.random.normal(ks[5], (1, D_FF), jnp.float32),
        w2=sc * jax.random.normal(ks[6], (D_FF, D_MODEL), jnp.float32),
        b2=sc * jax.random.normal(ks[7], (1, D_MODEL), jnp.float32),
        ln_g=jnp.ones((3, D_MODEL), jnp.float32),
        ln_b=jnp.zeros((3, D_MODEL), jnp.float32),
    )


def stack_block_params(blocks):
    """Stack per-block params along a leading layer axis (L, ...)."""
    return {k: jnp.stack([b[k] for b in blocks], axis=0) for k in blocks[0]}


# ---------------------------------------------------------------------------
# Pure-JAX reference for correctness checking.
# ---------------------------------------------------------------------------
def _ref_block(x, y, mask, p):
    def ln(h, g, b):
        mu = h.mean(-1, keepdims=True)
        var = ((h - mu) ** 2).mean(-1, keepdims=True)
        return (h - mu) / jnp.sqrt(var + LN_EPS) * g + b

    def mha(q_in, kv_in, w, b, add_mask):
        q = q_in @ w[0] + b[0]
        k = kv_in @ w[1] + b[1]
        v = kv_in @ w[2] + b[2]
        B_, Sq, _ = q.shape
        Sk = k.shape[1]
        qh = q.reshape(B_, Sq, N_HEADS, HEAD_DIM)
        kh = k.reshape(B_, Sk, N_HEADS, HEAD_DIM)
        vh = v.reshape(B_, Sk, N_HEADS, HEAD_DIM)
        s = jnp.einsum("bqhd,bkhd->bhqk", qh, kh) / math.sqrt(HEAD_DIM)
        if add_mask is not None:
            s = s + add_mask[None, None]
        pr = jax.nn.softmax(s, axis=-1)
        o = jnp.einsum("bhqk,bkhd->bqhd", pr, vh).reshape(B_, Sq, D_MODEL)
        return o @ w[3] + b[3]

    sa = mha(x, x, p["w_self"], p["b_self"], mask)
    x1 = ln(x + sa, p["ln_g"][0], p["ln_b"][0])
    ca = mha(x1, y, p["w_cross"], p["b_cross"], None)
    x2 = ln(x1 + ca, p["ln_g"][1], p["ln_b"][1])
    h = jax.nn.relu(x2 @ p["w1"] + p["b1"])
    ff = h @ p["w2"] + p["b2"]
    return ln(x2 + ff, p["ln_g"][2], p["ln_b"][2])


if __name__ == "__main__":
    key = jax.random.PRNGKey(0)
    B, S, Se = 2, 8, 16
    n_layers = 2

    kx, ky, kp = jax.random.split(key, 3)
    x = jax.random.normal(kx, (B, S, D_MODEL), jnp.float32)      # decoder input
    y = jax.random.normal(ky, (B, Se, D_MODEL), jnp.float32)     # encoder output
    causal = jnp.tril(jnp.ones((S, S), dtype=jnp.bool_))
    tgt_mask = jnp.where(causal, 0.0, -1e9).astype(jnp.float32)  # additive causal mask

    block_keys = jax.random.split(kp, n_layers)
    blocks = [init_block_params(k) for k in block_keys]
    stacked = stack_block_params(blocks)

    decoder = PallasDecoder(stacked)
    out = jax.block_until_ready(decoder(x, y, tgt_mask))

    # pure-JAX reference (per-block loop, identical math)
    ref = x
    for p in blocks:
        ref = _ref_block(ref, y, tgt_mask, p)
    ref = jax.block_until_ready(ref)

    assert out.shape == (B, S, D_MODEL) and out.dtype == jnp.float32
    np.testing.assert_allclose(np.asarray(out), np.asarray(ref), atol=1e-2, rtol=1e-2)
    print("KERNEL_OK")
</pallas_src>

<mosaic_0001>
module attributes {stable_mosaic.version = 11 : i64} {
  func.func @_decoder_stack_kernel(%arg0: i32, %arg1: memref<16x32xf32, #tpu.memory_space<vmem>>, %arg2: memref<32x32xf32, #tpu.memory_space<vmem>>, %arg3: memref<8x8xf32, #tpu.memory_space<vmem>>, %arg4: memref<1x32x96xf32, #tpu.memory_space<vmem>>, %arg5: memref<1x32x32xf32, #tpu.memory_space<vmem>>, %arg6: memref<1x32x96xf32, #tpu.memory_space<vmem>>, %arg7: memref<1x32x32xf32, #tpu.memory_space<vmem>>, %arg8: memref<1x32x64xf32, #tpu.memory_space<vmem>>, %arg9: memref<1x64x32xf32, #tpu.memory_space<vmem>>, %arg10: memref<1x16x128xf32, #tpu.memory_space<vmem>>, %arg11: memref<16x32xf32, #tpu.memory_space<vmem>>, %arg12: memref<16x32xf32, #tpu.memory_space<vmem>>) attributes {dimension_semantics = [#tpu.dimension_semantics<arbitrary>], iteration_bounds = array<i64: 2>, scalar_prefetch = 0 : i64, scratch_operands = 1 : i64, tpu.core_type = #tpu.core_type<tc>, window_params = [{pipeline_mode = #tpu.pipeline_mode<synchronous>, transform_indices = @transform_0, window_bounds = array<i64: 16, 32>}, {pipeline_mode = #tpu.pipeline_mode<synchronous>, transform_indices = @transform_1, window_bounds = array<i64: 32, 32>}, {pipeline_mode = #tpu.pipeline_mode<synchronous>, transform_indices = @transform_2, window_bounds = array<i64: 8, 8>}, {transform_indices = @transform_3, window_bounds = array<i64: 1, 32, 96>}, {transform_indices = @transform_4, window_bounds = array<i64: 1, 32, 32>}, {transform_indices = @transform_5, window_bounds = array<i64: 1, 32, 96>}, {transform_indices = @transform_6, window_bounds = array<i64: 1, 32, 32>}, {transform_indices = @transform_7, window_bounds = array<i64: 1, 32, 64>}, {transform_indices = @transform_8, window_bounds = array<i64: 1, 64, 32>}, {transform_indices = @transform_9, window_bounds = array<i64: 1, 16, 128>}, {pipeline_mode = #tpu.pipeline_mode<synchronous>, transform_indices = @transform_10, window_bounds = array<i64: 16, 32>}]} {
    %c0_i32 = arith.constant 0 : i32
    %0 = arith.cmpi eq, %arg0, %c0_i32 : i32
    %1 = arith.extui %0 : i1 to i32
    %c0_i32_0 = arith.constant 0 : i32
    %2 = arith.cmpi ne, %1, %c0_i32_0 : i32
    scf.if %2 {
      %c0_160 = arith.constant 0 : index
      %c0_161 = arith.constant 0 : index
      %486 = vector.load %arg1[%c0_160, %c0_161] : memref<16x32xf32, #tpu.memory_space<vmem>>, vector<16x32xf32>
      %c0_162 = arith.constant 0 : index
      %c0_163 = arith.constant 0 : index
      %487 = vector.load %arg11[%c0_162, %c0_163] : memref<16x32xf32, #tpu.memory_space<vmem>>, vector<16x32xf32>
      tpu.vector_store %arg11[%c0_162, %c0_163], %486 {strides = array<i32>} : memref<16x32xf32, #tpu.memory_space<vmem>>, vector<16x32xf32>,
    } else {
    }
    %c0 = arith.constant 0 : index
    %c0_1 = arith.constant 0 : index
    %3 = vector.load %arg11[%c0, %c0_1] : memref<16x32xf32, #tpu.memory_space<vmem>>, vector<16x32xf32>
    %c0_2 = arith.constant 0 : index
    %c0_3 = arith.constant 0 : index
    %4 = vector.load %arg2[%c0_2, %c0_3] : memref<32x32xf32, #tpu.memory_space<vmem>>, vector<32x32xf32>
    %c0_4 = arith.constant 0 : index
    %c0_5 = arith.constant 0 : index
    %5 = vector.load %arg3[%c0_4, %c0_5] : memref<8x8xf32, #tpu.memory_space<vmem>>, vector<8x8xf32>
    %c0_6 = arith.constant 0 : index
    %c0_7 = arith.constant 0 : index
    %c0_8 = arith.constant 0 : index
    %6 = vector.load %arg10[%c0_6, %c0_7, %c0_8] : memref<1x16x128xf32, #tpu.memory_space<vmem>>, vector<1x16x128xf32>
    %7 = vector.shape_cast %6 : vector<1x16x128xf32> to vector<16x128xf32>
    %8 = vector.extract_strided_slice %7 {offsets = [0, 0], sizes = [1, 96], strides = [1, 1]} : vector<16x128xf32> to vector<1x96xf32>
    %9 = vector.extract_strided_slice %7 {offsets = [1, 0], sizes = [1, 32], strides = [1, 1]} : vector<16x128xf32> to vector<1x32xf32>
    %10 = vector.extract_strided_slice %7 {offsets = [2, 0], sizes = [1, 96], strides = [1, 1]} : vector<16x128xf32> to vector<1x96xf32>
    %11 = vector.extract_strided_slice %7 {offsets = [3, 0], sizes = [1, 32], strides = [1, 1]} : vector<16x128xf32> to vector<1x32xf32>
    %12 = vector.extract_strided_slice %7 {offsets = [4, 0], sizes = [1, 64], strides = [1, 1]} : vector<16x128xf32> to vector<1x64xf32>
    %13 = vector.extract_strided_slice %7 {offsets = [5, 0], sizes = [1, 32], strides = [1, 1]} : vector<16x128xf32> to vector<1x32xf32>
    %14 = vector.extract_strided_slice %7 {offsets = [6, 0], sizes = [1, 32], strides = [1, 1]} : vector<16x128xf32> to vector<1x32xf32>
    %15 = vector.extract_strided_slice %7 {offsets = [9, 0], sizes = [1, 32], strides = [1, 1]} : vector<16x128xf32> to vector<1x32xf32>
    %16 = vector.extract_strided_slice %7 {offsets = [7, 0], sizes = [1, 32], strides = [1, 1]} : vector<16x128xf32> to vector<1x32xf32>
    %17 = vector.extract_strided_slice %7 {offsets = [10, 0], sizes = [1, 32], strides = [1, 1]} : vector<16x128xf32> to vector<1x32xf32>
    %18 = vector.extract_strided_slice %7 {offsets = [8, 0], sizes = [1, 32], strides = [1, 1]} : vector<16x128xf32> to vector<1x32xf32>
    %19 = vector.extract_strided_slice %7 {offsets = [11, 0], sizes = [1, 32], strides = [1, 1]} : vector<16x128xf32> to vector<1x32xf32>
    %c0_9 = arith.constant 0 : index
    %c0_10 = arith.constant 0 : index
    %c0_11 = arith.constant 0 : index
    %20 = vector.load %arg4[%c0_9, %c0_10, %c0_11] : memref<1x32x96xf32, #tpu.memory_space<vmem>>, vector<1x32x96xf32>
    %21 = vector.shape_cast %20 : vector<1x32x96xf32> to vector<32x96xf32>
    %c0_12 = arith.constant 0 : index
    %c0_13 = arith.constant 0 : index
    %c0_14 = arith.constant 0 : index
    %22 = vector.load %arg5[%c0_12, %c0_13, %c0_14] : memref<1x32x32xf32, #tpu.memory_space<vmem>>, vector<1x32x32xf32>
    %23 = vector.shape_cast %22 : vector<1x32x32xf32> to vector<32x32xf32>
    %cst = arith.constant dense<0.000000e+00> : vector<16x96xf32>
    %24 = tpu.matmul %3, %21, %cst {dimension_numbers = #tpu.dot_dimension_numbers<[1], [0], [0], [1], [0, 0, 1, 1], [], []>} : vector<16x32xf32>, vector<32x96xf32>, vector<16x96xf32> -> vector<16x96xf32>
    %25 = vector.broadcast %8 : vector<1x96xf32> to vector<16x96xf32>
    %26 = arith.addf %24, %25 : vector<16x96xf32>
    %27 = vector.extract_strided_slice %26 {offsets = [0, 0], sizes = [16, 32], strides = [1, 1]} : vector<16x96xf32> to vector<16x32xf32>
    %28 = vector.extract_strided_slice %26 {offsets = [0, 32], sizes = [16, 32], strides = [1, 1]} : vector<16x96xf32> to vector<16x32xf32>
    %29 = vector.extract_strided_slice %26 {offsets = [0, 64], sizes = [16, 32], strides = [1, 1]} : vector<16x96xf32> to vector<16x32xf32>
    %30 = vector.extract_strided_slice %27 {offsets = [0, 0], sizes = [8, 32], strides = [1, 1]} : vector<16x32xf32> to vector<8x32xf32>
    %31 = vector.extract_strided_slice %28 {offsets = [0, 0], sizes = [8, 32], strides = [1, 1]} : vector<16x32xf32> to vector<8x32xf32>
    %32 = tpu.transpose %31, [1, 0] : vector<8x32xf32> -> vector<32x8xf32>
    %33 = vector.extract_strided_slice %29 {offsets = [0, 0], sizes = [8, 32], strides = [1, 1]} : vector<16x32xf32> to vector<8x32xf32>
    %cst_15 = arith.constant 0.000000e+00 : f32
    %34 = vector.broadcast %cst_15 : f32 to vector<8x32xf32>
    %35 = vector.extract_strided_slice %30 {offsets = [0, 0], sizes = [8, 8], strides = [1, 1]} : vector<8x32xf32> to vector<8x8xf32>
    %36 = vector.extract_strided_slice %32 {offsets = [0, 0], sizes = [8, 8], strides = [1, 1]} : vector<32x8xf32> to vector<8x8xf32>
    %cst_16 = arith.constant dense<0.000000e+00> : vector<8x8xf32>
    %37 = tpu.matmul %35, %36, %cst_16 {dimension_numbers = #tpu.dot_dimension_numbers<[1], [0], [0], [1], [0, 0, 1, 1], [], []>} : vector<8x8xf32>, vector<8x8xf32>, vector<8x8xf32> -> vector<8x8xf32>
    %cst_17 = arith.constant 0.353553385 : f32
    %38 = vector.broadcast %cst_17 : f32 to vector<8x8xf32>
    %39 = arith.mulf %37, %38 : vector<8x8xf32>
    %40 = arith.addf %39, %5 : vector<8x8xf32>
    %cst_18 = arith.constant dense<0xFF800000> : vector<8xf32>
    %41 = vector.multi_reduction <maximumf>, %40, %cst_18 [1] : vector<8x8xf32> to vector<8xf32>
    %42 = vector.shape_cast %41 : vector<8xf32> to vector<8x1xf32>
    %43 = vector.broadcast %42 : vector<8x1xf32> to vector<8x8xf32>
    %44 = arith.subf %40, %43 : vector<8x8xf32>
    %45 = math.exp %44 : vector<8x8xf32>
    %cst_19 = arith.constant dense<0.000000e+00> : vector<8xf32>
    %46 = vector.multi_reduction <add>, %45, %cst_19 [1] : vector<8x8xf32> to vector<8xf32>
    %47 = vector.shape_cast %46 : vector<8xf32> to vector<8x1xf32>
    %48 = tpu.reciprocal %47 {approx = true} : vector<8x1xf32> -> vector<8x1xf32>
    %49 = vector.broadcast %48 : vector<8x1xf32> to vector<8x8xf32>
    %50 = arith.mulf %45, %49 : vector<8x8xf32>
    %51 = vector.extract_strided_slice %33 {offsets = [0, 0], sizes = [8, 8], strides = [1, 1]} : vector<8x32xf32> to vector<8x8xf32>
    %cst_20 = arith.constant dense<0.000000e+00> : vector<8x8xf32>
    %52 = tpu.matmul %50, %51, %cst_20 {dimension_numbers = #tpu.dot_dimension_numbers<[1], [0], [0], [1], [0, 0, 1, 1], [], []>} : vector<8x8xf32>, vector<8x8xf32>, vector<8x8xf32> -> vector<8x8xf32>
    %53 = vector.extract_strided_slice %23 {offsets = [0, 0], sizes = [8, 32], strides = [1, 1]} : vector<32x32xf32> to vector<8x32xf32>
    %cst_21 = arith.constant dense<0.000000e+00> : vector<8x32xf32>
    %54 = tpu.matmul %52, %53, %cst_21 {dimension_numbers = #tpu.dot_dimension_numbers<[1], [0], [0], [1], [0, 0, 1, 1], [], []>} : vector<8x8xf32>, vector<8x32xf32>, vector<8x32xf32> -> vector<8x32xf32>
    %55 = arith.addf %34, %54 : vector<8x32xf32>
    %56 = vector.extract_strided_slice %30 {offsets = [0, 8], sizes = [8, 8], strides = [1, 1]} : vector<8x32xf32> to vector<8x8xf32>
    %57 = vector.extract_strided_slice %32 {offsets = [8, 0], sizes = [8, 8], strides = [1, 1]} : vector<32x8xf32> to vector<8x8xf32>
    %cst_22 = arith.constant dense<0.000000e+00> : vector<8x8xf32>
    %58 = tpu.matmul %56, %57, %cst_22 {dimension_numbers = #tpu.dot_dimension_numbers<[1], [0], [0], [1], [0, 0, 1, 1], [], []>} : vector<8x8xf32>, vector<8x8xf32>, vector<8x8xf32> -> vector<8x8xf32>
    %cst_23 = arith.constant 0.353553385 : f32
    %59 = vector.broadcast %cst_23 : f32 to vector<8x8xf32>
    %60 = arith.mulf %58, %59 : vector<8x8xf32>
    %61 = arith.addf %60, %5 : vector<8x8xf32>
    %cst_24 = arith.constant dense<0xFF800000> : vector<8xf32>
    %62 = vector.multi_reduction <maximumf>, %61, %cst_24 [1] : vector<8x8xf32> to vector<8xf32>
    %63 = vector.shape_cast %62 : vector<8xf32> to vector<8x1xf32>
    %64 = vector.broadcast %63 : vector<8x1xf32> to vector<8x8xf32>
    %65 = arith.subf %61, %64 : vector<8x8xf32>
    %66 = math.exp %65 : vector<8x8xf32>
    %cst_25 = arith.constant dense<0.000000e+00> : vector<8xf32>
    %67 = vector.multi_reduction <add>, %66, %cst_25 [1] : vector<8x8xf32> to vector<8xf32>
    %68 = vector.shape_cast %67 : vector<8xf32> to vector<8x1xf32>
    %69 = tpu.reciprocal %68 {approx = true} : vector<8x1xf32> -> vector<8x1xf32>
    %70 = vector.broadcast %69 : vector<8x1xf32> to vector<8x8xf32>
    %71 = arith.mulf %66, %70 : vector<8x8xf32>
    %72 = vector.extract_strided_slice %33 {offsets = [0, 8], sizes = [8, 8], strides = [1, 1]} : vector<8x32xf32> to vector<8x8xf32>
    %cst_26 = arith.constant dense<0.000000e+00> : vector<8x8xf32>
    %73 = tpu.matmul %71, %72, %cst_26 {dimension_numbers = #tpu.dot_dimension_numbers<[1], [0], [0], [1], [0, 0, 1, 1], [], []>} : vector<8x8xf32>, vector<8x8xf32>, vector<8x8xf32> -> vector<8x8xf32>
    %74 = vector.extract_strided_slice %23 {offsets = [8, 0], sizes = [8, 32], strides = [1, 1]} : vector<32x32xf32> to vector<8x32xf32>
    %cst_27 = arith.constant dense<0.000000e+00> : vector<8x32xf32>
    %75 = tpu.matmul %73, %74, %cst_27 {dimension_numbers = #tpu.dot_dimension_numbers<[1], [0], [0], [1], [0, 0, 1, 1], [], []>} : vector<8x8xf32>, vector<8x32xf32>, vector<8x32xf32> -> vector<8x32xf32>
    %76 = arith.addf %55, %75 : vector<8x32xf32>
    %77 = vector.extract_strided_slice %30 {offsets = [0, 16], sizes = [8, 8], strides = [1, 1]} : vector<8x32xf32> to vector<8x8xf32>
    %78 = vector.extract_strided_slice %32 {offsets = [16, 0], sizes = [8, 8], strides = [1, 1]} : vector<32x8xf32> to vector<8x8xf32>
    %cst_28 = arith.constant dense<0.000000e+00> : vector<8x8xf32>
    %79 = tpu.matmul %77, %78, %cst_28 {dimension_numbers = #tpu.dot_dimension_numbers<[1], [0], [0], [1], [0, 0, 1, 1], [], []>} : vector<8x8xf32>, vector<8x8xf32>, vector<8x8xf32> -> vector<8x8xf32>
    %cst_29 = arith.constant 0.353553385 : f32
    %80 = vector.broadcast %cst_29 : f32 to vector<8x8xf32>
    %81 = arith.mulf %79, %80 : vector<8x8xf32>
    %82 = arith.addf %81, %5 : vector<8x8xf32>
    %cst_30 = arith.constant dense<0xFF800000> : vector<8xf32>
    %83 = vector.multi_reduction <maximumf>, %82, %cst_30 [1] : vector<8x8xf32> to vector<8xf32>
    %84 = vector.shape_cast %83 : vector<8xf32> to vector<8x1xf32>
    %85 = vector.broadcast %84 : vector<8x1xf32> to vector<8x8xf32>
    %86 = arith.subf %82, %85 : vector<8x8xf32>
    %87 = math.exp %86 : vector<8x8xf32>
    %cst_31 = arith.constant dense<0.000000e+00> : vector<8xf32>
    %88 = vector.multi_reduction <add>, %87, %cst_31 [1] : vector<8x8xf32> to vector<8xf32>
    %89 = vector.shape_cast %88 : vector<8xf32> to vector<8x1xf32>
    %90 = tpu.reciprocal %89 {approx = true} : vector<8x1xf32> -> vector<8x1xf32>
    %91 = vector.broadcast %90 : vector<8x1xf32> to vector<8x8xf32>
    %92 = arith.mulf %87, %91 : vector<8x8xf32>
    %93 = vector.extract_strided_slice %33 {offsets = [0, 16], sizes = [8, 8], strides = [1, 1]} : vector<8x32xf32> to vector<8x8xf32>
    %cst_32 = arith.constant dense<0.000000e+00> : vector<8x8xf32>
    %94 = tpu.matmul %92, %93, %cst_32 {dimension_numbers = #tpu.dot_dimension_numbers<[1], [0], [0], [1], [0, 0, 1, 1], [], []>} : vector<8x8xf32>, vector<8x8xf32>, vector<8x8xf32> -> vector<8x8xf32>
    %95 = vector.extract_strided_slice %23 {offsets = [16, 0], sizes = [8, 32], strides = [1, 1]} : vector<32x32xf32> to vector<8x32xf32>
    %cst_33 = arith.constant dense<0.000000e+00> : vector<8x32xf32>
    %96 = tpu.matmul %94, %95, %cst_33 {dimension_numbers = #tpu.dot_dimension_numbers<[1], [0], [0], [1], [0, 0, 1, 1], [], []>} : vector<8x8xf32>, vector<8x32xf32>, vector<8x32xf32> -> vector<8x32xf32>
    %97 = arith.addf %76, %96 : vector<8x32xf32>
    %98 = vector.extract_strided_slice %30 {offsets = [0, 24], sizes = [8, 8], strides = [1, 1]} : vector<8x32xf32> to vector<8x8xf32>
    %99 = vector.extract_strided_slice %32 {offsets = [24, 0], sizes = [8, 8], strides = [1, 1]} : vector<32x8xf32> to vector<8x8xf32>
    %cst_34 = arith.constant dense<0.000000e+00> : vector<8x8xf32>
    %100 = tpu.matmul %98, %99, %cst_34 {dimension_numbers = #tpu.dot_dimension_numbers<[1], [0], [0], [1], [0, 0, 1, 1], [], []>} : vector<8x8xf32>, vector<8x8xf32>, vector<8x8xf32> -> vector<8x8xf32>
    %cst_35 = arith.constant 0.353553385 : f32
    %101 = vector.broadcast %cst_35 : f32 to vector<8x8xf32>
    %102 = arith.mulf %100, %101 : vector<8x8xf32>
    %103 = arith.addf %102, %5 : vector<8x8xf32>
    %cst_36 = arith.constant dense<0xFF800000> : vector<8xf32>
    %104 = vector.multi_reduction <maximumf>, %103, %cst_36 [1] : vector<8x8xf32> to vector<8xf32>
    %105 = vector.shape_cast %104 : vector<8xf32> to vector<8x1xf32>
    %106 = vector.broadcast %105 : vector<8x1xf32> to vector<8x8xf32>
    %107 = arith.subf %103, %106 : vector<8x8xf32>
    %108 = math.exp %107 : vector<8x8xf32>
    %cst_37 = arith.constant dense<0.000000e+00> : vector<8xf32>
    %109 = vector.multi_reduction <add>, %108, %cst_37 [1] : vector<8x8xf32> to vector<8xf32>
    %110 = vector.shape_cast %109 : vector<8xf32> to vector<8x1xf32>
    %111 = tpu.reciprocal %110 {approx = true} : vector<8x1xf32> -> vector<8x1xf32>
    %112 = vector.broadcast %111 : vector<8x1xf32> to vector<8x8xf32>
    %113 = arith.mulf %108, %112 : vector<8x8xf32>
    %114 = vector.extract_strided_slice %33 {offsets = [0, 24], sizes = [8, 8], strides = [1, 1]} : vector<8x32xf32> to vector<8x8xf32>
    %cst_38 = arith.constant dense<0.000000e+00> : vector<8x8xf32>
    %115 = tpu.matmul %113, %114, %cst_38 {dimension_numbers = #tpu.dot_dimension_numbers<[1], [0], [0], [1], [0, 0, 1, 1], [], []>} : vector<8x8xf32>, vector<8x8xf32>, vector<8x8xf32> -> vector<8x8xf32>
    %116 = vector.extract_strided_slice %23 {offsets = [24, 0], sizes = [8, 32], strides = [1, 1]} : vector<32x32xf32> to vector<8x32xf32>
    %cst_39 = arith.constant dense<0.000000e+00> : vector<8x32xf32>
    %117 = tpu.matmul %115, %116, %cst_39 {dimension_numbers = #tpu.dot_dimension_numbers<[1], [0], [0], [1], [0, 0, 1, 1], [], []>} : vector<8x8xf32>, vector<8x32xf32>, vector<8x32xf32> -> vector<8x32xf32>
    %118 = arith.addf %97, %117 : vector<8x32xf32>
    %c0_40 = arith.constant 0 : index
    %c0_41 = arith.constant 0 : index
    %119 = vector.load %arg12[%c0_40, %c0_41] : memref<16x32xf32, #tpu.memory_space<vmem>>, vector<8x32xf32>
    tpu.vector_store %arg12[%c0_40, %c0_41], %118 {strides = array<i32>} : memref<16x32xf32, #tpu.memory_space<vmem>>, vector<8x32xf32>,
    %120 = vector.extract_strided_slice %27 {offsets = [8, 0], sizes = [8, 32], strides = [1, 1]} : vector<16x32xf32> to vector<8x32xf32>
    %121 = vector.extract_strided_slice %28 {offsets = [8, 0], sizes = [8, 32], strides = [1, 1]} : vector<16x32xf32> to vector<8x32xf32>
    %122 = tpu.transpose %121, [1, 0] : vector<8x32xf32> -> vector<32x8xf32>
    %123 = vector.extract_strided_slice %29 {offsets = [8, 0], sizes = [8, 32], strides = [1, 1]} : vector<16x32xf32> to vector<8x32xf32>
    %cst_42 = arith.constant 0.000000e+00 : f32
    %124 = vector.broadcast %cst_42 : f32 to vector<8x32xf32>
    %125 = vector.extract_strided_slice %120 {offsets = [0, 0], sizes = [8, 8], strides = [1, 1]} : vector<8x32xf32> to vector<8x8xf32>
    %126 = vector.extract_strided_slice %122 {offsets = [0, 0], sizes = [8, 8], strides = [1, 1]} : vector<32x8xf32> to vector<8x8xf32>
    %cst_43 = arith.constant dense<0.000000e+00> : vector<8x8xf32>
    %127 = tpu.matmul %125, %126, %cst_43 {dimension_numbers = #tpu.dot_dimension_numbers<[1], [0], [0], [1], [0, 0, 1, 1], [], []>} : vector<8x8xf32>, vector<8x8xf32>, vector<8x8xf32> -> vector<8x8xf32>
    %cst_44 = arith.constant 0.353553385 : f32
    %128 = vector.broadcast %cst_44 : f32 to vector<8x8xf32>
    %129 = arith.mulf %127, %128 : vector<8x8xf32>
    %130 = arith.addf %129, %5 : vector<8x8xf32>
    %cst_45 = arith.constant dense<0xFF800000> : vector<8xf32>
    %131 = vector.multi_reduction <maximumf>, %130, %cst_45 [1] : vector<8x8xf32> to vector<8xf32>
    %132 = vector.shape_cast %131 : vector<8xf32> to vector<8x1xf32>
    %133 = vector.broadcast %132 : vector<8x1xf32> to vector<8x8xf32>
    %134 = arith.subf %130, %133 : vector<8x8xf32>
    %135 = math.exp %134 : vector<8x8xf32>
    %cst_46 = arith.constant dense<0.000000e+00> : vector<8xf32>
    %136 = vector.multi_reduction <add>, %135, %cst_46 [1] : vector<8x8xf32> to vector<8xf32>
    %137 = vector.shape_cast %136 : vector<8xf32> to vector<8x1xf32>
    %138 = tpu.reciprocal %137 {approx = true} : vector<8x1xf32> -> vector<8x1xf32>
    %139 = vector.broadcast %138 : vector<8x1xf32> to vector<8x8xf32>
    %140 = arith.mulf %135, %139 : vector<8x8xf32>
    %141 = vector.extract_strided_slice %123 {offsets = [0, 0], sizes = [8, 8], strides = [1, 1]} : vector<8x32xf32> to vector<8x8xf32>
    %cst_47 = arith.constant dense<0.000000e+00> : vector<8x8xf32>
    %142 = tpu.matmul %140, %141, %cst_47 {dimension_numbers = #tpu.dot_dimension_numbers<[1], [0], [0], [1], [0, 0, 1, 1], [], []>} : vector<8x8xf32>, vector<8x8xf32>, vector<8x8xf32> -> vector<8x8xf32>
    %143 = vector.extract_strided_slice %23 {offsets = [0, 0], sizes = [8, 32], strides = [1, 1]} : vector<32x32xf32> to vector<8x32xf32>
    %cst_48 = arith.constant dense<0.000000e+00> : vector<8x32xf32>
    %144 = tpu.matmul %142, %143, %cst_48 {dimension_numbers = #tpu.dot_dimension_numbers<[1], [0], [0], [1], [0, 0, 1, 1], [], []>} : vector<8x8xf32>, vector<8x32xf32>, vector<8x32xf32> -> vector<8x32xf32>
    %145 = arith.addf %124, %144 : vector<8x32xf32>
    %146 = vector.extract_strided_slice %120 {offsets = [0, 8], sizes = [8, 8], strides = [1, 1]} : vector<8x32xf32> to vector<8x8xf32>
    %147 = vector.extract_strided_slice %122 {offsets = [8, 0], sizes = [8, 8], strides = [1, 1]} : vector<32x8xf32> to vector<8x8xf32>
    %cst_49 = arith.constant dense<0.000000e+00> : vector<8x8xf32>
    %148 = tpu.matmul %146, %147, %cst_49 {dimension_numbers = #tpu.dot_dimension_numbers<[1], [0], [0], [1], [0, 0, 1, 1], [], []>} : vector<8x8xf32>, vector<8x8xf32>, vector<8x8xf32> -> vector<8x8xf32>
    %cst_50 = arith.constant 0.353553385 : f32
    %149 = vector.broadcast %cst_50 : f32 to vector<8x8xf32>
    %150 = arith.mulf %148, %149 : vector<8x8xf32>
    %151 = arith.addf %150, %5 : vector<8x8xf32>
    %cst_51 = arith.constant dense<0xFF800000> : vector<8xf32>
    %152 = vector.multi_reduction <maximumf>, %151, %cst_51 [1] : vector<8x8xf32> to vector<8xf32>
    %153 = vector.shape_cast %152 : vector<8xf32> to vector<8x1xf32>
    %154 = vector.broadcast %153 : vector<8x1xf32> to vector<8x8xf32>
    %155 = arith.subf %151, %154 : vector<8x8xf32>
    %156 = math.exp %155 : vector<8x8xf32>
    %cst_52 = arith.constant dense<0.000000e+00> : vector<8xf32>
    %157 = vector.multi_reduction <add>, %156, %cst_52 [1] : vector<8x8xf32> to vector<8xf32>
    %158 = vector.shape_cast %157 : vector<8xf32> to vector<8x1xf32>
    %159 = tpu.reciprocal %158 {approx = true} : vector<8x1xf32> -> vector<8x1xf32>
    %160 = vector.broadcast %159 : vector<8x1xf32> to vector<8x8xf32>
    %161 = arith.mulf %156, %160 : vector<8x8xf32>
    %162 = vector.extract_strided_slice %123 {offsets = [0, 8], sizes = [8, 8], strides = [1, 1]} : vector<8x32xf32> to vector<8x8xf32>
    %cst_53 = arith.constant dense<0.000000e+00> : vector<8x8xf32>
    %163 = tpu.matmul %161, %162, %cst_53 {dimension_numbers = #tpu.dot_dimension_numbers<[1], [0], [0], [1], [0, 0, 1, 1], [], []>} : vector<8x8xf32>, vector<8x8xf32>, vector<8x8xf32> -> vector<8x8xf32>
    %164 = vector.extract_strided_slice %23 {offsets = [8, 0], sizes = [8, 32], strides = [1, 1]} : vector<32x32xf32> to vector<8x32xf32>
    %cst_54 = arith.constant dense<0.000000e+00> : vector<8x32xf32>
    %165 = tpu.matmul %163, %164, %cst_54 {dimension_numbers = #tpu.dot_dimension_numbers<[1], [0], [0], [1], [0, 0, 1, 1], [], []>} : vector<8x8xf32>, vector<8x32xf32>, vector<8x32xf32> -> vector<8x32xf32>
    %166 = arith.addf %145, %165 : vector<8x32xf32>
    %167 = vector.extract_strided_slice %120 {offsets = [0, 16], sizes = [8, 8], strides = [1, 1]} : vector<8x32xf32> to vector<8x8xf32>
    %168 = vector.extract_strided_slice %122 {offsets = [16, 0], sizes = [8, 8], strides = [1, 1]} : vector<32x8xf32> to vector<8x8xf32>
    %cst_55 = arith.constant dense<0.000000e+00> : vector<8x8xf32>
    %169 = tpu.matmul %167, %168, %cst_55 {dimension_numbers = #tpu.dot_dimension_numbers<[1], [0], [0], [1], [0, 0, 1, 1], [], []>} : vector<8x8xf32>, vector<8x8xf32>, vector<8x8xf32> -> vector<8x8xf32>
    %cst_56 = arith.constant 0.353553385 : f32
    %170 = vector.broadcast %cst_56 : f32 to vector<8x8xf32>
    %171 = arith.mulf %169, %170 : vector<8x8xf32>
    %172 = arith.addf %171, %5 : vector<8x8xf32>
    %cst_57 = arith.constant dense<0xFF800000> : vector<8xf32>
    %173 = vector.multi_reduction <maximumf>, %172, %cst_57 [1] : vector<8x8xf32> to vector<8xf32>
    %174 = vector.shape_cast %173 : vector<8xf32> to vector<8x1xf32>
    %175 = vector.broadcast %174 : vector<8x1xf32> to vector<8x8xf32>
    %176 = arith.subf %172, %175 : vector<8x8xf32>
    %177 = math.exp %176 : vector<8x8xf32>
    %cst_58 = arith.constant dense<0.000000e+00> : vector<8xf32>
    %178 = vector.multi_reduction <add>, %177, %cst_58 [1] : vector<8x8xf32> to vector<8xf32>
    %179 = vector.shape_cast %178 : vector<8xf32> to vector<8x1xf32>
    %180 = tpu.reciprocal %179 {approx = true} : vector<8x1xf32> -> vector<8x1xf32>
    %181 = vector.broadcast %180 : vector<8x1xf32> to vector<8x8xf32>
    %182 = arith.mulf %177, %181 : vector<8x8xf32>
    %183 = vector.extract_strided_slice %123 {offsets = [0, 16], sizes = [8, 8], strides = [1, 1]} : vector<8x32xf32> to vector<8x8xf32>
    %cst_59 = arith.constant dense<0.000000e+00> : vector<8x8xf32>
    %184 = tpu.matmul %182, %183, %cst_59 {dimension_numbers = #tpu.dot_dimension_numbers<[1], [0], [0], [1], [0, 0, 1, 1], [], []>} : vector<8x8xf32>, vector<8x8xf32>, vector<8x8xf32> -> vector<8x8xf32>
    %185 = vector.extract_strided_slice %23 {offsets = [16, 0], sizes = [8, 32], strides = [1, 1]} : vector<32x32xf32> to vector<8x32xf32>
    %cst_60 = arith.constant dense<0.000000e+00> : vector<8x32xf32>
    %186 = tpu.matmul %184, %185, %cst_60 {dimension_numbers = #tpu.dot_dimension_numbers<[1], [0], [0], [1], [0, 0, 1, 1], [], []>} : vector<8x8xf32>, vector<8x32xf32>, vector<8x32xf32> -> vector<8x32xf32>
    %187 = arith.addf %166, %186 : vector<8x32xf32>
    %188 = vector.extract_strided_slice %120 {offsets = [0, 24], sizes = [8, 8], strides = [1, 1]} : vector<8x32xf32> to vector<8x8xf32>
    %189 = vector.extract_strided_slice %122 {offsets = [24, 0], sizes = [8, 8], strides = [1, 1]} : vector<32x8xf32> to vector<8x8xf32>
    %cst_61 = arith.constant dense<0.000000e+00> : vector<8x8xf32>
    %190 = tpu.matmul %188, %189, %cst_61 {dimension_numbers = #tpu.dot_dimension_numbers<[1], [0], [0], [1], [0, 0, 1, 1], [], []>} : vector<8x8xf32>, vector<8x8xf32>, vector<8x8xf32> -> vector<8x8xf32>
    %cst_62 = arith.constant 0.353553385 : f32
    %191 = vector.broadcast %cst_62 : f32 to vector<8x8xf32>
    %192 = arith.mulf %190, %191 : vector<8x8xf32>
    %193 = arith.addf %192, %5 : vector<8x8xf32>
    %cst_63 = arith.constant dense<0xFF800000> : vector<8xf32>
    %194 = vector.multi_reduction <maximumf>, %193, %cst_63 [1] : vector<8x8xf32> to vector<8xf32>
    %195 = vector.shape_cast %194 : vector<8xf32> to vector<8x1xf32>
    %196 = vector.broadcast %195 : vector<8x1xf32> to vector<8x8xf32>
    %197 = arith.subf %193, %196 : vector<8x8xf32>
    %198 = math.exp %197 : vector<8x8xf32>
    %cst_64 = arith.constant dense<0.000000e+00> : vector<8xf32>
    %199 = vector.multi_reduction <add>, %198, %cst_64 [1] : vector<8x8xf32> to vector<8xf32>
    %200 = vector.shape_cast %199 : vector<8xf32> to vector<8x1xf32>
    %201 = tpu.reciprocal %200 {approx = true} : vector<8x1xf32> -> vector<8x1xf32>
    %202 = vector.broadcast %201 : vector<8x1xf32> to vector<8x8xf32>
    %203 = arith.mulf %198, %202 : vector<8x8xf32>
    %204 = vector.extract_strided_slice %123 {offsets = [0, 24], sizes = [8, 8], strides = [1, 1]} : vector<8x32xf32> to vector<8x8xf32>
    %cst_65 = arith.constant dense<0.000000e+00> : vector<8x8xf32>
    %205 = tpu.matmul %203, %204, %cst_65 {dimension_numbers = #tpu.dot_dimension_numbers<[1], [0], [0], [1], [0, 0, 1, 1], [], []>} : vector<8x8xf32>, vector<8x8xf32>, vector<8x8xf32> -> vector<8x8xf32>
    %206 = vector.extract_strided_slice %23 {offsets = [24, 0], sizes = [8, 32], strides = [1, 1]} : vector<32x32xf32> to vector<8x32xf32>
    %cst_66 = arith.constant dense<0.000000e+00> : vector<8x32xf32>
    %207 = tpu.matmul %205, %206, %cst_66 {dimension_numbers = #tpu.dot_dimension_numbers<[1], [0], [0], [1], [0, 0, 1, 1], [], []>} : vector<8x8xf32>, vector<8x32xf32>, vector<8x32xf32> -> vector<8x32xf32>
    %208 = arith.addf %187, %207 : vector<8x32xf32>
    %c8 = arith.constant 8 : index
    %c0_67 = arith.constant 0 : index
    %209 = vector.load %arg12[%c8, %c0_67] : memref<16x32xf32, #tpu.memory_space<vmem>>, vector<8x32xf32>
    tpu.vector_store %arg12[%c8, %c0_67], %208 {strides = array<i32>} : memref<16x32xf32, #tpu.memory_space<vmem>>, vector<8x32xf32>,
    %c0_68 = arith.constant 0 : index
    %c0_69 = arith.constant 0 : index
    %210 = vector.load %arg12[%c0_68, %c0_69] : memref<16x32xf32, #tpu.memory_space<vmem>>, vector<16x32xf32>
    %211 = vector.broadcast %9 : vector<1x32xf32> to vector<16x32xf32>
    %212 = arith.addf %210, %211 : vector<16x32xf32>
    %213 = arith.addf %3, %212 : vector<16x32xf32>
    %cst_70 = arith.constant dense<0.000000e+00> : vector<16xf32>
    %214 = vector.multi_reduction <add>, %213, %cst_70 [1] : vector<16x32xf32> to vector<16xf32>
    %215 = vector.shape_cast %214 : vector<16xf32> to vector<16x1xf32>
    %cst_71 = arith.constant 3.200000e+01 : f32
    %216 = vector.broadcast %cst_71 : f32 to vector<16x1xf32>
    %217 = arith.divf %215, %216 : vector<16x1xf32>
    %218 = arith.mulf %213, %213 : vector<16x32xf32>
    %cst_72 = arith.constant dense<0.000000e+00> : vector<16xf32>
    %219 = vector.multi_reduction <add>, %218, %cst_72 [1] : vector<16x32xf32> to vector<16xf32>
    %220 = vector.shape_cast %219 : vector<16xf32> to vector<16x1xf32>
    %cst_73 = arith.constant 3.200000e+01 : f32
    %221 = vector.broadcast %cst_73 : f32 to vector<16x1xf32>
    %222 = arith.divf %220, %221 : vector<16x1xf32>
    %223 = arith.mulf %217, %217 : vector<16x1xf32>
    %224 = arith.subf %222, %223 : vector<16x1xf32>
    %225 = vector.broadcast %217 : vector<16x1xf32> to vector<16x32xf32>
    %226 = arith.subf %213, %225 : vector<16x32xf32>
    %cst_74 = arith.constant 9.99999974E-6 : f32
    %227 = vector.broadcast %cst_74 : f32 to vector<16x1xf32>
    %228 = arith.addf %224, %227 : vector<16x1xf32>
    %229 = math.rsqrt %228 : vector<16x1xf32>
    %230 = vector.broadcast %229 : vector<16x1xf32> to vector<16x32xf32>
    %231 = arith.mulf %226, %230 : vector<16x32xf32>
    %232 = vector.broadcast %14 : vector<1x32xf32> to vector<16x32xf32>
    %233 = arith.mulf %231, %232 : vector<16x32xf32>
    %234 = vector.broadcast %15 : vector<1x32xf32> to vector<16x32xf32>
    %235 = arith.addf %233, %234 : vector<16x32xf32>
    %c0_75 = arith.constant 0 : index
    %c0_76 = arith.constant 0 : index
    %c0_77 = arith.constant 0 : index
    %236 = vector.load %arg6[%c0_75, %c0_76, %c0_77] : memref<1x32x96xf32, #tpu.memory_space<vmem>>, vector<1x32x96xf32>
    %237 = vector.shape_cast %236 : vector<1x32x96xf32> to vector<32x96xf32>
    %c0_78 = arith.constant 0 : index
    %c0_79 = arith.constant 0 : index
    %c0_80 = arith.constant 0 : index
    %238 = vector.load %arg7[%c0_78, %c0_79, %c0_80] : memref<1x32x32xf32, #tpu.memory_space<vmem>>, vector<1x32x32xf32>
    %239 = vector.shape_cast %238 : vector<1x32x32xf32> to vector<32x32xf32>
    %240 = vector.extract_strided_slice %237 {offsets = [0, 0], sizes = [32, 32], strides = [1, 1]} : vector<32x96xf32> to vector<32x32xf32>
    %cst_81 = arith.constant dense<0.000000e+00> : vector<16x32xf32>
    %241 = tpu.matmul %235, %240, %cst_81 {dimension_numbers = #tpu.dot_dimension_numbers<[1], [0], [0], [1], [0, 0, 1, 1], [], []>} : vector<16x32xf32>, vector<32x32xf32>, vector<16x32xf32> -> vector<16x32xf32>
    %242 = vector.extract_strided_slice %10 {offsets = [0, 0], sizes = [1, 32], strides = [1, 1]} : vector<1x96xf32> to vector<1x32xf32>
    %243 = vector.broadcast %242 : vector<1x32xf32> to vector<16x32xf32>
    %244 = arith.addf %241, %243 : vector<16x32xf32>
    %245 = vector.extract_strided_slice %237 {offsets = [0, 32], sizes = [32, 64], strides = [1, 1]} : vector<32x96xf32> to vector<32x64xf32>
    %cst_82 = arith.constant dense<0.000000e+00> : vector<32x64xf32>
    %246 = tpu.matmul %4, %245, %cst_82 {dimension_numbers = #tpu.dot_dimension_numbers<[1], [0], [0], [1], [0, 0, 1, 1], [], []>} : vector<32x32xf32>, vector<32x64xf32>, vector<32x64xf32> -> vector<32x64xf32>
    %247 = vector.extract_strided_slice %10 {offsets = [0, 32], sizes = [1, 64], strides = [1, 1]} : vector<1x96xf32> to vector<1x64xf32>
    %248 = vector.broadcast %247 : vector<1x64xf32> to vector<32x64xf32>
    %249 = arith.addf %246, %248 : vector<32x64xf32>
    %250 = vector.extract_strided_slice %249 {offsets = [0, 0], sizes = [32, 32], strides = [1, 1]} : vector<32x64xf32> to vector<32x32xf32>
    %251 = vector.extract_strided_slice %249 {offsets = [0, 32], sizes = [32, 32], strides = [1, 1]} : vector<32x64xf32> to vector<32x32xf32>
    %252 = vector.extract_strided_slice %244 {offsets = [0, 0], sizes = [8, 32], strides = [1, 1]} : vector<16x32xf32> to vector<8x32xf32>
    %253 = vector.extract_strided_slice %250 {offsets = [0, 0], sizes = [16, 32], strides = [1, 1]} : vector<32x32xf32> to vector<16x32xf32>
    %254 = tpu.transpose %253, [1, 0] : vector<16x32xf32> -> vector<32x16xf32>
    %255 = vector.extract_strided_slice %251 {offsets = [0, 0], sizes = [16, 32], strides = [1, 1]} : vector<32x32xf32> to vector<16x32xf32>
    %cst_83 = arith.constant 0.000000e+00 : f32
    %256 = vector.broadcast %cst_83 : f32 to vector<8x32xf32>
    %257 = vector.extract_strided_slice %252 {offsets = [0, 0], sizes = [8, 8], strides = [1, 1]} : vector<8x32xf32> to vector<8x8xf32>
    %258 = vector.extract_strided_slice %254 {offsets = [0, 0], sizes = [8, 16], strides = [1, 1]} : vector<32x16xf32> to vector<8x16xf32>
    %cst_84 = arith.constant dense<0.000000e+00> : vector<8x16xf32>
    %259 = tpu.matmul %257, %258, %cst_84 {dimension_numbers = #tpu.dot_dimension_numbers<[1], [0], [0], [1], [0, 0, 1, 1], [], []>} : vector<8x8xf32>, vector<8x16xf32>, vector<8x16xf32> -> vector<8x16xf32>
    %cst_85 = arith.constant 0.353553385 : f32
    %260 = vector.broadcast %cst_85 : f32 to vector<8x16xf32>
    %261 = arith.mulf %259, %260 : vector<8x16xf32>
    %cst_86 = arith.constant dense<0xFF800000> : vector<8xf32>
    %262 = vector.multi_reduction <maximumf>, %261, %cst_86 [1] : vector<8x16xf32> to vector<8xf32>
    %263 = vector.shape_cast %262 : vector<8xf32> to vector<8x1xf32>
    %264 = vector.broadcast %263 : vector<8x1xf32> to vector<8x16xf32>
    %265 = arith.subf %261, %264 : vector<8x16xf32>
    %266 = math.exp %265 : vector<8x16xf32>
    %cst_87 = arith.constant dense<0.000000e+00> : vector<8xf32>
    %267 = vector.multi_reduction <add>, %266, %cst_87 [1] : vector<8x16xf32> to vector<8xf32>
    %268 = vector.shape_cast %267 : vector<8xf32> to vector<8x1xf32>
    %269 = tpu.reciprocal %268 {approx = true} : vector<8x1xf32> -> vector<8x1xf32>
    %270 = vector.broadcast %269 : vector<8x1xf32> to vector<8x16xf32>
    %271 = arith.mulf %266, %270 : vector<8x16xf32>
    %272 = vector.extract_strided_slice %255 {offsets = [0, 0], sizes = [16, 8], strides = [1, 1]} : vector<16x32xf32> to vector<16x8xf32>
    %cst_88 = arith.constant dense<0.000000e+00> : vector<8x8xf32>
    %273 = tpu.matmul %271, %272, %cst_88 {dimension_numbers = #tpu.dot_dimension_numbers<[1], [0], [0], [1], [0, 0, 1, 1], [], []>} : vector<8x16xf32>, vector<16x8xf32>, vector<8x8xf32> -> vector<8x8xf32>
    %274 = vector.extract_strided_slice %239 {offsets = [0, 0], sizes = [8, 32], strides = [1, 1]} : vector<32x32xf32> to vector<8x32xf32>
    %cst_89 = arith.constant dense<0.000000e+00> : vector<8x32xf32>
    %275 = tpu.matmul %273, %274, %cst_89 {dimension_numbers = #tpu.dot_dimension_numbers<[1], [0], [0], [1], [0, 0, 1, 1], [], []>} : vector<8x8xf32>, vector<8x32xf32>, vector<8x32xf32> -> vector<8x32xf32>
    %276 = arith.addf %256, %275 : vector<8x32xf32>
    %277 = vector.extract_strided_slice %252 {offsets = [0, 8], sizes = [8, 8], strides = [1, 1]} : vector<8x32xf32> to vector<8x8xf32>
    %278 = vector.extract_strided_slice %254 {offsets = [8, 0], sizes = [8, 16], strides = [1, 1]} : vector<32x16xf32> to vector<8x16xf32>
    %cst_90 = arith.constant dense<0.000000e+00> : vector<8x16xf32>
    %279 = tpu.matmul %277, %278, %cst_90 {dimension_numbers = #tpu.dot_dimension_numbers<[1], [0], [0], [1], [0, 0, 1, 1], [], []>} : vector<8x8xf32>, vector<8x16xf32>, vector<8x16xf32> -> vector<8x16xf32>
    %cst_91 = arith.constant 0.353553385 : f32
    %280 = vector.broadcast %cst_91 : f32 to vector<8x16xf32>
    %281 = arith.mulf %279, %280 : vector<8x16xf32>
    %cst_92 = arith.constant dense<0xFF800000> : vector<8xf32>
    %282 = vector.multi_reduction <maximumf>, %281, %cst_92 [1] : vector<8x16xf32> to vector<8xf32>
    %283 = vector.shape_cast %282 : vector<8xf32> to vector<8x1xf32>
    %284 = vector.broadcast %283 : vector<8x1xf32> to vector<8x16xf32>
    %285 = arith.subf %281, %284 : vector<8x16xf32>
    %286 = math.exp %285 : vector<8x16xf32>
    %cst_93 = arith.constant dense<0.000000e+00> : vector<8xf32>
    %287 = vector.multi_reduction <add>, %286, %cst_93 [1] : vector<8x16xf32> to vector<8xf32>
    %288 = vector.shape_cast %287 : vector<8xf32> to vector<8x1xf32>
    %289 = tpu.reciprocal %288 {approx = true} : vector<8x1xf32> -> vector<8x1xf32>
    %290 = vector.broadcast %289 : vector<8x1xf32> to vector<8x16xf32>
    %291 = arith.mulf %286, %290 : vector<8x16xf32>
    %292 = vector.extract_strided_slice %255 {offsets = [0, 8], sizes = [16, 8], strides = [1, 1]} : vector<16x32xf32> to vector<16x8xf32>
    %cst_94 = arith.constant dense<0.000000e+00> : vector<8x8xf32>
    %293 = tpu.matmul %291, %292, %cst_94 {dimension_numbers = #tpu.dot_dimension_numbers<[1], [0], [0], [1], [0, 0, 1, 1], [], []>} : vector<8x16xf32>, vector<16x8xf32>, vector<8x8xf32> -> vector<8x8xf32>
    %294 = vector.extract_strided_slice %239 {offsets = [8, 0], sizes = [8, 32], strides = [1, 1]} : vector<32x32xf32> to vector<8x32xf32>
    %cst_95 = arith.constant dense<0.000000e+00> : vector<8x32xf32>
    %295 = tpu.matmul %293, %294, %cst_95 {dimension_numbers = #tpu.dot_dimension_numbers<[1], [0], [0], [1], [0, 0, 1, 1], [], []>} : vector<8x8xf32>, vector<8x32xf32>, vector<8x32xf32> -> vector<8x32xf32>
    %296 = arith.addf %276, %295 : vector<8x32xf32>
    %297 = vector.extract_strided_slice %252 {offsets = [0, 16], sizes = [8, 8], strides = [1, 1]} : vector<8x32xf32> to vector<8x8xf32>
    %298 = vector.extract_strided_slice %254 {offsets = [16, 0], sizes = [8, 16], strides = [1, 1]} : vector<32x16xf32> to vector<8x16xf32>
    %cst_96 = arith.constant dense<0.000000e+00> : vector<8x16xf32>
    %299 = tpu.matmul %297, %298, %cst_96 {dimension_numbers = #tpu.dot_dimension_numbers<[1], [0], [0], [1], [0, 0, 1, 1], [], []>} : vector<8x8xf32>, vector<8x16xf32>, vector<8x16xf32> -> vector<8x16xf32>
    %cst_97 = arith.constant 0.353553385 : f32
    %300 = vector.broadcast %cst_97 : f32 to vector<8x16xf32>
    %301 = arith.mulf %299, %300 : vector<8x16xf32>
    %cst_98 = arith.constant dense<0xFF800000> : vector<8xf32>
    %302 = vector.multi_reduction <maximumf>, %301, %cst_98 [1] : vector<8x16xf32> to vector<8xf32>
    %303 = vector.shape_cast %302 : vector<8xf32> to vector<8x1xf32>
    %304 = vector.broadcast %303 : vector<8x1xf32> to vector<8x16xf32>
    %305 = arith.subf %301, %304 : vector<8x16xf32>
    %306 = math.exp %305 : vector<8x16xf32>
    %cst_99 = arith.constant dense<0.000000e+00> : vector<8xf32>
    %307 = vector.multi_reduction <add>, %306, %cst_99 [1] : vector<8x16xf32> to vector<8xf32>
    %308 = vector.shape_cast %307 : vector<8xf32> to vector<8x1xf32>
    %309 = tpu.reciprocal %308 {approx = true} : vector<8x1xf32> -> vector<8x1xf32>
    %310 = vector.broadcast %309 : vector<8x1xf32> to vector<8x16xf32>
    %311 = arith.mulf %306, %310 : vector<8x16xf32>
    %312 = vector.extract_strided_slice %255 {offsets = [0, 16], sizes = [16, 8], strides = [1, 1]} : vector<16x32xf32> to vector<16x8xf32>
    %cst_100 = arith.constant dense<0.000000e+00> : vector<8x8xf32>
    %313 = tpu.matmul %311, %312, %cst_100 {dimension_numbers = #tpu.dot_dimension_numbers<[1], [0], [0], [1], [0, 0, 1, 1], [], []>} : vector<8x16xf32>, vector<16x8xf32>, vector<8x8xf32> -> vector<8x8xf32>
    %314 = vector.extract_strided_slice %239 {offsets = [16, 0], sizes = [8, 32], strides = [1, 1]} : vector<32x32xf32> to vector<8x32xf32>
    %cst_101 = arith.constant dense<0.000000e+00> : vector<8x32xf32>
    %315 = tpu.matmul %313, %314, %cst_101 {dimension_numbers = #tpu.dot_dimension_numbers<[1], [0], [0], [1], [0, 0, 1, 1], [], []>} : vector<8x8xf32>, vector<8x32xf32>, vector<8x32xf32> -> vector<8x32xf32>
    %316 = arith.addf %296, %315 : vector<8x32xf32>
    %317 = vector.extract_strided_slice %252 {offsets = [0, 24], sizes = [8, 8], strides = [1, 1]} : vector<8x32xf32> to vector<8x8xf32>
    %318 = vector.extract_strided_slice %254 {offsets = [24, 0], sizes = [8, 16], strides = [1, 1]} : vector<32x16xf32> to vector<8x16xf32>
    %cst_102 = arith.constant dense<0.000000e+00> : vector<8x16xf32>
    %319 = tpu.matmul %317, %318, %cst_102 {dimension_numbers = #tpu.dot_dimension_numbers<[1], [0], [0], [1], [0, 0, 1, 1], [], []>} : vector<8x8xf32>, vector<8x16xf32>, vector<8x16xf32> -> vector<8x16xf32>
    %cst_103 = arith.constant 0.353553385 : f32
    %320 = vector.broadcast %cst_103 : f32 to vector<8x16xf32>
    %321 = arith.mulf %319, %320 : vector<8x16xf32>
    %cst_104 = arith.constant dense<0xFF800000> : vector<8xf32>
    %322 = vector.multi_reduction <maximumf>, %321, %cst_104 [1] : vector<8x16xf32> to vector<8xf32>
    %323 = vector.shape_cast %322 : vector<8xf32> to vector<8x1xf32>
    %324 = vector.broadcast %323 : vector<8x1xf32> to vector<8x16xf32>
    %325 = arith.subf %321, %324 : vector<8x16xf32>
    %326 = math.exp %325 : vector<8x16xf32>
    %cst_105 = arith.constant dense<0.000000e+00> : vector<8xf32>
    %327 = vector.multi_reduction <add>, %326, %cst_105 [1] : vector<8x16xf32> to vector<8xf32>
    %328 = vector.shape_cast %327 : vector<8xf32> to vector<8x1xf32>
    %329 = tpu.reciprocal %328 {approx = true} : vector<8x1xf32> -> vector<8x1xf32>
    %330 = vector.broadcast %329 : vector<8x1xf32> to vector<8x16xf32>
    %331 = arith.mulf %326, %330 : vector<8x16xf32>
    %332 = vector.extract_strided_slice %255 {offsets = [0, 24], sizes = [16, 8], strides = [1, 1]} : vector<16x32xf32> to vector<16x8xf32>
    %cst_106 = arith.constant dense<0.000000e+00> : vector<8x8xf32>
    %333 = tpu.matmul %331, %332, %cst_106 {dimension_numbers = #tpu.dot_dimension_numbers<[1], [0], [0], [1], [0, 0, 1, 1], [], []>} : vector<8x16xf32>, vector<16x8xf32>, vector<8x8xf32> -> vector<8x8xf32>
    %334 = vector.extract_strided_slice %239 {offsets = [24, 0], sizes = [8, 32], strides = [1, 1]} : vector<32x32xf32> to vector<8x32xf32>
    %cst_107 = arith.constant dense<0.000000e+00> : vector<8x32xf32>
    %335 = tpu.matmul %333, %334, %cst_107 {dimension_numbers = #tpu.dot_dimension_numbers<[1], [0], [0], [1], [0, 0, 1, 1], [], []>} : vector<8x8xf32>, vector<8x32xf32>, vector<8x32xf32> -> vector<8x32xf32>
    %336 = arith.addf %316, %335 : vector<8x32xf32>
    %c0_108 = arith.constant 0 : index
    %c0_109 = arith.constant 0 : index
    %337 = vector.load %arg12[%c0_108, %c0_109] : memref<16x32xf32, #tpu.memory_space<vmem>>, vector<8x32xf32>
    tpu.vector_store %arg12[%c0_108, %c0_109], %336 {strides = array<i32>} : memref<16x32xf32, #tpu.memory_space<vmem>>, vector<8x32xf32>,
    %338 = vector.extract_strided_slice %244 {offsets = [8, 0], sizes = [8, 32], strides = [1, 1]} : vector<16x32xf32> to vector<8x32xf32>
    %339 = vector.extract_strided_slice %250 {offsets = [16, 0], sizes = [16, 32], strides = [1, 1]} : vector<32x32xf32> to vector<16x32xf32>
    %340 = tpu.transpose %339, [1, 0] : vector<16x32xf32> -> vector<32x16xf32>
    %341 = vector.extract_strided_slice %251 {offsets = [16, 0], sizes = [16, 32], strides = [1, 1]} : vector<32x32xf32> to vector<16x32xf32>
    %cst_110 = arith.constant 0.000000e+00 : f32
    %342 = vector.broadcast %cst_110 : f32 to vector<8x32xf32>
    %343 = vector.extract_strided_slice %338 {offsets = [0, 0], sizes = [8, 8], strides = [1, 1]} : vector<8x32xf32> to vector<8x8xf32>
    %344 = vector.extract_strided_slice %340 {offsets = [0, 0], sizes = [8, 16], strides = [1, 1]} : vector<32x16xf32> to vector<8x16xf32>
    %cst_111 = arith.constant dense<0.000000e+00> : vector<8x16xf32>
    %345 = tpu.matmul %343, %344, %cst_111 {dimension_numbers = #tpu.dot_dimension_numbers<[1], [0], [0], [1], [0, 0, 1, 1], [], []>} : vector<8x8xf32>, vector<8x16xf32>, vector<8x16xf32> -> vector<8x16xf32>
    %cst_112 = arith.constant 0.353553385 : f32
    %346 = vector.broadcast %cst_112 : f32 to vector<8x16xf32>
    %347 = arith.mulf %345, %346 : vector<8x16xf32>
    %cst_113 = arith.constant dense<0xFF800000> : vector<8xf32>
    %348 = vector.multi_reduction <maximumf>, %347, %cst_113 [1] : vector<8x16xf32> to vector<8xf32>
    %349 = vector.shape_cast %348 : vector<8xf32> to vector<8x1xf32>
    %350 = vector.broadcast %349 : vector<8x1xf32> to vector<8x16xf32>
    %351 = arith.subf %347, %350 : vector<8x16xf32>
    %352 = math.exp %351 : vector<8x16xf32>
    %cst_114 = arith.constant dense<0.000000e+00> : vector<8xf32>
    %353 = vector.multi_reduction <add>, %352, %cst_114 [1] : vector<8x16xf32> to vector<8xf32>
    %354 = vector.shape_cast %353 : vector<8xf32> to vector<8x1xf32>
    %355 = tpu.reciprocal %354 {approx = true} : vector<8x1xf32> -> vector<8x1xf32>
    %356 = vector.broadcast %355 : vector<8x1xf32> to vector<8x16xf32>
    %357 = arith.mulf %352, %356 : vector<8x16xf32>
    %358 = vector.extract_strided_slice %341 {offsets = [0, 0], sizes = [16, 8], strides = [1, 1]} : vector<16x32xf32> to vector<16x8xf32>
    %cst_115 = arith.constant dense<0.000000e+00> : vector<8x8xf32>
    %359 = tpu.matmul %357, %358, %cst_115 {dimension_numbers = #tpu.dot_dimension_numbers<[1], [0], [0], [1], [0, 0, 1, 1], [], []>} : vector<8x16xf32>, vector<16x8xf32>, vector<8x8xf32> -> vector<8x8xf32>
    %360 = vector.extract_strided_slice %239 {offsets = [0, 0], sizes = [8, 32], strides = [1, 1]} : vector<32x32xf32> to vector<8x32xf32>
    %cst_116 = arith.constant dense<0.000000e+00> : vector<8x32xf32>
    %361 = tpu.matmul %359, %360, %cst_116 {dimension_numbers = #tpu.dot_dimension_numbers<[1], [0], [0], [1], [0, 0, 1, 1], [], []>} : vector<8x8xf32>, vector<8x32xf32>, vector<8x32xf32> -> vector<8x32xf32>
    %362 = arith.addf %342, %361 : vector<8x32xf32>
    %363 = vector.extract_strided_slice %338 {offsets = [0, 8], sizes = [8, 8], strides = [1, 1]} : vector<8x32xf32> to vector<8x8xf32>
    %364 = vector.extract_strided_slice %340 {offsets = [8, 0], sizes = [8, 16], strides = [1, 1]} : vector<32x16xf32> to vector<8x16xf32>
    %cst_117 = arith.constant dense<0.000000e+00> : vector<8x16xf32>
    %365 = tpu.matmul %363, %364, %cst_117 {dimension_numbers = #tpu.dot_dimension_numbers<[1], [0], [0], [1], [0, 0, 1, 1], [], []>} : vector<8x8xf32>, vector<8x16xf32>, vector<8x16xf32> -> vector<8x16xf32>
    %cst_118 = arith.constant 0.353553385 : f32
    %366 = vector.broadcast %cst_118 : f32 to vector<8x16xf32>
    %367 = arith.mulf %365, %366 : vector<8x16xf32>
    %cst_119 = arith.constant dense<0xFF800000> : vector<8xf32>
    %368 = vector.multi_reduction <maximumf>, %367, %cst_119 [1] : vector<8x16xf32> to vector<8xf32>
    %369 = vector.shape_cast %368 : vector<8xf32> to vector<8x1xf32>
    %370 = vector.broadcast %369 : vector<8x1xf32> to vector<8x16xf32>
    %371 = arith.subf %367, %370 : vector<8x16xf32>
    %372 = math.exp %371 : vector<8x16xf32>
    %cst_120 = arith.constant dense<0.000000e+00> : vector<8xf32>
    %373 = vector.multi_reduction <add>, %372, %cst_120 [1] : vector<8x16xf32> to vector<8xf32>
    %374 = vector.shape_cast %373 : vector<8xf32> to vector<8x1xf32>
    %375 = tpu.reciprocal %374 {approx = true} : vector<8x1xf32> -> vector<8x1xf32>
    %376 = vector.broadcast %375 : vector<8x1xf32> to vector<8x16xf32>
    %377 = arith.mulf %372, %376 : vector<8x16xf32>
    %378 = vector.extract_strided_slice %341 {offsets = [0, 8], sizes = [16, 8], strides = [1, 1]} : vector<16x32xf32> to vector<16x8xf32>
    %cst_121 = arith.constant dense<0.000000e+00> : vector<8x8xf32>
    %379 = tpu.matmul %377, %378, %cst_121 {dimension_numbers = #tpu.dot_dimension_numbers<[1], [0], [0], [1], [0, 0, 1, 1], [], []>} : vector<8x16xf32>, vector<16x8xf32>, vector<8x8xf32> -> vector<8x8xf32>
    %380 = vector.extract_strided_slice %239 {offsets = [8, 0], sizes = [8, 32], strides = [1, 1]} : vector<32x32xf32> to vector<8x32xf32>
    %cst_122 = arith.constant dense<0.000000e+00> : vector<8x32xf32>
    %381 = tpu.matmul %379, %380, %cst_122 {dimension_numbers = #tpu.dot_dimension_numbers<[1], [0], [0], [1], [0, 0, 1, 1], [], []>} : vector<8x8xf32>, vector<8x32xf32>, vector<8x32xf32> -> vector<8x32xf32>
    %382 = arith.addf %362, %381 : vector<8x32xf32>
    %383 = vector.extract_strided_slice %338 {offsets = [0, 16], sizes = [8, 8], strides = [1, 1]} : vector<8x32xf32> to vector<8x8xf32>
    %384 = vector.extract_strided_slice %340 {offsets = [16, 0], sizes = [8, 16], strides = [1, 1]} : vector<32x16xf32> to vector<8x16xf32>
    %cst_123 = arith.constant dense<0.000000e+00> : vector<8x16xf32>
    %385 = tpu.matmul %383, %384, %cst_123 {dimension_numbers = #tpu.dot_dimension_numbers<[1], [0], [0], [1], [0, 0, 1, 1], [], []>} : vector<8x8xf32>, vector<8x16xf32>, vector<8x16xf32> -> vector<8x16xf32>
    %cst_124 = arith.constant 0.353553385 : f32
    %386 = vector.broadcast %cst_124 : f32 to vector<8x16xf32>
    %387 = arith.mulf %385, %386 : vector<8x16xf32>
    %cst_125 = arith.constant dense<0xFF800000> : vector<8xf32>
    %388 = vector.multi_reduction <maximumf>, %387, %cst_125 [1] : vector<8x16xf32> to vector<8xf32>
    %389 = vector.shape_cast %388 : vector<8xf32> to vector<8x1xf32>
    %390 = vector.broadcast %389 : vector<8x1xf32> to vector<8x16xf32>
    %391 = arith.subf %387, %390 : vector<8x16xf32>
    %392 = math.exp %391 : vector<8x16xf32>
    %cst_126 = arith.constant dense<0.000000e+00> : vector<8xf32>
    %393 = vector.multi_reduction <add>, %392, %cst_126 [1] : vector<8x16xf32> to vector<8xf32>
    %394 = vector.shape_cast %393 : vector<8xf32> to vector<8x1xf32>
    %395 = tpu.reciprocal %394 {approx = true} : vector<8x1xf32> -> vector<8x1xf32>
    %396 = vector.broadcast %395 : vector<8x1xf32> to vector<8x16xf32>
    %397 = arith.mulf %392, %396 : vector<8x16xf32>
    %398 = vector.extract_strided_slice %341 {offsets = [0, 16], sizes = [16, 8], strides = [1, 1]} : vector<16x32xf32> to vector<16x8xf32>
    %cst_127 = arith.constant dense<0.000000e+00> : vector<8x8xf32>
    %399 = tpu.matmul %397, %398, %cst_127 {dimension_numbers = #tpu.dot_dimension_numbers<[1], [0], [0], [1], [0, 0, 1, 1], [], []>} : vector<8x16xf32>, vector<16x8xf32>, vector<8x8xf32> -> vector<8x8xf32>
    %400 = vector.extract_strided_slice %239 {offsets = [16, 0], sizes = [8, 32], strides = [1, 1]} : vector<32x32xf32> to vector<8x32xf32>
    %cst_128 = arith.constant dense<0.000000e+00> : vector<8x32xf32>
    %401 = tpu.matmul %399, %400, %cst_128 {dimension_numbers = #tpu.dot_dimension_numbers<[1], [0], [0], [1], [0, 0, 1, 1], [], []>} : vector<8x8xf32>, vector<8x32xf32>, vector<8x32xf32> -> vector<8x32xf32>
    %402 = arith.addf %382, %401 : vector<8x32xf32>
    %403 = vector.extract_strided_slice %338 {offsets = [0, 24], sizes = [8, 8], strides = [1, 1]} : vector<8x32xf32> to vector<8x8xf32>
    %404 = vector.extract_strided_slice %340 {offsets = [24, 0], sizes = [8, 16], strides = [1, 1]} : vector<32x16xf32> to vector<8x16xf32>
    %cst_129 = arith.constant dense<0.000000e+00> : vector<8x16xf32>
    %405 = tpu.matmul %403, %404, %cst_129 {dimension_numbers = #tpu.dot_dimension_numbers<[1], [0], [0], [1], [0, 0, 1, 1], [], []>} : vector<8x8xf32>, vector<8x16xf32>, vector<8x16xf32> -> vector<8x16xf32>
    %cst_130 = arith.constant 0.353553385 : f32
    %406 = vector.broadcast %cst_130 : f32 to vector<8x16xf32>
    %407 = arith.mulf %405, %406 : vector<8x16xf32>
    %cst_131 = arith.constant dense<0xFF800000> : vector<8xf32>
    %408 = vector.multi_reduction <maximumf>, %407, %cst_131 [1] : vector<8x16xf32> to vector<8xf32>
    %409 = vector.shape_cast %408 : vector<8xf32> to vector<8x1xf32>
    %410 = vector.broadcast %409 : vector<8x1xf32> to vector<8x16xf32>
    %411 = arith.subf %407, %410 : vector<8x16xf32>
    %412 = math.exp %411 : vector<8x16xf32>
    %cst_132 = arith.constant dense<0.000000e+00> : vector<8xf32>
    %413 = vector.multi_reduction <add>, %412, %cst_132 [1] : vector<8x16xf32> to vector<8xf32>
    %414 = vector.shape_cast %413 : vector<8xf32> to vector<8x1xf32>
    %415 = tpu.reciprocal %414 {approx = true} : vector<8x1xf32> -> vector<8x1xf32>
    %416 = vector.broadcast %415 : vector<8x1xf32> to vector<8x16xf32>
    %417 = arith.mulf %412, %416 : vector<8x16xf32>
    %418 = vector.extract_strided_slice %341 {offsets = [0, 24], sizes = [16, 8], strides = [1, 1]} : vector<16x32xf32> to vector<16x8xf32>
    %cst_133 = arith.constant dense<0.000000e+00> : vector<8x8xf32>
    %419 = tpu.matmul %417, %418, %cst_133 {dimension_numbers = #tpu.dot_dimension_numbers<[1], [0], [0], [1], [0, 0, 1, 1], [], []>} : vector<8x16xf32>, vector<16x8xf32>, vector<8x8xf32> -> vector<8x8xf32>
    %420 = vector.extract_strided_slice %239 {offsets = [24, 0], sizes = [8, 32], strides = [1, 1]} : vector<32x32xf32> to vector<8x32xf32>
    %cst_134 = arith.constant dense<0.000000e+00> : vector<8x32xf32>
    %421 = tpu.matmul %419, %420, %cst_134 {dimension_numbers = #tpu.dot_dimension_numbers<[1], [0], [0], [1], [0, 0, 1, 1], [], []>} : vector<8x8xf32>, vector<8x32xf32>, vector<8x32xf32> -> vector<8x32xf32>
    %422 = arith.addf %402, %421 : vector<8x32xf32>
    %c8_135 = arith.constant 8 : index
    %c0_136 = arith.constant 0 : index
    %423 = vector.load %arg12[%c8_135, %c0_136] : memref<16x32xf32, #tpu.memory_space<vmem>>, vector<8x32xf32>
    tpu.vector_store %arg12[%c8_135, %c0_136], %422 {strides = array<i32>} : memref<16x32xf32, #tpu.memory_space<vmem>>, vector<8x32xf32>,
    %c0_137 = arith.constant 0 : index
    %c0_138 = arith.constant 0 : index
    %424 = vector.load %arg12[%c0_137, %c0_138] : memref<16x32xf32, #tpu.memory_space<vmem>>, vector<16x32xf32>
    %425 = vector.broadcast %11 : vector<1x32xf32> to vector<16x32xf32>
    %426 = arith.addf %424, %425 : vector<16x32xf32>
    %427 = arith.addf %235, %426 : vector<16x32xf32>
    %cst_139 = arith.constant dense<0.000000e+00> : vector<16xf32>
    %428 = vector.multi_reduction <add>, %427, %cst_139 [1] : vector<16x32xf32> to vector<16xf32>
    %429 = vector.shape_cast %428 : vector<16xf32> to vector<16x1xf32>
    %cst_140 = arith.constant 3.200000e+01 : f32
    %430 = vector.broadcast %cst_140 : f32 to vector<16x1xf32>
    %431 = arith.divf %429, %430 : vector<16x1xf32>
    %432 = arith.mulf %427, %427 : vector<16x32xf32>
    %cst_141 = arith.constant dense<0.000000e+00> : vector<16xf32>
    %433 = vector.multi_reduction <add>, %432, %cst_141 [1] : vector<16x32xf32> to vector<16xf32>
    %434 = vector.shape_cast %433 : vector<16xf32> to vector<16x1xf32>
    %cst_142 = arith.constant 3.200000e+01 : f32
    %435 = vector.broadcast %cst_142 : f32 to vector<16x1xf32>
    %436 = arith.divf %434, %435 : vector<16x1xf32>
    %437 = arith.mulf %431, %431 : vector<16x1xf32>
    %438 = arith.subf %436, %437 : vector<16x1xf32>
    %439 = vector.broadcast %431 : vector<16x1xf32> to vector<16x32xf32>
    %440 = arith.subf %427, %439 : vector<16x32xf32>
    %cst_143 = arith.constant 9.99999974E-6 : f32
    %441 = vector.broadcast %cst_143 : f32 to vector<16x1xf32>
    %442 = arith.addf %438, %441 : vector<16x1xf32>
    %443 = math.rsqrt %442 : vector<16x1xf32>
    %444 = vector.broadcast %443 : vector<16x1xf32> to vector<16x32xf32>
    %445 = arith.mulf %440, %444 : vector<16x32xf32>
    %446 = vector.broadcast %16 : vector<1x32xf32> to vector<16x32xf32>
    %447 = arith.mulf %445, %446 : vector<16x32xf32>
    %448 = vector.broadcast %17 : vector<1x32xf32> to vector<16x32xf32>
    %449 = arith.addf %447, %448 : vector<16x32xf32>
    %c0_144 = arith.constant 0 : index
    %c0_145 = arith.constant 0 : index
    %c0_146 = arith.constant 0 : index
    %450 = vector.load %arg8[%c0_144, %c0_145, %c0_146] : memref<1x32x64xf32, #tpu.memory_space<vmem>>, vector<1x32x64xf32>
    %451 = vector.shape_cast %450 : vector<1x32x64xf32> to vector<32x64xf32>
    %cst_147 = arith.constant dense<0.000000e+00> : vector<16x64xf32>
    %452 = tpu.matmul %449, %451, %cst_147 {dimension_numbers = #tpu.dot_dimension_numbers<[1], [0], [0], [1], [0, 0, 1, 1], [], []>} : vector<16x32xf32>, vector<32x64xf32>, vector<16x64xf32> -> vector<16x64xf32>
    %453 = vector.broadcast %12 : vector<1x64xf32> to vector<16x64xf32>
    %454 = arith.addf %452, %453 : vector<16x64xf32>
    %cst_148 = arith.constant 0.000000e+00 : f32
    %455 = vector.broadcast %cst_148 : f32 to vector<16x64xf32>
    %456 = arith.maximumf %454, %455 : vector<16x64xf32>
    %c0_149 = arith.constant 0 : index
    %c0_150 = arith.constant 0 : index
    %c0_151 = arith.constant 0 : index
    %457 = vector.load %arg9[%c0_149, %c0_150, %c0_151] : memref<1x64x32xf32, #tpu.memory_space<vmem>>, vector<1x64x32xf32>
    %458 = vector.shape_cast %457 : vector<1x64x32xf32> to vector<64x32xf32>
    %cst_152 = arith.constant dense<0.000000e+00> : vector<16x32xf32>
    %459 = tpu.matmul %456, %458, %cst_152 {dimension_numbers = #tpu.dot_dimension_numbers<[1], [0], [0], [1], [0, 0, 1, 1], [], []>} : vector<16x64xf32>, vector<64x32xf32>, vector<16x32xf32> -> vector<16x32xf32>
    %460 = vector.broadcast %13 : vector<1x32xf32> to vector<16x32xf32>
    %461 = arith.addf %459, %460 : vector<16x32xf32>
    %462 = arith.addf %449, %461 : vector<16x32xf32>
    %cst_153 = arith.constant dense<0.000000e+00> : vector<16xf32>
    %463 = vector.multi_reduction <add>, %462, %cst_153 [1] : vector<16x32xf32> to vector<16xf32>
    %464 = vector.shape_cast %463 : vector<16xf32> to vector<16x1xf32>
    %cst_154 = arith.constant 3.200000e+01 : f32
    %465 = vector.broadcast %cst_154 : f32 to vector<16x1xf32>
    %466 = arith.divf %464, %465 : vector<16x1xf32>
    %467 = arith.mulf %462, %462 : vector<16x32xf32>
    %cst_155 = arith.constant dense<0.000000e+00> : vector<16xf32>
    %468 = vector.multi_reduction <add>, %467, %cst_155 [1] : vector<16x32xf32> to vector<16xf32>
    %469 = vector.shape_cast %468 : vector<16xf32> to vector<16x1xf32>
    %cst_156 = arith.constant 3.200000e+01 : f32
    %470 = vector.broadcast %cst_156 : f32 to vector<16x1xf32>
    %471 = arith.divf %469, %470 : vector<16x1xf32>
    %472 = arith.mulf %466, %466 : vector<16x1xf32>
    %473 = arith.subf %471, %472 : vector<16x1xf32>
    %474 = vector.broadcast %466 : vector<16x1xf32> to vector<16x32xf32>
    %475 = arith.subf %462, %474 : vector<16x32xf32>
    %cst_157 = arith.constant 9.99999974E-6 : f32
    %476 = vector.broadcast %cst_157 : f32 to vector<16x1xf32>
    %477 = arith.addf %473, %476 : vector<16x1xf32>
    %478 = math.rsqrt %477 : vector<16x1xf32>
    %479 = vector.broadcast %478 : vector<16x1xf32> to vector<16x32xf32>
    %480 = arith.mulf %475, %479 : vector<16x32xf32>
    %481 = vector.broadcast %18 : vector<1x32xf32> to vector<16x32xf32>
    %482 = arith.mulf %480, %481 : vector<16x32xf32>
    %483 = vector.broadcast %19 : vector<1x32xf32> to vector<16x32xf32>
    %484 = arith.addf %482, %483 : vector<16x32xf32>
    %c0_158 = arith.constant 0 : index
    %c0_159 = arith.constant 0 : index
    %485 = vector.load %arg11[%c0_158, %c0_159] : memref<16x32xf32, #tpu.memory_space<vmem>>, vector<16x32xf32>
    tpu.vector_store %arg11[%c0_158, %c0_159], %484 {strides = array<i32>} : memref<16x32xf32, #tpu.memory_space<vmem>>, vector<16x32xf32>,
    return
  }
  func.func @transform_0(%arg0: i32) -> (i32, i32) {
    %c0_i32 = arith.constant 0 : i32
    %c0_i32_0 = arith.constant 0 : i32
    %c0_i32_1 = arith.constant 0 : i32
    return %c0_i32, %c0_i32_0 : i32, i32
  }
  func.func @transform_1(%arg0: i32) -> (i32, i32) {
    %c0_i32 = arith.constant 0 : i32
    %c0_i32_0 = arith.constant 0 : i32
    %c0_i32_1 = arith.constant 0 : i32
    return %c0_i32, %c0_i32_0 : i32, i32
  }
  func.func @transform_2(%arg0: i32) -> (i32, i32) {
    %c0_i32 = arith.constant 0 : i32
    %c0_i32_0 = arith.constant 0 : i32
    %c0_i32_1 = arith.constant 0 : i32
    return %c0_i32, %c0_i32_0 : i32, i32
  }
  func.func @transform_3(%arg0: i32) -> (i32, i32, i32) {
    %c0_i32 = arith.constant 0 : i32
    %c0_i32_0 = arith.constant 0 : i32
    %c0_i32_1 = arith.constant 0 : i32
    return %arg0, %c0_i32, %c0_i32_0 : i32, i32, i32
  }
  func.func @transform_4(%arg0: i32) -> (i32, i32, i32) {
    %c0_i32 = arith.constant 0 : i32
    %c0_i32_0 = arith.constant 0 : i32
    %c0_i32_1 = arith.constant 0 : i32
    return %arg0, %c0_i32, %c0_i32_0 : i32, i32, i32
  }
  func.func @transform_5(%arg0: i32) -> (i32, i32, i32) {
    %c0_i32 = arith.constant 0 : i32
    %c0_i32_0 = arith.constant 0 : i32
    %c0_i32_1 = arith.constant 0 : i32
    return %arg0, %c0_i32, %c0_i32_0 : i32, i32, i32
  }
  func.func @transform_6(%arg0: i32) -> (i32, i32, i32) {
    %c0_i32 = arith.constant 0 : i32
    %c0_i32_0 = arith.constant 0 : i32
    %c0_i32_1 = arith.constant 0 : i32
    return %arg0, %c0_i32, %c0_i32_0 : i32, i32, i32
  }
  func.func @transform_7(%arg0: i32) -> (i32, i32, i32) {
    %c0_i32 = arith.constant 0 : i32
    %c0_i32_0 = arith.constant 0 : i32
    %c0_i32_1 = arith.constant 0 : i32
    return %arg0, %c0_i32, %c0_i32_0 : i32, i32, i32
  }
  func.func @transform_8(%arg0: i32) -> (i32, i32, i32) {
    %c0_i32 = arith.constant 0 : i32
    %c0_i32_0 = arith.constant 0 : i32
    %c0_i32_1 = arith.constant 0 : i32
    return %arg0, %c0_i32, %c0_i32_0 : i32, i32, i32
  }
  func.func @transform_9(%arg0: i32) -> (i32, i32, i32) {
    %c0_i32 = arith.constant 0 : i32
    %c0_i32_0 = arith.constant 0 : i32
    %c0_i32_1 = arith.constant 0 : i32
    return %arg0, %c0_i32, %c0_i32_0 : i32, i32, i32
  }
  func.func @transform_10(%arg0: i32) -> (i32, i32) {
    %c0_i32 = arith.constant 0 : i32
    %c0_i32_0 = arith.constant 0 : i32
    %c0_i32_1 = arith.constant 0 : i32
    return %c0_i32, %c0_i32_0 : i32, i32
  }
}

</mosaic_0001>

<llo_original>
// kernel: tpu_custom_call.1
$region0: #{tpu_custom_call.1}
  #allocation0 [shape = 'u32[]', space=smem, size = 0x4, offset = 0x4, fixed_abs, tag = 'smem constant byte address 0x4 - core index']
  #allocation1 [shape = 'u32[72,128]{1,0:T(1,128)}', space=vmem, size = 0x9000, scoped, tag = 'internal scratch']
  #allocation2 [shape = 'f32[16,32]{1,0:T(8,128)}', space=vmem, size = 0x2000, scoped, tag = 'scratch operand']
  %s0 = inlined_call_operand.hbm [shape: f32[16,32], index: 0, kind: input, shape index: {}]
  %s1 = inlined_call_operand.hbm [shape: f32[32,32], index: 1, kind: input, shape index: {}]
  %s2 = inlined_call_operand.hbm [shape: f32[8,8], index: 2, kind: input, shape index: {}]
  %s3 = inlined_call_operand.vmem [shape: f32[2,32,96], index: 3, kind: input, shape index: {}]
  %s4 = inlined_call_operand.vmem [shape: f32[2,32,32], index: 4, kind: input, shape index: {}]
  %s5 = inlined_call_operand.vmem [shape: f32[2,32,96], index: 5, kind: input, shape index: {}]
  %s6 = inlined_call_operand.hbm [shape: f32[2,32,32], index: 6, kind: input, shape index: {}]
  %s7 = inlined_call_operand.hbm [shape: f32[2,32,64], index: 7, kind: input, shape index: {}]
  %s8 = inlined_call_operand.vmem [shape: f32[2,64,32], index: 8, kind: input, shape index: {}]
  %s9 = inlined_call_operand.hbm [shape: f32[2,16,128], index: 9, kind: input, shape index: {}]
  %s10 = inlined_call_operand.hbm [shape: f32[16,32], index: 10, kind: output, shape index: {}]
  %s11 = sld [smem:[#allocation0]]
  $region101: #{tpu_custom_call.1} parent=0
    _
  %s13 = ssub.s32 1, %s11
  %s14 = scalar_select 0, %s13, %s11
  $region1: #{tpu_custom_call.1} parent=0
    #allocation3 [shape = 'u8[8192]{0}', space=vmem, size = 0x2000, scoped, tag = 'input window, operand 0, single buffered']
    #allocation4 [shape = 's32[2]{0}', space=sflag, size = 0x8, scoped, tag = 'scoped memory for tpu_custom_call.1']
    #allocation5 [shape = 's32[2]{0}', space=sflag, size = 0x8, scoped, tag = 'scoped memory for tpu_custom_call.1']
    #allocation6 [shape = 'u8[16384]{0}', space=vmem, size = 0x4000, scoped, tag = 'input window, operand 1, single buffered']
    #allocation7 [shape = 's32[1]{0}', space=sflag, size = 0x4, scoped, tag = 'scoped memory for tpu_custom_call.1']
    #allocation8 [shape = 'u8[4096]{0}', space=vmem, size = 0x1000, scoped, tag = 'input window, operand 2, single buffered']
    #allocation9 [shape = 'u8[32768]{0}', space=vmem, size = 0x8000, scoped, tag = 'input window, operand 6']
    #allocation10 [shape = 's32[2]{0}', space=sflag, size = 0x8, scoped, tag = 'scoped memory for tpu_custom_call.1']
    #allocation11 [shape = 'u8[32768]{0}', space=vmem, size = 0x8000, scoped, tag = 'input window, operand 7']
    #allocation12 [shape = 'u8[16384]{0}', space=vmem, size = 0x4000, scoped, tag = 'input window, operand 9']
    #allocation13 [shape = 's32[2]{0}', space=sflag, size = 0x8, scoped, tag = 'scoped memory for tpu_custom_call.1']
    #allocation14 [shape = 'u8[8192]{0}', space=vmem, size = 0x2000, scoped, tag = 'output window, operand 0, single buffered']
    %15 = vsyncpa [#allocation4], 0
    %16 = vsyncpa [#allocation7], 0
    %17 = vsyncpa [#allocation10], 0
    %s18 = scalar_lea.sflag [#allocation10], 1
    %19 = vsyncpa %s18, 0
    %20 = vsyncpa [#allocation13], 0
    %s21 = scalar_lea.sflag [#allocation13], 1
    %22 = vsyncpa %s21, 0
    %23 = vsyncpa [#allocation5], 0
    loop: start=0, step=1, limit=4
    $region2: #{tpu_custom_call.1} parent=1 // loop_pre_header
      _
    $region3: #{tpu_custom_call.1} parent=1 // loop_header
      %s25 = sphi 0, %s29
      %p26 = scmp.ge.s32.totalorder %s25, 4
      %s33 = sphi 0, %s33
      %s35 = sphi 0, %s33
      %s36 = sphi 0, %s35
      %s50 = sphi 0, %s36
      %s54 = sphi 0, %s54
      %s56 = sphi 0, %s54
      %s57 = sphi 0, %s56
      %s71 = sphi 0, %s57
      %s75 = sphi 0, %s75
      %s77 = sphi 0, %s75
      %s78 = sphi 0, %s77
      %s92 = sphi 0, %s78
      %s98 = sphi 0, %s100
      %s101 = sphi 0, %s98
      %s102 = sphi 0, %s101
      %s118 = sphi 0, %s102
      %s124 = sphi 0, %s126
      %s127 = sphi 0, %s124
      %s128 = sphi 0, %s127
      %s144 = sphi 0, %s128
      %s150 = sphi 0, %s152
      %s153 = sphi 0, %s150
      %s154 = sphi 0, %s153
      %s170 = sphi 0, %s154
      %s176 = sphi 0, %s178
      %s179 = sphi 0, %s176
      %s180 = sphi 0, %s179
      %s196 = sphi 0, %s180
      %s202 = sphi 0, %s204
      %s205 = sphi 0, %s202
      %s206 = sphi 0, %s205
      %s222 = sphi 0, %s206
      %s228 = sphi 0, %s230
      %s231 = sphi 0, %s228
      %s232 = sphi 0, %s231
      %s248 = sphi 0, %s232
      %s254 = sphi 0, %s256
      %s257 = sphi 0, %s254
      %s258 = sphi 0, %s257
      %s274 = sphi 0, %s258
      %s278 = sphi 0, %s278
      %s280 = sphi 0, %s278
      %s281 = sphi 0, %s280
      %s295 = sphi 0, %s281
    $region4: #{tpu_custom_call.1} parent=1 // loop_header_branch
      %28 = sbr.rel (%p26) target = $region8
    $region5: #{tpu_custom_call.1} parent=1 // loop_body
      %s30 = ssub.s32 %s25, 1
      %s31 = ssub.s32 %s25, 2
      %s32 = sadd.s32 %s25, 1
      %s34 = sadd.s32 %s33, 1
      %p37 = scmp.eq.s32.totalorder %s25, 1
      %p38 = scmp.ne.s32.totalorder %s33, %s35
      %p39 = scmp.eq.s32.totalorder %s25, 0
      %p40 = por %p38, %p39
      %p41 = scmp.ne.s32.totalorder %s33, %s35
      %p42 = scmp.eq.s32.totalorder %s30, 1
      %p43 = por %p41, %p42
      %p44 = scmp.ne.s32.totalorder %s35, %s36
      %p45 = scmp.eq.s32.totalorder %s30, 0
      %p46 = por %p44, %p45
      %p47 = scmp.ne.s32.totalorder %s35, %s36
      %p48 = scmp.eq.s32.totalorder %s31, 1
      %p49 = por %p47, %p48
      %p51 = scmp.ne.s32.totalorder %s36, %s50
      %p52 = scmp.eq.s32.totalorder %s31, 0
      %p53 = por %p51, %p52
      %s55 = sadd.s32 %s54, 1
      %p58 = scmp.eq.s32.totalorder %s25, 1
      %p59 = scmp.ne.s32.totalorder %s54, %s56
      %p60 = scmp.eq.s32.totalorder %s25, 0
      %p61 = por %p59, %p60
      %p62 = scmp.ne.s32.totalorder %s54, %s56
      %p63 = scmp.eq.s32.totalorder %s30, 1
      %p64 = por %p62, %p63
      %p65 = scmp.ne.s32.totalorder %s56, %s57
      %p66 = scmp.eq.s32.totalorder %s30, 0
      %p67 = por %p65, %p66
      %p68 = scmp.ne.s32.totalorder %s56, %s57
      %p69 = scmp.eq.s32.totalorder %s31, 1
      %p70 = por %p68, %p69
      %p72 = scmp.ne.s32.totalorder %s57, %s71
      %p73 = scmp.eq.s32.totalorder %s31, 0
      %p74 = por %p72, %p73
      %s76 = sadd.s32 %s75, 1
      %p79 = scmp.eq.s32.totalorder %s25, 1
      %p80 = scmp.ne.s32.totalorder %s75, %s77
      %p81 = scmp.eq.s32.totalorder %s25, 0
      %p82 = por %p80, %p81
      %p83 = scmp.ne.s32.totalorder %s75, %s77
      %p84 = scmp.eq.s32.totalorder %s30, 1
      %p85 = por %p83, %p84
      %p86 = scmp.ne.s32.totalorder %s77, %s78
      %p87 = scmp.eq.s32.totalorder %s30, 0
      %p88 = por %p86, %p87
      %p89 = scmp.ne.s32.totalorder %s77, %s78
      %p90 = scmp.eq.s32.totalorder %s31, 1
      %p91 = por %p89, %p90
      %p93 = scmp.ne.s32.totalorder %s78, %s92
      %p94 = scmp.eq.s32.totalorder %s31, 0
      %p95 = por %p93, %p94
      %s96 = ssub.s32 %s25, %s32
      %p97 = scmp.eq.s32.totalorder %s96, 0
      %s99 = sadd.s32 %s98, 1
      %s100 = scalar_select %p97, %s98, %s99
      %p103 = pneg %p97
      %p104 = scmp.eq.s32.totalorder %s25, 1
      %p105 = por %p103, %p104
      %p106 = scmp.ne.s32.totalorder %s98, %s101
      %p107 = scmp.eq.s32.totalorder %s25, 0
      %p108 = por %p106, %p107
      %p109 = scmp.ne.s32.totalorder %s98, %s101
      %p110 = scmp.eq.s32.totalorder %s30, 1
      %p111 = por %p109, %p110
      %p112 = scmp.ne.s32.totalorder %s101, %s102
      %p113 = scmp.eq.s32.totalorder %s30, 0
      %p114 = por %p112, %p113
      %p115 = scmp.ne.s32.totalorder %s101, %s102
      %p116 = scmp.eq.s32.totalorder %s31, 1
      %p117 = por %p115, %p116
      %p119 = scmp.ne.s32.totalorder %s102, %s118
      %p120 = scmp.eq.s32.totalorder %s31, 0
      %p121 = por %p119, %p120
      %s122 = ssub.s32 %s25, %s32
      %p123 = scmp.eq.s32.totalorder %s122, 0
      %s125 = sadd.s32 %s124, 1
      %s126 = scalar_select %p123, %s124, %s125
      %p129 = pneg %p123
      %p130 = scmp.eq.s32.totalorder %s25, 1
      %p131 = por %p129, %p130
      %p132 = scmp.ne.s32.totalorder %s124, %s127
      %p133 = scmp.eq.s32.totalorder %s25, 0
      %p134 = por %p132, %p133
      %p135 = scmp.ne.s32.totalorder %s124, %s127
      %p136 = scmp.eq.s32.totalorder %s30, 1
      %p137 = por %p135, %p136
      %p138 = scmp.ne.s32.totalorder %s127, %s128
      %p139 = scmp.eq.s32.totalorder %s30, 0
      %p140 = por %p138, %p139
      %p141 = scmp.ne.s32.totalorder %s127, %s128
      %p142 = scmp.eq.s32.totalorder %s31, 1
      %p143 = por %p141, %p142
      %p145 = scmp.ne.s32.totalorder %s128, %s144
      %p146 = scmp.eq.s32.totalorder %s31, 0
      %p147 = por %p145, %p146
      %s148 = ssub.s32 %s25, %s32
      %p149 = scmp.eq.s32.totalorder %s148, 0
      %s151 = sadd.s32 %s150, 1
      %s152 = scalar_select %p149, %s150, %s151
      %p155 = pneg %p149
      %p156 = scmp.eq.s32.totalorder %s25, 1
      %p157 = por %p155, %p156
      %p158 = scmp.ne.s32.totalorder %s150, %s153
      %p159 = scmp.eq.s32.totalorder %s25, 0
      %p160 = por %p158, %p159
      %p161 = scmp.ne.s32.totalorder %s150, %s153
      %p162 = scmp.eq.s32.totalorder %s30, 1
      %p163 = por %p161, %p162
      %p164 = scmp.ne.s32.totalorder %s153, %s154
      %p165 = scmp.eq.s32.totalorder %s30, 0
      %p166 = por %p164, %p165
      %p167 = scmp.ne.s32.totalorder %s153, %s154
      %p168 = scmp.eq.s32.totalorder %s31, 1
      %p169 = por %p167, %p168
      %p171 = scmp.ne.s32.totalorder %s154, %s170
      %p172 = scmp.eq.s32.totalorder %s31, 0
      %p173 = por %p171, %p172
      %s174 = ssub.s32 %s25, %s32
      %p175 = scmp.eq.s32.totalorder %s174, 0
      %s177 = sadd.s32 %s176, 1
      %s178 = scalar_select %p175, %s176, %s177
      %p181 = pneg %p175
      %p182 = scmp.eq.s32.totalorder %s25, 1
      %p183 = por %p181, %p182
      %p184 = scmp.ne.s32.totalorder %s176, %s179
      %p185 = scmp.eq.s32.totalorder %s25, 0
      %p186 = por %p184, %p185
      %p187 = scmp.ne.s32.totalorder %s176, %s179
      %p188 = scmp.eq.s32.totalorder %s30, 1
      %p189 = por %p187, %p188
      %p190 = scmp.ne.s32.totalorder %s179, %s180
      %p191 = scmp.eq.s32.totalorder %s30, 0
      %p192 = por %p190, %p191
      %p193 = scmp.ne.s32.totalorder %s179, %s180
      %p194 = scmp.eq.s32.totalorder %s31, 1
      %p195 = por %p193, %p194
      %p197 = scmp.ne.s32.totalorder %s180, %s196
      %p198 = scmp.eq.s32.totalorder %s31, 0
      %p199 = por %p197, %p198
      %s200 = ssub.s32 %s25, %s32
      %p201 = scmp.eq.s32.totalorder %s200, 0
      %s203 = sadd.s32 %s202, 1
      %s204 = scalar_select %p201, %s202, %s203
      %p207 = pneg %p201
      %p208 = scmp.eq.s32.totalorder %s25, 1
      %p209 = por %p207, %p208
      %p210 = scmp.ne.s32.totalorder %s202, %s205
      %p211 = scmp.eq.s32.totalorder %s25, 0
      %p212 = por %p210, %p211
      %p213 = scmp.ne.s32.totalorder %s202, %s205
      %p214 = scmp.eq.s32.totalorder %s30, 1
      %p215 = por %p213, %p214
      %p216 = scmp.ne.s32.totalorder %s205, %s206
      %p217 = scmp.eq.s32.totalorder %s30, 0
      %p218 = por %p216, %p217
      %p219 = scmp.ne.s32.totalorder %s205, %s206
      %p220 = scmp.eq.s32.totalorder %s31, 1
      %p221 = por %p219, %p220
      %p223 = scmp.ne.s32.totalorder %s206, %s222
      %p224 = scmp.eq.s32.totalorder %s31, 0
      %p225 = por %p223, %p224
      %s226 = ssub.s32 %s25, %s32
      %p227 = scmp.eq.s32.totalorder %s226, 0
      %s229 = sadd.s32 %s228, 1
      %s230 = scalar_select %p227, %s228, %s229
      %p233 = pneg %p227
      %p234 = scmp.eq.s32.totalorder %s25, 1
      %p235 = por %p233, %p234
      %p236 = scmp.ne.s32.totalorder %s228, %s231
      %p237 = scmp.eq.s32.totalorder %s25, 0
      %p238 = por %p236, %p237
      %p239 = scmp.ne.s32.totalorder %s228, %s231
      %p240 = scmp.eq.s32.totalorder %s30, 1
      %p241 = por %p239, %p240
      %p242 = scmp.ne.s32.totalorder %s231, %s232
      %p243 = scmp.eq.s32.totalorder %s30, 0
      %p244 = por %p242, %p243
      %p245 = scmp.ne.s32.totalorder %s231, %s232
      %p246 = scmp.eq.s32.totalorder %s31, 1
      %p247 = por %p245, %p246
      %p249 = scmp.ne.s32.totalorder %s232, %s248
      %p250 = scmp.eq.s32.totalorder %s31, 0
      %p251 = por %p249, %p250
      %s252 = ssub.s32 %s25, %s32
      %p253 = scmp.eq.s32.totalorder %s252, 0
      %s255 = sadd.s32 %s254, 1
      %s256 = scalar_select %p253, %s254, %s255
      %p259 = pneg %p253
      %p260 = scmp.eq.s32.totalorder %s25, 1
      %p261 = por %p259, %p260
      %p262 = scmp.ne.s32.totalorder %s254, %s257
      %p263 = scmp.eq.s32.totalorder %s25, 0
      %p264 = por %p262, %p263
      %p265 = scmp.ne.s32.totalorder %s254, %s257
      %p266 = scmp.eq.s32.totalorder %s30, 1
      %p267 = por %p265, %p266
      %p268 = scmp.ne.s32.totalorder %s257, %s258
      %p269 = scmp.eq.s32.totalorder %s30, 0
      %p270 = por %p268, %p269
      %p271 = scmp.ne.s32.totalorder %s257, %s258
      %p272 = scmp.eq.s32.totalorder %s31, 1
      %p273 = por %p271, %p272
      %p275 = scmp.ne.s32.totalorder %s258, %s274
      %p276 = scmp.eq.s32.totalorder %s31, 0
      %p277 = por %p275, %p276
      %s279 = sadd.s32 %s278, 1
      %p282 = scmp.eq.s32.totalorder %s25, 1
      %p283 = scmp.ne.s32.totalorder %s278, %s280
      %p284 = scmp.eq.s32.totalorder %s25, 0
      %p285 = por %p283, %p284
      %p286 = scmp.ne.s32.totalorder %s278, %s280
      %p287 = scmp.eq.s32.totalorder %s30, 1
      %p288 = por %p286, %p287
      %p289 = scmp.ne.s32.totalorder %s280, %s281
      %p290 = scmp.eq.s32.totalorder %s30, 0
      %p291 = por %p289, %p290
      %p292 = scmp.ne.s32.totalorder %s280, %s281
      %p293 = scmp.eq.s32.totalorder %s31, 1
      %p294 = por %p292, %p293
      %p296 = scmp.ne.s32.totalorder %s281, %s295
      %p297 = scmp.eq.s32.totalorder %s31, 0
      %p298 = por %p296, %p297
      %p299 = scmp.le.s32.totalorder 1, %s25
      %p300 = scmp.lt.s32.totalorder %s25, 3
      %p301 = pnand %p299, %p300
      %p302 = pneg %p301
      // Predicated region
      $region9: #{tpu_custom_call.1} parent=5 // pred_check
        _
      $region10: #{tpu_custom_call.1} parent=5 // pred_check_branch
        %304 = sbr.rel (%p301) target = $region12
      $region11: #{tpu_custom_call.1} parent=5 // pred_region
        %s305 = ssub.s32 %s25, 1
        // Predicated region
        $region13: #{tpu_custom_call.1} parent=11 // pred_check
          %p306 = pneg %p46
        $region14: #{tpu_custom_call.1} parent=11 // pred_check_branch
          %308 = sbr.rel (%p306) target = $region16
        $region15: #{tpu_custom_call.1} parent=11 // pred_region
          %310 = vsyncadd [#allocation4], 0
          %s311 = sshll.u32 %s0, 4
          %s312 = int_to_ptr.hbm [resolvable:$true] %s311
          %s313 = sshll.u32 [#allocation3], 4
          %s314 = int_to_ptr.vmem [resolvable:$true] %s313
          %319 = dma.hbm_to_vmem [thread:$0]  %s312, 256, %s314, [#allocation4], 128, 128, 8
        $region16: #{tpu_custom_call.1} parent=11 // pred_fallthru
          _
        // Predicated region
        $region17: #{tpu_custom_call.1} parent=11 // pred_check
          %p320 = pneg %p67
        $region18: #{tpu_custom_call.1} parent=11 // pred_check_branch
          %322 = sbr.rel (%p320) target = $region20
        $region19: #{tpu_custom_call.1} parent=11 // pred_region
          %324 = vsyncadd [#allocation7], 0
          %s325 = sshll.u32 %s1, 4
          %s326 = int_to_ptr.hbm [resolvable:$true] %s325
          %s327 = sshll.u32 [#allocation6], 4
          %s328 = int_to_ptr.vmem [resolvable:$true] %s327
          %333 = dma.hbm_to_vmem [thread:$0]  %s326, 512, %s328, [#allocation7], 128, 128, 8
        $region20: #{tpu_custom_call.1} parent=11 // pred_fallthru
          _
        // Predicated region
        $region21: #{tpu_custom_call.1} parent=11 // pred_check
          %p334 = pneg %p88
        $region22: #{tpu_custom_call.1} parent=11 // pred_check_branch
          %336 = sbr.rel (%p334) target = $region24
        $region23: #{tpu_custom_call.1} parent=11 // pred_region
          %338 = vsyncadd [#allocation7], 0
          %s340 = sshll.u32 %s2, 4
          %s341 = int_to_ptr.hbm [resolvable:$true] %s340
          %s342 = sshll.u32 [#allocation8], 4
          %s343 = int_to_ptr.vmem [resolvable:$true] %s342
          %345 = dma.hbm_to_vmem [thread:$0]  %s341, 128, %s343, [#allocation7]
        $region24: #{tpu_custom_call.1} parent=11 // pred_fallthru
          _
      $region12: #{tpu_custom_call.1} parent=5 // pred_fallthru
        _
      %p346 = scmp.lt.s32.totalorder %s25, 2
      // Predicated region
      $region25: #{tpu_custom_call.1} parent=5 // pred_check
        %p347 = pneg %p346
      $region26: #{tpu_custom_call.1} parent=5 // pred_check_branch
        %349 = sbr.rel (%p347) target = $region28
      $region27: #{tpu_custom_call.1} parent=5 // pred_region
        // Predicated region
        $region29: #{tpu_custom_call.1} parent=27 // pred_check
          %p350 = pneg %p108
        $region30: #{tpu_custom_call.1} parent=27 // pred_check_branch
          %352 = sbr.rel (%p350) target = $region32
        $region31: #{tpu_custom_call.1} parent=27 // pred_region
          %p353 = scmp.lt.s32.totalorder %s25, 1
          %s354 = scalar_select %p353, %s25, 1
          %s355 = smul.addr %s354, 4
          %s356 = smul.addr %s355, 8
          %s357 = scalar_lea.vmem %s3, %s356
        $region32: #{tpu_custom_call.1} parent=27 // pred_fallthru
          _
        // Predicated region
        $region33: #{tpu_custom_call.1} parent=27 // pred_check
          %p358 = pneg %p134
        $region34: #{tpu_custom_call.1} parent=27 // pred_check_branch
          %360 = sbr.rel (%p358) target = $region36
        $region35: #{tpu_custom_call.1} parent=27 // pred_region
          %p361 = scmp.lt.s32.totalorder %s25, 1
          %s362 = scalar_select %p361, %s25, 1
          %s363 = smul.addr %s362, 4
          %s364 = smul.addr %s363, 8
          %s365 = scalar_lea.vmem %s4, %s364
        $region36: #{tpu_custom_call.1} parent=27 // pred_fallthru
          _
        // Predicated region
        $region37: #{tpu_custom_call.1} parent=27 // pred_check
          %p366 = pneg %p160
        $region38: #{tpu_custom_call.1} parent=27 // pred_check_branch
          %368 = sbr.rel (%p366) target = $region40
        $region39: #{tpu_custom_call.1} parent=27 // pred_region
          %p369 = scmp.lt.s32.totalorder %s25, 1
          %s370 = scalar_select %p369, %s25, 1
          %s371 = smul.addr %s370, 4
          %s372 = smul.addr %s371, 8
          %s373 = scalar_lea.vmem %s5, %s372
        $region40: #{tpu_custom_call.1} parent=27 // pred_fallthru
          _
        // Predicated region
        $region41: #{tpu_custom_call.1} parent=27 // pred_check
          %p374 = pneg %p186
        $region42: #{tpu_custom_call.1} parent=27 // pred_check_branch
          %376 = sbr.rel (%p374) target = $region44
        $region43: #{tpu_custom_call.1} parent=27 // pred_region
          %s377 = sand.u32 %s25, 1
          %s378 = scalar_lea.sflag [#allocation10], %s377
          %s379 = sand.u32 %s176, 1
          %s380 = smul.addr %s379, 32
          %s381 = scalar_lea.vmem [#allocation9], %s380
          %383 = vsyncadd %s378, 0
          %s384 = smul.addr %s25, 4
          %s385 = smul.addr %s384, 8
          %s386 = scalar_lea.hbm %s6, %s385
          %s387 = sshll.u32 %s386, 4
          %s388 = int_to_ptr.hbm [resolvable:$true] %s387
          %s389 = sshll.u32 %s381, 4
          %s390 = int_to_ptr.vmem [resolvable:$true] %s389
          %395 = dma.hbm_to_vmem [thread:$0]  %s388, 512, %s390, %s378, 128, 128, 8
        $region44: #{tpu_custom_call.1} parent=27 // pred_fallthru
          _
        // Predicated region
        $region45: #{tpu_custom_call.1} parent=27 // pred_check
          %p396 = pneg %p212
        $region46: #{tpu_custom_call.1} parent=27 // pred_check_branch
          %398 = sbr.rel (%p396) target = $region48
        $region47: #{tpu_custom_call.1} parent=27 // pred_region
          %s399 = sand.u32 %s25, 1
          %s400 = scalar_lea.sflag [#allocation10], %s399
          %s401 = sand.u32 %s202, 1
          %s402 = smul.addr %s401, 32
          %s403 = scalar_lea.vmem [#allocation11], %s402
          %405 = vsyncadd %s400, 0
          %s406 = smul.addr %s25, 4
          %s407 = smul.addr %s406, 8
          %s408 = scalar_lea.hbm %s7, %s407
          %s409 = sshll.u32 %s408, 4
          %s410 = int_to_ptr.hbm [resolvable:$true] %s409
          %s411 = sshll.u32 %s403, 4
          %s412 = int_to_ptr.vmem [resolvable:$true] %s411
          %417 = dma.hbm_to_vmem [thread:$0]  %s410, 512, %s412, %s400, 128, 128, 8
        $region48: #{tpu_custom_call.1} parent=27 // pred_fallthru
          _
        // Predicated region
        $region49: #{tpu_custom_call.1} parent=27 // pred_check
          %p418 = pneg %p238
        $region50: #{tpu_custom_call.1} parent=27 // pred_check_branch
          %420 = sbr.rel (%p418) target = $region52
        $region51: #{tpu_custom_call.1} parent=27 // pred_region
          %p421 = scmp.lt.s32.totalorder %s25, 1
          %s422 = scalar_select %p421, %s25, 1
          %s423 = smul.addr %s422, 8
          %s424 = smul.addr %s423, 8
          %s425 = scalar_lea.vmem %s8, %s424
        $region52: #{tpu_custom_call.1} parent=27 // pred_fallthru
          _
        // Predicated region
        $region53: #{tpu_custom_call.1} parent=27 // pred_check
          %p426 = pneg %p264
        $region54: #{tpu_custom_call.1} parent=27 // pred_check_branch
          %428 = sbr.rel (%p426) target = $region56
        $region55: #{tpu_custom_call.1} parent=27 // pred_region
          %s429 = sand.u32 %s254, 1
          %s430 = scalar_lea.sflag [#allocation13], %s429
          %s431 = sand.u32 %s254, 1
          %s432 = smul.addr %s431, 16
          %s433 = scalar_lea.vmem [#allocation12], %s432
          %435 = vsyncadd %s430, 0
          %s436 = smul.addr %s25, 2
          %s437 = smul.addr %s436, 8
          %s438 = scalar_lea.hbm %s9, %s437
          %s439 = sshll.u32 %s438, 4
          %s440 = int_to_ptr.hbm [resolvable:$true] %s439
          %s441 = sshll.u32 %s433, 4
          %s442 = int_to_ptr.vmem [resolvable:$true] %s441
          %447 = dma.hbm_to_vmem [thread:$0]  %s440, 256, %s442, %s430, 128, 128, 8
        $region56: #{tpu_custom_call.1} parent=27 // pred_fallthru
          _
      $region28: #{tpu_custom_call.1} parent=5 // pred_fallthru
        _
      %p448 = scmp.le.s32.totalorder 1, %s25
      %p449 = scmp.lt.s32.totalorder %s25, 3
      %p450 = pnand %p448, %p449
      %p451 = pneg %p450
      // Predicated region
      $region57: #{tpu_custom_call.1} parent=5 // pred_check
        _
      $region58: #{tpu_custom_call.1} parent=5 // pred_check_branch
        %453 = sbr.rel (%p450) target = $region60
      $region59: #{tpu_custom_call.1} parent=5 // pred_region
        %s454 = ssub.s32 %s25, 1
        // Predicated region
        $region61: #{tpu_custom_call.1} parent=59 // pred_check
          %p455 = pneg %p46
        $region62: #{tpu_custom_call.1} parent=59 // pred_check_branch
          %457 = sbr.rel (%p455) target = $region64
        $region63: #{tpu_custom_call.1} parent=59 // pred_region
          %459 = dma.done [#allocation4], 256
        $region64: #{tpu_custom_call.1} parent=59 // pred_fallthru
          _
        // Predicated region
        $region65: #{tpu_custom_call.1} parent=59 // pred_check
          %p460 = pneg %p67
        $region66: #{tpu_custom_call.1} parent=59 // pred_check_branch
          %462 = sbr.rel (%p460) target = $region68
        $region67: #{tpu_custom_call.1} parent=59 // pred_region
          %464 = dma.done [#allocation7], 512
        $region68: #{tpu_custom_call.1} parent=59 // pred_fallthru
          _
        // Predicated region
        $region69: #{tpu_custom_call.1} parent=59 // pred_check
          %p465 = pneg %p88
        $region70: #{tpu_custom_call.1} parent=59 // pred_check_branch
          %467 = sbr.rel (%p465) target = $region72
        $region71: #{tpu_custom_call.1} parent=59 // pred_region
          %469 = dma.done [#allocation7], 128
        $region72: #{tpu_custom_call.1} parent=59 // pred_fallthru
          _
        %s470 = sand.u32 %s30, 1
        %s471 = scalar_lea.sflag [#allocation10], %s470
        %s472 = sand.u32 %s179, 1
        %s473 = smul.addr %s472, 32
        %s474 = scalar_lea.vmem [#allocation9], %s473
        // Predicated region
        $region73: #{tpu_custom_call.1} parent=59 // pred_check
          %p475 = pneg %p192
        $region74: #{tpu_custom_call.1} parent=59 // pred_check_branch
          %477 = sbr.rel (%p475) target = $region76
        $region75: #{tpu_custom_call.1} parent=59 // pred_region
          %479 = dma.done %s471, 512
        $region76: #{tpu_custom_call.1} parent=59 // pred_fallthru
          _
        %s480 = sand.u32 %s30, 1
        %s481 = scalar_lea.sflag [#allocation10], %s480
        %s482 = sand.u32 %s205, 1
        %s483 = smul.addr %s482, 32
        %s484 = scalar_lea.vmem [#allocation11], %s483
        // Predicated region
        $region77: #{tpu_custom_call.1} parent=59 // pred_check
          %p485 = pneg %p218
        $region78: #{tpu_custom_call.1} parent=59 // pred_check_branch
          %487 = sbr.rel (%p485) target = $region80
        $region79: #{tpu_custom_call.1} parent=59 // pred_region
          %489 = dma.done %s481, 512
        $region80: #{tpu_custom_call.1} parent=59 // pred_fallthru
          _
        %s490 = sand.u32 %s257, 1
        %s491 = scalar_lea.sflag [#allocation13], %s490
        %s492 = sand.u32 %s257, 1
        %s493 = smul.addr %s492, 16
        %s494 = scalar_lea.vmem [#allocation12], %s493
        // Predicated region
        $region81: #{tpu_custom_call.1} parent=59 // pred_check
          %p495 = pneg %p270
        $region82: #{tpu_custom_call.1} parent=59 // pred_check_branch
          %497 = sbr.rel (%p495) target = $region84
        $region83: #{tpu_custom_call.1} parent=59 // pred_region
          %499 = dma.done %s491, 256
        $region84: #{tpu_custom_call.1} parent=59 // pred_fallthru
          _
        %p500 = pneg %p46
        %p501 = pneg %p43
        %p502 = pneg %p67
        %p503 = pneg %p64
        %p504 = pneg %p88
        %p505 = pneg %p85
        %p506 = scmp.lt.s32.totalorder %s30, 1
        %s507 = scalar_select %p506, %s30, 1
        %s508 = smul.addr %s507, 4
        %s509 = smul.addr %s508, 8
        %s510 = scalar_lea.vmem %s3, %s509
        %p511 = pneg %p114
        %p512 = pneg %p111
        %p513 = scmp.lt.s32.totalorder %s30, 1
        %s514 = scalar_select %p513, %s30, 1
        %s515 = smul.addr %s514, 4
        %s516 = smul.addr %s515, 8
        %s517 = scalar_lea.vmem %s4, %s516
        %p518 = pneg %p140
        %p519 = pneg %p137
        %p520 = scmp.lt.s32.totalorder %s30, 1
        %s521 = scalar_select %p520, %s30, 1
        %s522 = smul.addr %s521, 4
        %s523 = smul.addr %s522, 8
        %s524 = scalar_lea.vmem %s5, %s523
        %p525 = pneg %p166
        %p526 = pneg %p163
        %s527 = sand.u32 %s30, 1
        %s528 = scalar_lea.sflag [#allocation10], %s527
        %s529 = sand.u32 %s179, 1
        %s530 = smul.addr %s529, 32
        %s531 = scalar_lea.vmem [#allocation9], %s530
        %p532 = pneg %p192
        %p533 = pneg %p189
        %s534 = sand.u32 %s30, 1
        %s535 = scalar_lea.sflag [#allocation10], %s534
        %s536 = sand.u32 %s205, 1
        %s537 = smul.addr %s536, 32
        %s538 = scalar_lea.vmem [#allocation11], %s537
        %p539 = pneg %p218
        %p540 = pneg %p215
        %p541 = scmp.lt.s32.totalorder %s30, 1
        %s542 = scalar_select %p541, %s30, 1
        %s543 = smul.addr %s542, 8
        %s544 = smul.addr %s543, 8
        %s545 = scalar_lea.vmem %s8, %s544
        %p546 = pneg %p244
        %p547 = pneg %p241
        %s548 = sand.u32 %s257, 1
        %s549 = scalar_lea.sflag [#allocation13], %s548
        %s550 = sand.u32 %s257, 1
        %s551 = smul.addr %s550, 16
        %s552 = scalar_lea.vmem [#allocation12], %s551
        %p553 = pneg %p270
        %p554 = pneg %p267
        %p555 = pneg %p291
        %p556 = pneg %p288
        %p557 = scmp.lt.s32.totalorder %s30, 1
        %s558 = scalar_select %p557, %s30, 1
        %s559 = smul.addr %s558, 4
        %s560 = smul.addr %s559, 8
        %s561 = scalar_lea.vmem %s3, %s560
        %p562 = scmp.lt.s32.totalorder %s30, 1
        %s563 = scalar_select %p562, %s30, 1
        %s564 = smul.addr %s563, 4
        %s565 = smul.addr %s564, 8
        %s566 = scalar_lea.vmem %s4, %s565
        %p567 = scmp.lt.s32.totalorder %s30, 1
        %s568 = scalar_select %p567, %s30, 1
        %s569 = smul.addr %s568, 4
        %s570 = smul.addr %s569, 8
        %s571 = scalar_lea.vmem %s5, %s570
        %p572 = scmp.lt.s32.totalorder %s30, 1
        %s573 = scalar_select %p572, %s30, 1
        %s574 = smul.addr %s573, 8
        %s575 = smul.addr %s574, 8
        %s576 = scalar_lea.vmem %s8, %s575
        %p577 = scmp.eq.s32.totalorder %s30, 0
        // Predicated region
        $region85: #{tpu_custom_call.1} parent=59 // pred_check
          %p578 = pneg %p577
        $region86: #{tpu_custom_call.1} parent=59 // pred_check_branch
          %580 = sbr.rel (%p578) target = $region88
        $region87: #{tpu_custom_call.1} parent=59 // pred_region
          %v581 = vld [vmem:[#allocation3] sm:$0xff]
          %v582 = vld [vmem:[#allocation3 + $0x8] sm:$0xff]
          %vm583 = vcmask 261120
          %584 = vst.msk [vmem:[#allocation14] sm:$0xff] %vm583, %v581
          %585 = vst.msk [vmem:[#allocation14 + $0x8] sm:$0xff] %vm583, %v582
        $region88: #{tpu_custom_call.1} parent=59 // pred_fallthru
          _
        %v586 = vld [vmem:[#allocation14] sm:$0xff]
        %v587 = vld [vmem:[#allocation14 + $0x8] sm:$0xff]
        %v588 = vld [vmem:[#allocation6] sm:$0xff]
        %v589 = vld [vmem:[#allocation6 + $0x8] sm:$0xff]
        %v590 = vld [vmem:[#allocation6 + $0x10] sm:$0xff]
        %v591 = vld [vmem:[#allocation6 + $0x18] sm:$0xff]
        %v592 = vld [vmem:[#allocation8] sm:$0xff]
        %v593 = vld [vmem:[%s494] sm:$0xff]
        %v594 = vld [vmem:[%s494 + $0x8] sm:$0xff]
        %v595 = vld [vmem:[%s561] sm:$0xff]
        %v596 = vld [vmem:[%s561 + $0x8] sm:$0xff]
        %v597 = vld [vmem:[%s561 + $0x10] sm:$0xff]
        %v598 = vld [vmem:[%s561 + $0x18] sm:$0xff]
        %v599 = vld [vmem:[%s566] sm:$0xff]
        %v600 = vld [vmem:[%s566 + $0x8] sm:$0xff]
        %v601 = vld [vmem:[%s566 + $0x10] sm:$0xff]
        %v602 = vld [vmem:[%s566 + $0x18] sm:$0xff]
        %v603 = vperm.slane %v593, 0
        %vm604 = vcmask 261120
        %v606 = vsel %vm604, %v586, 0
        %v609 = vsel %vm604, %v587, 0
        %611 = vmatpush.msra.mxu0 0.0
        %612 = vmatpush.msra.mxu0 0.0
        %613 = vmatpush.msra.mxu0 0.0
        %614 = vmatpush.msra.mxu0 0.0
        %615 = vmatpush.msra.mxu0 0.0
        %616 = vmatpush.msra.mxu0 0.0
        %617 = vmatpush.msra.mxu0 0.0
        %618 = vmatpush.msra.mxu0 0.0
        %619 = vmatpush.msra.mxu0 0.0
        %620 = vmatpush.msra.mxu0 0.0
        %621 = vmatpush.msra.mxu0 0.0
        %622 = vmatpush.msra.mxu0 0.0
        %623 = vmatpush.msra.mxu0 %v598
        %624 = vmatpush.msra.mxu0 %v597
        %625 = vmatpush.msra.mxu0 %v596
        %626 = vmatpush.msra.mxu0 %v595
        %627 = vmatmul.f32.gmra.mxu0 %v606
        %v628 = vpop.f32.mrf.mxu0
        %v629 = vadd.f32 %v603, %v628
        %630 = vmatmul.f32.gmra.mxu0 %v609
        %v631 = vpop.f32.mrf.mxu0
        %v632 = vadd.f32 %v603, %v631
        %633 = vdwg.mxu0
        %635 = vrot.lane.b32.xlu0 %v629, 96
        %v636 = vpop.permute.xlu0 %635
        %vm637 = vcmask 64512
        %v638 = vsel %vm637, %v629, 0
        %v640 = vsel %vm637, %v636, 0
        %642 = vmatpush.xpose.msra.mxu0 0.0
        %643 = vmatpush.xpose.msra.mxu0 0.0
        %644 = vmatpush.xpose.msra.mxu0 0.0
        %645 = vmatpush.xpose.msra.mxu0 0.0
        %646 = vmatpush.xpose.msra.mxu0 0.0
        %647 = vmatpush.xpose.msra.mxu0 0.0
        %648 = vmatpush.xpose.msra.mxu0 0.0
        %649 = vmatpush.xpose.msra.mxu0 0.0
        %650 = vmatpush.xpose.msra.mxu0 0.0
        %651 = vmatpush.xpose.msra.mxu0 0.0
        %652 = vmatpush.xpose.msra.mxu0 0.0
        %653 = vmatpush.xpose.msra.mxu0 0.0
        %654 = vmatpush.xpose.msra.mxu0 0.0
        %655 = vmatpush.xpose.msra.mxu0 0.0
        %656 = vmatpush.xpose.msra.mxu0 0.0
        %657 = vmatpush.xpose.msra.mxu0 %v640
        %658 = vmatmul.f32.gmra.mxu0 %v638
        %v659 = vpop.f32.mrf.mxu0
        %v660 = vadd.f32 0.0, %v659
        %661 = vdwg.mxu0
        %v662 = vmul.f32 %v660, 0.35355338
        %v663 = vadd.f32 %v662, %v592
        %v664 = vsel %vm637, %v663, -inf
        %665 = vmax.xlane.f32.xlu0 %v664
        %v666 = vpop.xlane.xlu0 %665
        %v667 = vsub.f32 %v663, %v666
        %v668 = vmul.f32 %v667, 1.442695
        %v669 = vpow.pop %v668
        %v670 = vsel %vm637, %v669, 0.0
        %671 = vadd.xlane.f32.xlu0 %v670
        %v672 = vpop.xlane.xlu0 %671
        %v673 = vrcp.pop %v672
        %v674 = vmul.f32 %v669, %v673
        %675 = vrot.lane.b32.xlu0 %v629, 64
        %v676 = vpop.permute.xlu0 %675
        %v679 = vsel %vm637, %v674, 0
        %681 = vmatpush.msra.mxu0 0.0
        %682 = vmatpush.msra.mxu0 0.0
        %683 = vmatpush.msra.mxu0 0.0
        %684 = vmatpush.msra.mxu0 0.0
        %685 = vmatpush.msra.mxu0 0.0
        %686 = vmatpush.msra.mxu0 0.0
        %687 = vmatpush.msra.mxu0 0.0
        %688 = vmatpush.msra.mxu0 0.0
        %689 = vmatpush.msra.mxu0 0.0
        %690 = vmatpush.msra.mxu0 0.0
        %691 = vmatpush.msra.mxu0 0.0
        %692 = vmatpush.msra.mxu0 0.0
        %693 = vmatpush.msra.mxu0 0.0
        %694 = vmatpush.msra.mxu0 0.0
        %695 = vmatpush.msra.mxu0 0.0
        %696 = vmatpush.msra.mxu0 %v676
        %697 = vmatmul.f32.gmra.mxu0 %v679
        %v698 = vpop.f32.mrf.mxu0
        %v699 = vadd.f32 0.0, %v698
        %700 = vdwg.mxu0
        %701 = vrot.lane.b32.xlu0 %v629, 120
        %v702 = vpop.permute.xlu0 %701
        %703 = vrot.lane.b32.xlu0 %v629, 88
        %v704 = vpop.permute.xlu0 %703
        %v705 = vsel %vm637, %v702, 0
        %v707 = vsel %vm637, %v704, 0
        %709 = vmatpush.xpose.msra.mxu0 0.0
        %710 = vmatpush.xpose.msra.mxu0 0.0
        %711 = vmatpush.xpose.msra.mxu0 0.0
        %712 = vmatpush.xpose.msra.mxu0 0.0
        %713 = vmatpush.xpose.msra.mxu0 0.0
        %714 = vmatpush.xpose.msra.mxu0 0.0
        %715 = vmatpush.xpose.msra.mxu0 0.0
        %716 = vmatpush.xpose.msra.mxu0 0.0
        %717 = vmatpush.xpose.msra.mxu0 0.0
        %718 = vmatpush.xpose.msra.mxu0 0.0
        %719 = vmatpush.xpose.msra.mxu0 0.0
        %720 = vmatpush.xpose.msra.mxu0 0.0
        %721 = vmatpush.xpose.msra.mxu0 0.0
        %722 = vmatpush.xpose.msra.mxu0 0.0
        %723 = vmatpush.xpose.msra.mxu0 0.0
        %724 = vmatpush.xpose.msra.mxu0 %v707
        %725 = vmatmul.f32.gmra.mxu0 %v705
        %v726 = vpop.f32.mrf.mxu0
        %v727 = vadd.f32 0.0, %v726
        %728 = vdwg.mxu0
        %v729 = vmul.f32 %v727, 0.35355338
        %v730 = vadd.f32 %v729, %v592
        %v731 = vsel %vm637, %v730, -inf
        %732 = vmax.xlane.f32.xlu0 %v731
        %v733 = vpop.xlane.xlu0 %732
        %v734 = vsub.f32 %v730, %v733
        %v735 = vmul.f32 %v734, 1.442695
        %v736 = vpow.pop %v735
        %v737 = vsel %vm637, %v736, 0.0
        %738 = vadd.xlane.f32.xlu0 %v737
        %v739 = vpop.xlane.xlu0 %738
        %v740 = vrcp.pop %v739
        %v741 = vmul.f32 %v736, %v740
        %742 = vrot.lane.b32.xlu0 %v629, 56
        %v743 = vpop.permute.xlu0 %742
        %v746 = vsel %vm637, %v741, 0
        %748 = vmatpush.msra.mxu0 0.0
        %749 = vmatpush.msra.mxu0 0.0
        %750 = vmatpush.msra.mxu0 0.0
        %751 = vmatpush.msra.mxu0 0.0
        %752 = vmatpush.msra.mxu0 0.0
        %753 = vmatpush.msra.mxu0 0.0
        %754 = vmatpush.msra.mxu0 0.0
        %755 = vmatpush.msra.mxu0 0.0
        %756 = vmatpush.msra.mxu0 0.0
        %757 = vmatpush.msra.mxu0 0.0
        %758 = vmatpush.msra.mxu0 0.0
        %759 = vmatpush.msra.mxu0 0.0
        %760 = vmatpush.msra.mxu0 0.0
        %761 = vmatpush.msra.mxu0 0.0
        %762 = vmatpush.msra.mxu0 0.0
        %763 = vmatpush.msra.mxu0 %v743
        %764 = vmatmul.f32.gmra.mxu0 %v746
        %v765 = vpop.f32.mrf.mxu0
        %v766 = vadd.f32 0.0, %v765
        %767 = vdwg.mxu0
        %v769 = vsel %vm637, %v766, 0
        %771 = vmatpush.msra.mxu0 0.0
        %772 = vmatpush.msra.mxu0 0.0
        %773 = vmatpush.msra.mxu0 0.0
        %774 = vmatpush.msra.mxu0 0.0
        %775 = vmatpush.msra.mxu0 0.0
        %776 = vmatpush.msra.mxu0 0.0
        %777 = vmatpush.msra.mxu0 0.0
        %778 = vmatpush.msra.mxu0 0.0
        %779 = vmatpush.msra.mxu0 0.0
        %780 = vmatpush.msra.mxu0 0.0
        %781 = vmatpush.msra.mxu0 0.0
        %782 = vmatpush.msra.mxu0 0.0
        %783 = vmatpush.msra.mxu0 0.0
        %784 = vmatpush.msra.mxu0 0.0
        %785 = vmatpush.msra.mxu0 0.0
        %786 = vmatpush.msra.mxu0 %v600
        %787 = vmatmul.f32.gmra.mxu0 %v769
        %v788 = vpop.f32.mrf.mxu0
        %v789 = vadd.f32 0.0, %v788
        %790 = vdwg.mxu0
        %v792 = vsel %vm637, %v699, 0
        %794 = vmatpush.msra.mxu0 0.0
        %795 = vmatpush.msra.mxu0 0.0
        %796 = vmatpush.msra.mxu0 0.0
        %797 = vmatpush.msra.mxu0 0.0
        %798 = vmatpush.msra.mxu0 0.0
        %799 = vmatpush.msra.mxu0 0.0
        %800 = vmatpush.msra.mxu0 0.0
        %801 = vmatpush.msra.mxu0 0.0
        %802 = vmatpush.msra.mxu0 0.0
        %803 = vmatpush.msra.mxu0 0.0
        %804 = vmatpush.msra.mxu0 0.0
        %805 = vmatpush.msra.mxu0 0.0
        %806 = vmatpush.msra.mxu0 0.0
        %807 = vmatpush.msra.mxu0 0.0
        %808 = vmatpush.msra.mxu0 0.0
        %809 = vmatpush.msra.mxu0 %v599
        %810 = vmatmul.f32.gmra.mxu0 %v792
        %v811 = vpop.f32.mrf.mxu0
        %v812 = vadd.f32 %v789, %v811
        %813 = vdwg.mxu0
        %814 = vrot.lane.b32.xlu0 %v629, 112
        %v815 = vpop.permute.xlu0 %814
        %816 = vrot.lane.b32.xlu0 %v629, 80
        %v817 = vpop.permute.xlu0 %816
        %v818 = vsel %vm637, %v815, 0
        %v820 = vsel %vm637, %v817, 0
        %822 = vmatpush.xpose.msra.mxu0 0.0
        %823 = vmatpush.xpose.msra.mxu0 0.0
        %824 = vmatpush.xpose.msra.mxu0 0.0
        %825 = vmatpush.xpose.msra.mxu0 0.0
        %826 = vmatpush.xpose.msra.mxu0 0.0
        %827 = vmatpush.xpose.msra.mxu0 0.0
        %828 = vmatpush.xpose.msra.mxu0 0.0
        %829 = vmatpush.xpose.msra.mxu0 0.0
        %830 = vmatpush.xpose.msra.mxu0 0.0
        %831 = vmatpush.xpose.msra.mxu0 0.0
        %832 = vmatpush.xpose.msra.mxu0 0.0
        %833 = vmatpush.xpose.msra.mxu0 0.0
        %834 = vmatpush.xpose.msra.mxu0 0.0
        %835 = vmatpush.xpose.msra.mxu0 0.0
        %836 = vmatpush.xpose.msra.mxu0 0.0
        %837 = vmatpush.xpose.msra.mxu0 %v820
        %838 = vmatmul.f32.gmra.mxu0 %v818
        %v839 = vpop.f32.mrf.mxu0
        %v840 = vadd.f32 0.0, %v839
        %841 = vdwg.mxu0
        %v842 = vmul.f32 %v840, 0.35355338
        %v843 = vadd.f32 %v842, %v592
        %v844 = vsel %vm637, %v843, -inf
        %845 = vmax.xlane.f32.xlu0 %v844
        %v846 = vpop.xlane.xlu0 %845
        %v847 = vsub.f32 %v843, %v846
        %v848 = vmul.f32 %v847, 1.442695
        %v849 = vpow.pop %v848
        %v850 = vsel %vm637, %v849, 0.0
        %851 = vadd.xlane.f32.xlu0 %v850
        %v852 = vpop.xlane.xlu0 %851
        %v853 = vrcp.pop %v852
        %v854 = vmul.f32 %v849, %v853
        %855 = vrot.lane.b32.xlu0 %v629, 48
        %v856 = vpop.permute.xlu0 %855
        %v859 = vsel %vm637, %v854, 0
        %861 = vmatpush.msra.mxu0 0.0
        %862 = vmatpush.msra.mxu0 0.0
        %863 = vmatpush.msra.mxu0 0.0
        %864 = vmatpush.msra.mxu0 0.0
        %865 = vmatpush.msra.mxu0 0.0
        %866 = vmatpush.msra.mxu0 0.0
        %867 = vmatpush.msra.mxu0 0.0
        %868 = vmatpush.msra.mxu0 0.0
        %869 = vmatpush.msra.mxu0 0.0
        %870 = vmatpush.msra.mxu0 0.0
        %871 = vmatpush.msra.mxu0 0.0
        %872 = vmatpush.msra.mxu0 0.0
        %873 = vmatpush.msra.mxu0 0.0
        %874 = vmatpush.msra.mxu0 0.0
        %875 = vmatpush.msra.mxu0 0.0
        %876 = vmatpush.msra.mxu0 %v856
        %877 = vmatmul.f32.gmra.mxu0 %v859
        %v878 = vpop.f32.mrf.mxu0
        %v879 = vadd.f32 0.0, %v878
        %880 = vdwg.mxu0
        %v882 = vsel %vm637, %v879, 0
        %884 = vmatpush.msra.mxu0 0.0
        %885 = vmatpush.msra.mxu0 0.0
        %886 = vmatpush.msra.mxu0 0.0
        %887 = vmatpush.msra.mxu0 0.0
        %888 = vmatpush.msra.mxu0 0.0
        %889 = vmatpush.msra.mxu0 0.0
        %890 = vmatpush.msra.mxu0 0.0
        %891 = vmatpush.msra.mxu0 0.0
        %892 = vmatpush.msra.mxu0 0.0
        %893 = vmatpush.msra.mxu0 0.0
        %894 = vmatpush.msra.mxu0 0.0
        %895 = vmatpush.msra.mxu0 0.0
        %896 = vmatpush.msra.mxu0 0.0
        %897 = vmatpush.msra.mxu0 0.0
        %898 = vmatpush.msra.mxu0 0.0
        %899 = vmatpush.msra.mxu0 %v601
        %900 = vmatmul.f32.gmra.mxu0 %v882
        %v901 = vpop.f32.mrf.mxu0
        %v902 = vadd.f32 0.0, %v901
        %903 = vdwg.mxu0
        %v904 = vadd.f32 %v812, %v902
        %905 = vrot.lane.b32.xlu0 %v629, 104
        %v906 = vpop.permute.xlu0 %905
        %907 = vrot.lane.b32.xlu0 %v629, 72
        %v908 = vpop.permute.xlu0 %907
        %v909 = vsel %vm637, %v906, 0
        %v911 = vsel %vm637, %v908, 0
        %913 = vmatpush.xpose.msra.mxu0 0.0
        %914 = vmatpush.xpose.msra.mxu0 0.0
        %915 = vmatpush.xpose.msra.mxu0 0.0
        %916 = vmatpush.xpose.msra.mxu0 0.0
        %917 = vmatpush.xpose.msra.mxu0 0.0
        %918 = vmatpush.xpose.msra.mxu0 0.0
        %919 = vmatpush.xpose.msra.mxu0 0.0
        %920 = vmatpush.xpose.msra.mxu0 0.0
        %921 = vmatpush.xpose.msra.mxu0 0.0
        %922 = vmatpush.xpose.msra.mxu0 0.0
        %923 = vmatpush.xpose.msra.mxu0 0.0
        %924 = vmatpush.xpose.msra.mxu0 0.0
        %925 = vmatpush.xpose.msra.mxu0 0.0
        %926 = vmatpush.xpose.msra.mxu0 0.0
        %927 = vmatpush.xpose.msra.mxu0 0.0
        %928 = vmatpush.xpose.msra.mxu0 %v911
        %929 = vmatmul.f32.gmra.mxu0 %v909
        %v930 = vpop.f32.mrf.mxu0
        %v931 = vadd.f32 0.0, %v930
        %932 = vdwg.mxu0
        %v933 = vmul.f32 %v931, 0.35355338
        %v934 = vadd.f32 %v933, %v592
        %v935 = vsel %vm637, %v934, -inf
        %936 = vmax.xlane.f32.xlu0 %v935
        %v937 = vpop.xlane.xlu0 %936
        %v938 = vsub.f32 %v934, %v937
        %v939 = vmul.f32 %v938, 1.442695
        %v940 = vpow.pop %v939
        %v941 = vsel %vm637, %v940, 0.0
        %942 = vadd.xlane.f32.xlu0 %v941
        %v943 = vpop.xlane.xlu0 %942
        %v944 = vrcp.pop %v943
        %v945 = vmul.f32 %v940, %v944
        %946 = vrot.lane.b32.xlu0 %v629, 40
        %v947 = vpop.permute.xlu0 %946
        %v950 = vsel %vm637, %v945, 0
        %952 = vmatpush.msra.mxu0 0.0
        %953 = vmatpush.msra.mxu0 0.0
        %954 = vmatpush.msra.mxu0 0.0
        %955 = vmatpush.msra.mxu0 0.0
        %956 = vmatpush.msra.mxu0 0.0
        %957 = vmatpush.msra.mxu0 0.0
        %958 = vmatpush.msra.mxu0 0.0
        %959 = vmatpush.msra.mxu0 0.0
        %960 = vmatpush.msra.mxu0 0.0
        %961 = vmatpush.msra.mxu0 0.0
        %962 = vmatpush.msra.mxu0 0.0
        %963 = vmatpush.msra.mxu0 0.0
        %964 = vmatpush.msra.mxu0 0.0
        %965 = vmatpush.msra.mxu0 0.0
        %966 = vmatpush.msra.mxu0 0.0
        %967 = vmatpush.msra.mxu0 %v947
        %968 = vmatmul.f32.gmra.mxu0 %v950
        %v969 = vpop.f32.mrf.mxu0
        %v970 = vadd.f32 0.0, %v969
        %971 = vdwg.mxu0
        %v973 = vsel %vm637, %v970, 0
        %975 = vmatpush.msra.mxu0 0.0
        %976 = vmatpush.msra.mxu0 0.0
        %977 = vmatpush.msra.mxu0 0.0
        %978 = vmatpush.msra.mxu0 0.0
        %979 = vmatpush.msra.mxu0 0.0
        %980 = vmatpush.msra.mxu0 0.0
        %981 = vmatpush.msra.mxu0 0.0
        %982 = vmatpush.msra.mxu0 0.0
        %983 = vmatpush.msra.mxu0 0.0
        %984 = vmatpush.msra.mxu0 0.0
        %985 = vmatpush.msra.mxu0 0.0
        %986 = vmatpush.msra.mxu0 0.0
        %987 = vmatpush.msra.mxu0 0.0
        %988 = vmatpush.msra.mxu0 0.0
        %989 = vmatpush.msra.mxu0 0.0
        %990 = vmatpush.msra.mxu0 %v602
        %991 = vmatmul.f32.gmra.mxu0 %v973
        %v992 = vpop.f32.mrf.mxu0
        %v993 = vadd.f32 0.0, %v992
        %994 = vdwg.mxu0
        %v995 = vadd.f32 %v904, %v993
        %996 = vst.msk [vmem:[#allocation2] sm:$0xff] %vm604, %v995
        %998 = vrot.lane.b32.xlu0 %v632, 96
        %v999 = vpop.permute.xlu0 %998
        %v1000 = vsel %vm637, %v632, 0
        %v1002 = vsel %vm637, %v999, 0
        %1004 = vmatpush.xpose.msra.mxu0 0.0
        %1005 = vmatpush.xpose.msra.mxu0 0.0
        %1006 = vmatpush.xpose.msra.mxu0 0.0
        %1007 = vmatpush.xpose.msra.mxu0 0.0
        %1008 = vmatpush.xpose.msra.mxu0 0.0
        %1009 = vmatpush.xpose.msra.mxu0 0.0
        %1010 = vmatpush.xpose.msra.mxu0 0.0
        %1011 = vmatpush.xpose.msra.mxu0 0.0
        %1012 = vmatpush.xpose.msra.mxu0 0.0
        %1013 = vmatpush.xpose.msra.mxu0 0.0
        %1014 = vmatpush.xpose.msra.mxu0 0.0
        %1015 = vmatpush.xpose.msra.mxu0 0.0
        %1016 = vmatpush.xpose.msra.mxu0 0.0
        %1017 = vmatpush.xpose.msra.mxu0 0.0
        %1018 = vmatpush.xpose.msra.mxu0 0.0
        %1019 = vmatpush.xpose.msra.mxu0 %v1002
        %1020 = vmatmul.f32.gmra.mxu0 %v1000
        %v1021 = vpop.f32.mrf.mxu0
        %v1022 = vadd.f32 0.0, %v1021
        %1023 = vdwg.mxu0
        %v1024 = vmul.f32 %v1022, 0.35355338
        %v1025 = vadd.f32 %v1024, %v592
        %v1026 = vsel %vm637, %v1025, -inf
        %1027 = vmax.xlane.f32.xlu0 %v1026
        %v1028 = vpop.xlane.xlu0 %1027
        %v1029 = vsub.f32 %v1025, %v1028
        %v1030 = vmul.f32 %v1029, 1.442695
        %v1031 = vpow.pop %v1030
        %v1032 = vsel %vm637, %v1031, 0.0
        %1033 = vadd.xlane.f32.xlu0 %v1032
        %v1034 = vpop.xlane.xlu0 %1033
        %v1035 = vrcp.pop %v1034
        %v1036 = vmul.f32 %v1031, %v1035
        %1037 = vrot.lane.b32.xlu0 %v632, 64
        %v1038 = vpop.permute.xlu0 %1037
        %v1041 = vsel %vm637, %v1036, 0
        %1043 = vmatpush.msra.mxu0 0.0
        %1044 = vmatpush.msra.mxu0 0.0
        %1045 = vmatpush.msra.mxu0 0.0
        %1046 = vmatpush.msra.mxu0 0.0
        %1047 = vmatpush.msra.mxu0 0.0
        %1048 = vmatpush.msra.mxu0 0.0
        %1049 = vmatpush.msra.mxu0 0.0
        %1050 = vmatpush.msra.mxu0 0.0
        %1051 = vmatpush.msra.mxu0 0.0
        %1052 = vmatpush.msra.mxu0 0.0
        %1053 = vmatpush.msra.mxu0 0.0
        %1054 = vmatpush.msra.mxu0 0.0
        %1055 = vmatpush.msra.mxu0 0.0
        %1056 = vmatpush.msra.mxu0 0.0
        %1057 = vmatpush.msra.mxu0 0.0
        %1058 = vmatpush.msra.mxu0 %v1038
        %1059 = vmatmul.f32.gmra.mxu0 %v1041
        %v1060 = vpop.f32.mrf.mxu0
        %v1061 = vadd.f32 0.0, %v1060
        %1062 = vdwg.mxu0
        %1063 = vrot.lane.b32.xlu0 %v632, 120
        %v1064 = vpop.permute.xlu0 %1063
        %1065 = vrot.lane.b32.xlu0 %v632, 88
        %v1066 = vpop.permute.xlu0 %1065
        %v1067 = vsel %vm637, %v1064, 0
        %v1069 = vsel %vm637, %v1066, 0
        %1071 = vmatpush.xpose.msra.mxu0 0.0
        %1072 = vmatpush.xpose.msra.mxu0 0.0
        %1073 = vmatpush.xpose.msra.mxu0 0.0
        %1074 = vmatpush.xpose.msra.mxu0 0.0
        %1075 = vmatpush.xpose.msra.mxu0 0.0
        %1076 = vmatpush.xpose.msra.mxu0 0.0
        %1077 = vmatpush.xpose.msra.mxu0 0.0
        %1078 = vmatpush.xpose.msra.mxu0 0.0
        %1079 = vmatpush.xpose.msra.mxu0 0.0
        %1080 = vmatpush.xpose.msra.mxu0 0.0
        %1081 = vmatpush.xpose.msra.mxu0 0.0
        %1082 = vmatpush.xpose.msra.mxu0 0.0
        %1083 = vmatpush.xpose.msra.mxu0 0.0
        %1084 = vmatpush.xpose.msra.mxu0 0.0
        %1085 = vmatpush.xpose.msra.mxu0 0.0
        %1086 = vmatpush.xpose.msra.mxu0 %v1069
        %1087 = vmatmul.f32.gmra.mxu0 %v1067
        %v1088 = vpop.f32.mrf.mxu0
        %v1089 = vadd.f32 0.0, %v1088
        %1090 = vdwg.mxu0
        %v1091 = vmul.f32 %v1089, 0.35355338
        %v1092 = vadd.f32 %v1091, %v592
        %v1093 = vsel %vm637, %v1092, -inf
        %1094 = vmax.xlane.f32.xlu0 %v1093
        %v1095 = vpop.xlane.xlu0 %1094
        %v1096 = vsub.f32 %v1092, %v1095
        %v1097 = vmul.f32 %v1096, 1.442695
        %v1098 = vpow.pop %v1097
        %v1099 = vsel %vm637, %v1098, 0.0
        %1100 = vadd.xlane.f32.xlu0 %v1099
        %v1101 = vpop.xlane.xlu0 %1100
        %v1102 = vrcp.pop %v1101
        %v1103 = vmul.f32 %v1098, %v1102
        %1104 = vrot.lane.b32.xlu0 %v632, 56
        %v1105 = vpop.permute.xlu0 %1104
        %v1108 = vsel %vm637, %v1103, 0
        %1110 = vmatpush.msra.mxu0 0.0
        %1111 = vmatpush.msra.mxu0 0.0
        %1112 = vmatpush.msra.mxu0 0.0
        %1113 = vmatpush.msra.mxu0 0.0
        %1114 = vmatpush.msra.mxu0 0.0
        %1115 = vmatpush.msra.mxu0 0.0
        %1116 = vmatpush.msra.mxu0 0.0
        %1117 = vmatpush.msra.mxu0 0.0
        %1118 = vmatpush.msra.mxu0 0.0
        %1119 = vmatpush.msra.mxu0 0.0
        %1120 = vmatpush.msra.mxu0 0.0
        %1121 = vmatpush.msra.mxu0 0.0
        %1122 = vmatpush.msra.mxu0 0.0
        %1123 = vmatpush.msra.mxu0 0.0
        %1124 = vmatpush.msra.mxu0 0.0
        %1125 = vmatpush.msra.mxu0 %v1105
        %1126 = vmatmul.f32.gmra.mxu0 %v1108
        %v1127 = vpop.f32.mrf.mxu0
        %v1128 = vadd.f32 0.0, %v1127
        %1129 = vdwg.mxu0
        %v1131 = vsel %vm637, %v1128, 0
        %1133 = vmatpush.msra.mxu0 0.0
        %1134 = vmatpush.msra.mxu0 0.0
        %1135 = vmatpush.msra.mxu0 0.0
        %1136 = vmatpush.msra.mxu0 0.0
        %1137 = vmatpush.msra.mxu0 0.0
        %1138 = vmatpush.msra.mxu0 0.0
        %1139 = vmatpush.msra.mxu0 0.0
        %1140 = vmatpush.msra.mxu0 0.0
        %1141 = vmatpush.msra.mxu0 0.0
        %1142 = vmatpush.msra.mxu0 0.0
        %1143 = vmatpush.msra.mxu0 0.0
        %1144 = vmatpush.msra.mxu0 0.0
        %1145 = vmatpush.msra.mxu0 0.0
        %1146 = vmatpush.msra.mxu0 0.0
        %1147 = vmatpush.msra.mxu0 0.0
        %1148 = vmatpush.msra.mxu0 %v600
        %1149 = vmatmul.f32.gmra.mxu0 %v1131
        %v1150 = vpop.f32.mrf.mxu0
        %v1151 = vadd.f32 0.0, %v1150
        %1152 = vdwg.mxu0
        %v1154 = vsel %vm637, %v1061, 0
        %1156 = vmatpush.msra.mxu0 0.0
        %1157 = vmatpush.msra.mxu0 0.0
        %1158 = vmatpush.msra.mxu0 0.0
        %1159 = vmatpush.msra.mxu0 0.0
        %1160 = vmatpush.msra.mxu0 0.0
        %1161 = vmatpush.msra.mxu0 0.0
        %1162 = vmatpush.msra.mxu0 0.0
        %1163 = vmatpush.msra.mxu0 0.0
        %1164 = vmatpush.msra.mxu0 0.0
        %1165 = vmatpush.msra.mxu0 0.0
        %1166 = vmatpush.msra.mxu0 0.0
        %1167 = vmatpush.msra.mxu0 0.0
        %1168 = vmatpush.msra.mxu0 0.0
        %1169 = vmatpush.msra.mxu0 0.0
        %1170 = vmatpush.msra.mxu0 0.0
        %1171 = vmatpush.msra.mxu0 %v599
        %1172 = vmatmul.f32.gmra.mxu0 %v1154
        %v1173 = vpop.f32.mrf.mxu0
        %v1174 = vadd.f32 %v1151, %v1173
        %1175 = vdwg.mxu0
        %1176 = vrot.lane.b32.xlu0 %v632, 112
        %v1177 = vpop.permute.xlu0 %1176
        %1178 = vrot.lane.b32.xlu0 %v632, 80
        %v1179 = vpop.permute.xlu0 %1178
        %v1180 = vsel %vm637, %v1177, 0
        %v1182 = vsel %vm637, %v1179, 0
        %1184 = vmatpush.xpose.msra.mxu0 0.0
        %1185 = vmatpush.xpose.msra.mxu0 0.0
        %1186 = vmatpush.xpose.msra.mxu0 0.0
        %1187 = vmatpush.xpose.msra.mxu0 0.0
        %1188 = vmatpush.xpose.msra.mxu0 0.0
        %1189 = vmatpush.xpose.msra.mxu0 0.0
        %1190 = vmatpush.xpose.msra.mxu0 0.0
        %1191 = vmatpush.xpose.msra.mxu0 0.0
        %1192 = vmatpush.xpose.msra.mxu0 0.0
        %1193 = vmatpush.xpose.msra.mxu0 0.0
        %1194 = vmatpush.xpose.msra.mxu0 0.0
        %1195 = vmatpush.xpose.msra.mxu0 0.0
        %1196 = vmatpush.xpose.msra.mxu0 0.0
        %1197 = vmatpush.xpose.msra.mxu0 0.0
        %1198 = vmatpush.xpose.msra.mxu0 0.0
        %1199 = vmatpush.xpose.msra.mxu0 %v1182
        %1200 = vmatmul.f32.gmra.mxu0 %v1180
        %v1201 = vpop.f32.mrf.mxu0
        %v1202 = vadd.f32 0.0, %v1201
        %1203 = vdwg.mxu0
        %v1204 = vmul.f32 %v1202, 0.35355338
        %v1205 = vadd.f32 %v1204, %v592
        %v1206 = vsel %vm637, %v1205, -inf
        %1207 = vmax.xlane.f32.xlu0 %v1206
        %v1208 = vpop.xlane.xlu0 %1207
        %v1209 = vsub.f32 %v1205, %v1208
        %v1210 = vmul.f32 %v1209, 1.442695
        %v1211 = vpow.pop %v1210
        %v1212 = vsel %vm637, %v1211, 0.0
        %1213 = vadd.xlane.f32.xlu0 %v1212
        %v1214 = vpop.xlane.xlu0 %1213
        %v1215 = vrcp.pop %v1214
        %v1216 = vmul.f32 %v1211, %v1215
        %1217 = vrot.lane.b32.xlu0 %v632, 48
        %v1218 = vpop.permute.xlu0 %1217
        %v1221 = vsel %vm637, %v1216, 0
        %1223 = vmatpush.msra.mxu0 0.0
        %1224 = vmatpush.msra.mxu0 0.0
        %1225 = vmatpush.msra.mxu0 0.0
        %1226 = vmatpush.msra.mxu0 0.0
        %1227 = vmatpush.msra.mxu0 0.0
        %1228 = vmatpush.msra.mxu0 0.0
        %1229 = vmatpush.msra.mxu0 0.0
        %1230 = vmatpush.msra.mxu0 0.0
        %1231 = vmatpush.msra.mxu0 0.0
        %1232 = vmatpush.msra.mxu0 0.0
        %1233 = vmatpush.msra.mxu0 0.0
        %1234 = vmatpush.msra.mxu0 0.0
        %1235 = vmatpush.msra.mxu0 0.0
        %1236 = vmatpush.msra.mxu0 0.0
        %1237 = vmatpush.msra.mxu0 0.0
        %1238 = vmatpush.msra.mxu0 %v1218
        %1239 = vmatmul.f32.gmra.mxu0 %v1221
        %v1240 = vpop.f32.mrf.mxu0
        %v1241 = vadd.f32 0.0, %v1240
        %1242 = vdwg.mxu0
        %v1244 = vsel %vm637, %v1241, 0
        %1246 = vmatpush.msra.mxu0 0.0
        %1247 = vmatpush.msra.mxu0 0.0
        %1248 = vmatpush.msra.mxu0 0.0
        %1249 = vmatpush.msra.mxu0 0.0
        %1250 = vmatpush.msra.mxu0 0.0
        %1251 = vmatpush.msra.mxu0 0.0
        %1252 = vmatpush.msra.mxu0 0.0
        %1253 = vmatpush.msra.mxu0 0.0
        %1254 = vmatpush.msra.mxu0 0.0
        %1255 = vmatpush.msra.mxu0 0.0
        %1256 = vmatpush.msra.mxu0 0.0
        %1257 = vmatpush.msra.mxu0 0.0
        %1258 = vmatpush.msra.mxu0 0.0
        %1259 = vmatpush.msra.mxu0 0.0
        %1260 = vmatpush.msra.mxu0 0.0
        %1261 = vmatpush.msra.mxu0 %v601
        %1262 = vmatmul.f32.gmra.mxu0 %v1244
        %v1263 = vpop.f32.mrf.mxu0
        %v1264 = vadd.f32 0.0, %v1263
        %1265 = vdwg.mxu0
        %v1266 = vadd.f32 %v1174, %v1264
        %1267 = vrot.lane.b32.xlu0 %v632, 104
        %v1268 = vpop.permute.xlu0 %1267
        %1269 = vrot.lane.b32.xlu0 %v632, 72
        %v1270 = vpop.permute.xlu0 %1269
        %v1271 = vsel %vm637, %v1268, 0
        %v1273 = vsel %vm637, %v1270, 0
        %1275 = vmatpush.xpose.msra.mxu0 0.0
        %1276 = vmatpush.xpose.msra.mxu0 0.0
        %1277 = vmatpush.xpose.msra.mxu0 0.0
        %1278 = vmatpush.xpose.msra.mxu0 0.0
        %1279 = vmatpush.xpose.msra.mxu0 0.0
        %1280 = vmatpush.xpose.msra.mxu0 0.0
        %1281 = vmatpush.xpose.msra.mxu0 0.0
        %1282 = vmatpush.xpose.msra.mxu0 0.0
        %1283 = vmatpush.xpose.msra.mxu0 0.0
        %1284 = vmatpush.xpose.msra.mxu0 0.0
        %1285 = vmatpush.xpose.msra.mxu0 0.0
        %1286 = vmatpush.xpose.msra.mxu0 0.0
        %1287 = vmatpush.xpose.msra.mxu0 0.0
        %1288 = vmatpush.xpose.msra.mxu0 0.0
        %1289 = vmatpush.xpose.msra.mxu0 0.0
        %1290 = vmatpush.xpose.msra.mxu0 %v1273
        %1291 = vmatmul.f32.gmra.mxu0 %v1271
        %v1292 = vpop.f32.mrf.mxu0
        %v1293 = vadd.f32 0.0, %v1292
        %1294 = vdwg.mxu0
        %v1295 = vmul.f32 %v1293, 0.35355338
        %v1296 = vadd.f32 %v1295, %v592
        %v1297 = vsel %vm637, %v1296, -inf
        %1298 = vmax.xlane.f32.xlu0 %v1297
        %v1299 = vpop.xlane.xlu0 %1298
        %v1300 = vsub.f32 %v1296, %v1299
        %v1301 = vmul.f32 %v1300, 1.442695
        %v1302 = vpow.pop %v1301
        %v1303 = vsel %vm637, %v1302, 0.0
        %1304 = vadd.xlane.f32.xlu0 %v1303
        %v1305 = vpop.xlane.xlu0 %1304
        %v1306 = vrcp.pop %v1305
        %v1307 = vmul.f32 %v1302, %v1306
        %1308 = vrot.lane.b32.xlu0 %v632, 40
        %v1309 = vpop.permute.xlu0 %1308
        %v1312 = vsel %vm637, %v1307, 0
        %1314 = vmatpush.msra.mxu0 0.0
        %1315 = vmatpush.msra.mxu0 0.0
        %1316 = vmatpush.msra.mxu0 0.0
        %1317 = vmatpush.msra.mxu0 0.0
        %1318 = vmatpush.msra.mxu0 0.0
        %1319 = vmatpush.msra.mxu0 0.0
        %1320 = vmatpush.msra.mxu0 0.0
        %1321 = vmatpush.msra.mxu0 0.0
        %1322 = vmatpush.msra.mxu0 0.0
        %1323 = vmatpush.msra.mxu0 0.0
        %1324 = vmatpush.msra.mxu0 0.0
        %1325 = vmatpush.msra.mxu0 0.0
        %1326 = vmatpush.msra.mxu0 0.0
        %1327 = vmatpush.msra.mxu0 0.0
        %1328 = vmatpush.msra.mxu0 0.0
        %1329 = vmatpush.msra.mxu0 %v1309
        %1330 = vmatmul.f32.gmra.mxu0 %v1312
        %v1331 = vpop.f32.mrf.mxu0
        %v1332 = vadd.f32 0.0, %v1331
        %1333 = vdwg.mxu0
        %v1335 = vsel %vm637, %v1332, 0
        %1337 = vmatpush.msra.mxu0 0.0
        %1338 = vmatpush.msra.mxu0 0.0
        %1339 = vmatpush.msra.mxu0 0.0
        %1340 = vmatpush.msra.mxu0 0.0
        %1341 = vmatpush.msra.mxu0 0.0
        %1342 = vmatpush.msra.mxu0 0.0
        %1343 = vmatpush.msra.mxu0 0.0
        %1344 = vmatpush.msra.mxu0 0.0
        %1345 = vmatpush.msra.mxu0 0.0
        %1346 = vmatpush.msra.mxu0 0.0
        %1347 = vmatpush.msra.mxu0 0.0
        %1348 = vmatpush.msra.mxu0 0.0
        %1349 = vmatpush.msra.mxu0 0.0
        %1350 = vmatpush.msra.mxu0 0.0
        %1351 = vmatpush.msra.mxu0 0.0
        %1352 = vmatpush.msra.mxu0 %v602
        %1353 = vmatmul.f32.gmra.mxu0 %v1335
        %v1354 = vpop.f32.mrf.mxu0
        %v1355 = vadd.f32 0.0, %v1354
        %1356 = vdwg.mxu0
        %v1357 = vadd.f32 %v1266, %v1355
        %1358 = vst.msk [vmem:[#allocation2 + $0x8] sm:$0xff] %vm604, %v1357
        %v1359 = vld [vmem:[#allocation2] sm:$0xff]
        %v1360 = vld [vmem:[#allocation2 + $0x8] sm:$0xff]
        %v1361 = vperm.slane %v593, 1
        %v1362 = vadd.f32 %v1359, %v1361
        %v1363 = vadd.f32 %v1360, %v1361
        %v1364 = vadd.f32 %v586, %v1362
        %v1365 = vadd.f32 %v587, %v1363
        %v1366 = vsel %vm604, %v1364, 0.0
        %1367 = vadd.xlane.f32.xlu0 %v1366
        %v1368 = vpop.xlane.xlu0 %1367
        %v1369 = vsel %vm604, %v1365, 0.0
        %1370 = vadd.xlane.f32.xlu0 %v1369
        %v1371 = vpop.xlane.xlu0 %1370
        %v1372 = vrcp.pop 32.0
        %v1373 = vmul.f32 32.0, %v1372
        %v1374 = vsub.f32 1.0, %v1373
        %v1375 = vmul.f32 %v1372, %v1374
        %v1376 = vadd.f32 %v1372, %v1375
        %vm1377 = vweird.f32 %v1372
        %v1378 = vsel %vm1377, %v1372, %v1376
        %v1379 = vmul.f32 %v1368, %v1378
        %v1380 = vmul.f32 %v1371, %v1378
        %v1381 = vmul.f32 %v1364, %v1364
        %v1382 = vmul.f32 %v1365, %v1365
        %v1383 = vsel %vm604, %v1381, 0.0
        %1384 = vadd.xlane.f32.xlu0 %v1383
        %v1385 = vpop.xlane.xlu0 %1384
        %v1386 = vsel %vm604, %v1382, 0.0
        %1387 = vadd.xlane.f32.xlu0 %v1386
        %v1388 = vpop.xlane.xlu0 %1387
        %v1389 = vmul.f32 %v1385, %v1378
        %v1390 = vmul.f32 %v1388, %v1378
        %v1391 = vmul.f32 %v1379, %v1379
        %v1392 = vmul.f32 %v1380, %v1380
        %v1393 = vsub.f32 %v1389, %v1391
        %v1394 = vsub.f32 %v1390, %v1392
        %v1395 = vsub.f32 %v1364, %v1379
        %v1396 = vsub.f32 %v1365, %v1380
        %v1397 = vadd.f32 %v1393, 1e-05
        %v1398 = vadd.f32 %v1394, 1e-05
        %v1399 = vrsqrt.pop %v1397
        %v1400 = vmul.f32 %v1399, %v1397
        %v1401 = vmul.f32 %v1400, %v1399
        %v1402 = vmul.f32 0.5, %v1401
        %v1403 = vsub.f32 1.5, %v1402
        %v1404 = vmul.f32 %v1399, %v1403
        %vm1405 = vweird.f32 %v1397
        %vm1406 = vweird.f32 %v1399
        %vm1407 = vmor %vm1405, %vm1406
        %v1408 = vsel %vm1407, %v1399, %v1404
        %v1409 = vrsqrt.pop %v1398
        %v1410 = vmul.f32 %v1409, %v1398
        %v1411 = vmul.f32 %v1410, %v1409
        %v1412 = vmul.f32 0.5, %v1411
        %v1413 = vsub.f32 1.5, %v1412
        %v1414 = vmul.f32 %v1409, %v1413
        %vm1415 = vweird.f32 %v1398
        %vm1416 = vweird.f32 %v1409
        %vm1417 = vmor %vm1415, %vm1416
        %v1418 = vsel %vm1417, %v1409, %v1414
        %v1419 = vmul.f32 %v1395, %v1408
        %v1420 = vmul.f32 %v1396, %v1418
        %v1421 = vperm.slane %v593, 6
        %v1422 = vmul.f32 %v1419, %v1421
        %v1423 = vmul.f32 %v1420, %v1421
        %v1424 = vperm.slane %v594, 1
        %v1425 = vadd.f32 %v1422, %v1424
        %v1426 = vadd.f32 %v1423, %v1424
        %v1427 = vld [vmem:[%s571] sm:$0xff]
        %v1428 = vld [vmem:[%s571 + $0x8] sm:$0xff]
        %v1429 = vld [vmem:[%s571 + $0x10] sm:$0xff]
        %v1430 = vld [vmem:[%s571 + $0x18] sm:$0xff]
        %v1431 = vld [vmem:[%s474] sm:$0xff]
        %v1432 = vld [vmem:[%s474 + $0x8] sm:$0xff]
        %v1433 = vld [vmem:[%s474 + $0x10] sm:$0xff]
        %v1434 = vld [vmem:[%s474 + $0x18] sm:$0xff]
        %v1435 = vperm.slane %v593, 2
        %v1437 = vsel %vm604, %v1425, 0
        %v1440 = vsel %vm604, %v1426, 0
        %1442 = vmatpush.msra.mxu0 0.0
        %1443 = vmatpush.msra.mxu0 0.0
        %1444 = vmatpush.msra.mxu0 0.0
        %1445 = vmatpush.msra.mxu0 0.0
        %1446 = vmatpush.msra.mxu0 0.0
        %1447 = vmatpush.msra.mxu0 0.0
        %1448 = vmatpush.msra.mxu0 0.0
        %1449 = vmatpush.msra.mxu0 0.0
        %1450 = vmatpush.msra.mxu0 0.0
        %1451 = vmatpush.msra.mxu0 0.0
        %1452 = vmatpush.msra.mxu0 0.0
        %1453 = vmatpush.msra.mxu0 0.0
        %1454 = vmatpush.msra.mxu0 %v1430
        %1455 = vmatpush.msra.mxu0 %v1429
        %1456 = vmatpush.msra.mxu0 %v1428
        %1457 = vmatpush.msra.mxu0 %v1427
        %1458 = vmatmul.f32.gmra.mxu0 %v1437
        %v1459 = vpop.f32.mrf.mxu0
        %v1460 = vadd.f32 %v1435, %v1459
        %1461 = vmatmul.f32.gmra.mxu0 %v1440
        %v1462 = vpop.f32.mrf.mxu0
        %v1463 = vadd.f32 %v1435, %v1462
        %1464 = vdwg.mxu0
        %1469 = vrot.lane.b32.xlu0 %v1427, 96
        %v1470 = vpop.permute.xlu0 %1469
        %1471 = vrot.lane.b32.xlu0 %v1428, 96
        %v1472 = vpop.permute.xlu0 %1471
        %1473 = vrot.lane.b32.xlu0 %v1429, 96
        %v1474 = vpop.permute.xlu0 %1473
        %1475 = vrot.lane.b32.xlu0 %v1430, 96
        %v1476 = vpop.permute.xlu0 %1475
        %1482 = vrot.lane.b32.xlu0 %v1435, 96
        %v1483 = vpop.permute.xlu0 %1482
        %v1486 = vsel %vm604, %v588, 0
        %v1489 = vsel %vm604, %v589, 0
        %v1492 = vsel %vm604, %v590, 0
        %v1495 = vsel %vm604, %v591, 0
        %1497 = vmatpush.msra.mxu0 0.0
        %1498 = vmatpush.msra.mxu0 0.0
        %1499 = vmatpush.msra.mxu0 0.0
        %1500 = vmatpush.msra.mxu0 0.0
        %1501 = vmatpush.msra.mxu0 0.0
        %1502 = vmatpush.msra.mxu0 0.0
        %1503 = vmatpush.msra.mxu0 0.0
        %1504 = vmatpush.msra.mxu0 0.0
        %1505 = vmatpush.msra.mxu0 0.0
        %1506 = vmatpush.msra.mxu0 0.0
        %1507 = vmatpush.msra.mxu0 0.0
        %1508 = vmatpush.msra.mxu0 0.0
        %1509 = vmatpush.msra.mxu0 %v1476
        %1510 = vmatpush.msra.mxu0 %v1474
        %1511 = vmatpush.msra.mxu0 %v1472
        %1512 = vmatpush.msra.mxu0 %v1470
        %1513 = vmatmul.f32.gmra.mxu0 %v1486
        %v1514 = vpop.f32.mrf.mxu0
        %v1515 = vadd.f32 %v1483, %v1514
        %1516 = vmatmul.f32.gmra.mxu0 %v1489
        %v1517 = vpop.f32.mrf.mxu0
        %v1518 = vadd.f32 %v1483, %v1517
        %1519 = vmatmul.f32.gmra.mxu0 %v1492
        %v1520 = vpop.f32.mrf.mxu0
        %v1521 = vadd.f32 %v1483, %v1520
        %1522 = vmatmul.f32.gmra.mxu0 %v1495
        %v1523 = vpop.f32.mrf.mxu0
        %v1524 = vadd.f32 %v1483, %v1523
        %1525 = vdwg.mxu0
        %v1527 = vsel %vm637, %v1460, 0
        %v1530 = vsel %vm637, %v1515, 0
        %v1533 = vsel %vm637, %v1518, 0
        %1535 = vmatpush.xpose.msra.mxu0 0.0
        %1536 = vmatpush.xpose.msra.mxu0 0.0
        %1537 = vmatpush.xpose.msra.mxu0 0.0
        %1538 = vmatpush.xpose.msra.mxu0 0.0
        %1539 = vmatpush.xpose.msra.mxu0 0.0
        %1540 = vmatpush.xpose.msra.mxu0 0.0
        %1541 = vmatpush.xpose.msra.mxu0 0.0
        %1542 = vmatpush.xpose.msra.mxu0 0.0
        %1543 = vmatpush.xpose.msra.mxu0 0.0
        %1544 = vmatpush.xpose.msra.mxu0 0.0
        %1545 = vmatpush.xpose.msra.mxu0 0.0
        %1546 = vmatpush.xpose.msra.mxu0 0.0
        %1547 = vmatpush.xpose.msra.mxu0 0.0
        %1548 = vmatpush.xpose.msra.mxu0 0.0
        %1549 = vmatpush.xpose.msra.mxu0 %v1533
        %1550 = vmatpush.xpose.msra.mxu0 %v1530
        %1551 = vmatmul.f32.gmra.mxu0 %v1527
        %v1552 = vpop.f32.mrf.mxu0
        %v1553 = vadd.f32 0.0, %v1552
        %1554 = vdwg.mxu0
        %v1555 = vmul.f32 %v1553, 0.35355338
        %vm1556 = vcmask 130048
        %v1557 = vsel %vm1556, %v1555, -inf
        %1558 = vmax.xlane.f32.xlu0 %v1557
        %v1559 = vpop.xlane.xlu0 %1558
        %v1560 = vsub.f32 %v1555, %v1559
        %v1561 = vmul.f32 %v1560, 1.442695
        %v1562 = vpow.pop %v1561
        %v1563 = vsel %vm1556, %v1562, 0.0
        %1564 = vadd.xlane.f32.xlu0 %v1563
        %v1565 = vpop.xlane.xlu0 %1564
        %v1566 = vrcp.pop %v1565
        %v1567 = vmul.f32 %v1562, %v1566
        %1568 = vrot.lane.b32.xlu0 %v1515, 96
        %v1569 = vpop.permute.xlu0 %1568
        %1570 = vrot.lane.b32.xlu0 %v1518, 96
        %v1571 = vpop.permute.xlu0 %1570
        %v1575 = vsel %vm1556, %v1567, 0
        %1577 = vmatpush.msra.mxu0 0.0
        %1578 = vmatpush.msra.mxu0 0.0
        %1579 = vmatpush.msra.mxu0 0.0
        %1580 = vmatpush.msra.mxu0 0.0
        %1581 = vmatpush.msra.mxu0 0.0
        %1582 = vmatpush.msra.mxu0 0.0
        %1583 = vmatpush.msra.mxu0 0.0
        %1584 = vmatpush.msra.mxu0 0.0
        %1585 = vmatpush.msra.mxu0 0.0
        %1586 = vmatpush.msra.mxu0 0.0
        %1587 = vmatpush.msra.mxu0 0.0
        %1588 = vmatpush.msra.mxu0 0.0
        %1589 = vmatpush.msra.mxu0 0.0
        %1590 = vmatpush.msra.mxu0 0.0
        %1591 = vmatpush.msra.mxu0 %v1571
        %1592 = vmatpush.msra.mxu0 %v1569
        %1593 = vmatmul.f32.gmra.mxu0 %v1575
        %v1594 = vpop.f32.mrf.mxu0
        %v1595 = vadd.f32 0.0, %v1594
        %1596 = vdwg.mxu0
        %1597 = vrot.lane.b32.xlu0 %v1460, 120
        %v1598 = vpop.permute.xlu0 %1597
        %1599 = vrot.lane.b32.xlu0 %v1515, 120
        %v1600 = vpop.permute.xlu0 %1599
        %1601 = vrot.lane.b32.xlu0 %v1518, 120
        %v1602 = vpop.permute.xlu0 %1601
        %v1603 = vsel %vm637, %v1598, 0
        %v1605 = vsel %vm637, %v1600, 0
        %v1607 = vsel %vm637, %v1602, 0
        %1609 = vmatpush.xpose.msra.mxu0 0.0
        %1610 = vmatpush.xpose.msra.mxu0 0.0
        %1611 = vmatpush.xpose.msra.mxu0 0.0
        %1612 = vmatpush.xpose.msra.mxu0 0.0
        %1613 = vmatpush.xpose.msra.mxu0 0.0
        %1614 = vmatpush.xpose.msra.mxu0 0.0
        %1615 = vmatpush.xpose.msra.mxu0 0.0
        %1616 = vmatpush.xpose.msra.mxu0 0.0
        %1617 = vmatpush.xpose.msra.mxu0 0.0
        %1618 = vmatpush.xpose.msra.mxu0 0.0
        %1619 = vmatpush.xpose.msra.mxu0 0.0
        %1620 = vmatpush.xpose.msra.mxu0 0.0
        %1621 = vmatpush.xpose.msra.mxu0 0.0
        %1622 = vmatpush.xpose.msra.mxu0 0.0
        %1623 = vmatpush.xpose.msra.mxu0 %v1607
        %1624 = vmatpush.xpose.msra.mxu0 %v1605
        %1625 = vmatmul.f32.gmra.mxu0 %v1603
        %v1626 = vpop.f32.mrf.mxu0
        %v1627 = vadd.f32 0.0, %v1626
        %1628 = vdwg.mxu0
        %v1629 = vmul.f32 %v1627, 0.35355338
        %v1630 = vsel %vm1556, %v1629, -inf
        %1631 = vmax.xlane.f32.xlu0 %v1630
        %v1632 = vpop.xlane.xlu0 %1631
        %v1633 = vsub.f32 %v1629, %v1632
        %v1634 = vmul.f32 %v1633, 1.442695
        %v1635 = vpow.pop %v1634
        %v1636 = vsel %vm1556, %v1635, 0.0
        %1637 = vadd.xlane.f32.xlu0 %v1636
        %v1638 = vpop.xlane.xlu0 %1637
        %v1639 = vrcp.pop %v1638
        %v1640 = vmul.f32 %v1635, %v1639
        %1641 = vrot.lane.b32.xlu0 %v1515, 88
        %v1642 = vpop.permute.xlu0 %1641
        %1643 = vrot.lane.b32.xlu0 %v1518, 88
        %v1644 = vpop.permute.xlu0 %1643
        %v1648 = vsel %vm1556, %v1640, 0
        %1650 = vmatpush.msra.mxu0 0.0
        %1651 = vmatpush.msra.mxu0 0.0
        %1652 = vmatpush.msra.mxu0 0.0
        %1653 = vmatpush.msra.mxu0 0.0
        %1654 = vmatpush.msra.mxu0 0.0
        %1655 = vmatpush.msra.mxu0 0.0
        %1656 = vmatpush.msra.mxu0 0.0
        %1657 = vmatpush.msra.mxu0 0.0
        %1658 = vmatpush.msra.mxu0 0.0
        %1659 = vmatpush.msra.mxu0 0.0
        %1660 = vmatpush.msra.mxu0 0.0
        %1661 = vmatpush.msra.mxu0 0.0
        %1662 = vmatpush.msra.mxu0 0.0
        %1663 = vmatpush.msra.mxu0 0.0
        %1664 = vmatpush.msra.mxu0 %v1644
        %1665 = vmatpush.msra.mxu0 %v1642
        %1666 = vmatmul.f32.gmra.mxu0 %v1648
        %v1667 = vpop.f32.mrf.mxu0
        %v1668 = vadd.f32 0.0, %v1667
        %1669 = vdwg.mxu0
        %v1671 = vsel %vm637, %v1668, 0
        %1673 = vmatpush.msra.mxu0 0.0
        %1674 = vmatpush.msra.mxu0 0.0
        %1675 = vmatpush.msra.mxu0 0.0
        %1676 = vmatpush.msra.mxu0 0.0
        %1677 = vmatpush.msra.mxu0 0.0
        %1678 = vmatpush.msra.mxu0 0.0
        %1679 = vmatpush.msra.mxu0 0.0
        %1680 = vmatpush.msra.mxu0 0.0
        %1681 = vmatpush.msra.mxu0 0.0
        %1682 = vmatpush.msra.mxu0 0.0
        %1683 = vmatpush.msra.mxu0 0.0
        %1684 = vmatpush.msra.mxu0 0.0
        %1685 = vmatpush.msra.mxu0 0.0
        %1686 = vmatpush.msra.mxu0 0.0
        %1687 = vmatpush.msra.mxu0 0.0
        %1688 = vmatpush.msra.mxu0 %v1432
        %1689 = vmatmul.f32.gmra.mxu0 %v1671
        %v1690 = vpop.f32.mrf.mxu0
        %v1691 = vadd.f32 0.0, %v1690
        %1692 = vdwg.mxu0
        %v1694 = vsel %vm637, %v1595, 0
        %1696 = vmatpush.msra.mxu0 0.0
        %1697 = vmatpush.msra.mxu0 0.0
        %1698 = vmatpush.msra.mxu0 0.0
        %1699 = vmatpush.msra.mxu0 0.0
        %1700 = vmatpush.msra.mxu0 0.0
        %1701 = vmatpush.msra.mxu0 0.0
        %1702 = vmatpush.msra.mxu0 0.0
        %1703 = vmatpush.msra.mxu0 0.0
        %1704 = vmatpush.msra.mxu0 0.0
        %1705 = vmatpush.msra.mxu0 0.0
        %1706 = vmatpush.msra.mxu0 0.0
        %1707 = vmatpush.msra.mxu0 0.0
        %1708 = vmatpush.msra.mxu0 0.0
        %1709 = vmatpush.msra.mxu0 0.0
        %1710 = vmatpush.msra.mxu0 0.0
        %1711 = vmatpush.msra.mxu0 %v1431
        %1712 = vmatmul.f32.gmra.mxu0 %v1694
        %v1713 = vpop.f32.mrf.mxu0
        %v1714 = vadd.f32 %v1691, %v1713
        %1715 = vdwg.mxu0
        %1716 = vrot.lane.b32.xlu0 %v1460, 112
        %v1717 = vpop.permute.xlu0 %1716
        %1718 = vrot.lane.b32.xlu0 %v1515, 112
        %v1719 = vpop.permute.xlu0 %1718
        %1720 = vrot.lane.b32.xlu0 %v1518, 112
        %v1721 = vpop.permute.xlu0 %1720
        %v1722 = vsel %vm637, %v1717, 0
        %v1724 = vsel %vm637, %v1719, 0
        %v1726 = vsel %vm637, %v1721, 0
        %1728 = vmatpush.xpose.msra.mxu0 0.0
        %1729 = vmatpush.xpose.msra.mxu0 0.0
        %1730 = vmatpush.xpose.msra.mxu0 0.0
        %1731 = vmatpush.xpose.msra.mxu0 0.0
        %1732 = vmatpush.xpose.msra.mxu0 0.0
        %1733 = vmatpush.xpose.msra.mxu0 0.0
        %1734 = vmatpush.xpose.msra.mxu0 0.0
        %1735 = vmatpush.xpose.msra.mxu0 0.0
        %1736 = vmatpush.xpose.msra.mxu0 0.0
        %1737 = vmatpush.xpose.msra.mxu0 0.0
        %1738 = vmatpush.xpose.msra.mxu0 0.0
        %1739 = vmatpush.xpose.msra.mxu0 0.0
        %1740 = vmatpush.xpose.msra.mxu0 0.0
        %1741 = vmatpush.xpose.msra.mxu0 0.0
        %1742 = vmatpush.xpose.msra.mxu0 %v1726
        %1743 = vmatpush.xpose.msra.mxu0 %v1724
        %1744 = vmatmul.f32.gmra.mxu0 %v1722
        %v1745 = vpop.f32.mrf.mxu0
        %v1746 = vadd.f32 0.0, %v1745
        %1747 = vdwg.mxu0
        %v1748 = vmul.f32 %v1746, 0.35355338
        %v1749 = vsel %vm1556, %v1748, -inf
        %1750 = vmax.xlane.f32.xlu0 %v1749
        %v1751 = vpop.xlane.xlu0 %1750
        %v1752 = vsub.f32 %v1748, %v1751
        %v1753 = vmul.f32 %v1752, 1.442695
        %v1754 = vpow.pop %v1753
        %v1755 = vsel %vm1556, %v1754, 0.0
        %1756 = vadd.xlane.f32.xlu0 %v1755
        %v1757 = vpop.xlane.xlu0 %1756
        %v1758 = vrcp.pop %v1757
        %v1759 = vmul.f32 %v1754, %v1758
        %1760 = vrot.lane.b32.xlu0 %v1515, 80
        %v1761 = vpop.permute.xlu0 %1760
        %1762 = vrot.lane.b32.xlu0 %v1518, 80
        %v1763 = vpop.permute.xlu0 %1762
        %v1767 = vsel %vm1556, %v1759, 0
        %1769 = vmatpush.msra.mxu0 0.0
        %1770 = vmatpush.msra.mxu0 0.0
        %1771 = vmatpush.msra.mxu0 0.0
        %1772 = vmatpush.msra.mxu0 0.0
        %1773 = vmatpush.msra.mxu0 0.0
        %1774 = vmatpush.msra.mxu0 0.0
        %1775 = vmatpush.msra.mxu0 0.0
        %1776 = vmatpush.msra.mxu0 0.0
        %1777 = vmatpush.msra.mxu0 0.0
        %1778 = vmatpush.msra.mxu0 0.0
        %1779 = vmatpush.msra.mxu0 0.0
        %1780 = vmatpush.msra.mxu0 0.0
        %1781 = vmatpush.msra.mxu0 0.0
        %1782 = vmatpush.msra.mxu0 0.0
        %1783 = vmatpush.msra.mxu0 %v1763
        %1784 = vmatpush.msra.mxu0 %v1761
        %1785 = vmatmul.f32.gmra.mxu0 %v1767
        %v1786 = vpop.f32.mrf.mxu0
        %v1787 = vadd.f32 0.0, %v1786
        %1788 = vdwg.mxu0
        %v1790 = vsel %vm637, %v1787, 0
        %1792 = vmatpush.msra.mxu0 0.0
        %1793 = vmatpush.msra.mxu0 0.0
        %1794 = vmatpush.msra.mxu0 0.0
        %1795 = vmatpush.msra.mxu0 0.0
        %1796 = vmatpush.msra.mxu0 0.0
        %1797 = vmatpush.msra.mxu0 0.0
        %1798 = vmatpush.msra.mxu0 0.0
        %1799 = vmatpush.msra.mxu0 0.0
        %1800 = vmatpush.msra.mxu0 0.0
        %1801 = vmatpush.msra.mxu0 0.0
        %1802 = vmatpush.msra.mxu0 0.0
        %1803 = vmatpush.msra.mxu0 0.0
        %1804 = vmatpush.msra.mxu0 0.0
        %1805 = vmatpush.msra.mxu0 0.0
        %1806 = vmatpush.msra.mxu0 0.0
        %1807 = vmatpush.msra.mxu0 %v1433
        %1808 = vmatmul.f32.gmra.mxu0 %v1790
        %v1809 = vpop.f32.mrf.mxu0
        %v1810 = vadd.f32 0.0, %v1809
        %1811 = vdwg.mxu0
        %v1812 = vadd.f32 %v1714, %v1810
        %1813 = vrot.lane.b32.xlu0 %v1460, 104
        %v1814 = vpop.permute.xlu0 %1813
        %1815 = vrot.lane.b32.xlu0 %v1515, 104
        %v1816 = vpop.permute.xlu0 %1815
        %1817 = vrot.lane.b32.xlu0 %v1518, 104
        %v1818 = vpop.permute.xlu0 %1817
        %v1819 = vsel %vm637, %v1814, 0
        %v1821 = vsel %vm637, %v1816, 0
        %v1823 = vsel %vm637, %v1818, 0
        %1825 = vmatpush.xpose.msra.mxu0 0.0
        %1826 = vmatpush.xpose.msra.mxu0 0.0
        %1827 = vmatpush.xpose.msra.mxu0 0.0
        %1828 = vmatpush.xpose.msra.mxu0 0.0
        %1829 = vmatpush.xpose.msra.mxu0 0.0
        %1830 = vmatpush.xpose.msra.mxu0 0.0
        %1831 = vmatpush.xpose.msra.mxu0 0.0
        %1832 = vmatpush.xpose.msra.mxu0 0.0
        %1833 = vmatpush.xpose.msra.mxu0 0.0
        %1834 = vmatpush.xpose.msra.mxu0 0.0
        %1835 = vmatpush.xpose.msra.mxu0 0.0
        %1836 = vmatpush.xpose.msra.mxu0 0.0
        %1837 = vmatpush.xpose.msra.mxu0 0.0
        %1838 = vmatpush.xpose.msra.mxu0 0.0
        %1839 = vmatpush.xpose.msra.mxu0 %v1823
        %1840 = vmatpush.xpose.msra.mxu0 %v1821
        %1841 = vmatmul.f32.gmra.mxu0 %v1819
        %v1842 = vpop.f32.mrf.mxu0
        %v1843 = vadd.f32 0.0, %v1842
        %1844 = vdwg.mxu0
        %v1845 = vmul.f32 %v1843, 0.35355338
        %v1846 = vsel %vm1556, %v1845, -inf
        %1847 = vmax.xlane.f32.xlu0 %v1846
        %v1848 = vpop.xlane.xlu0 %1847
        %v1849 = vsub.f32 %v1845, %v1848
        %v1850 = vmul.f32 %v1849, 1.442695
        %v1851 = vpow.pop %v1850
        %v1852 = vsel %vm1556, %v1851, 0.0
        %1853 = vadd.xlane.f32.xlu0 %v1852
        %v1854 = vpop.xlane.xlu0 %1853
        %v1855 = vrcp.pop %v1854
        %v1856 = vmul.f32 %v1851, %v1855
        %1857 = vrot.lane.b32.xlu0 %v1515, 72
        %v1858 = vpop.permute.xlu0 %1857
        %1859 = vrot.lane.b32.xlu0 %v1518, 72
        %v1860 = vpop.permute.xlu0 %1859
        %v1864 = vsel %vm1556, %v1856, 0
        %1866 = vmatpush.msra.mxu0 0.0
        %1867 = vmatpush.msra.mxu0 0.0
        %1868 = vmatpush.msra.mxu0 0.0
        %1869 = vmatpush.msra.mxu0 0.0
        %1870 = vmatpush.msra.mxu0 0.0
        %1871 = vmatpush.msra.mxu0 0.0
        %1872 = vmatpush.msra.mxu0 0.0
        %1873 = vmatpush.msra.mxu0 0.0
        %1874 = vmatpush.msra.mxu0 0.0
        %1875 = vmatpush.msra.mxu0 0.0
        %1876 = vmatpush.msra.mxu0 0.0
        %1877 = vmatpush.msra.mxu0 0.0
        %1878 = vmatpush.msra.mxu0 0.0
        %1879 = vmatpush.msra.mxu0 0.0
        %1880 = vmatpush.msra.mxu0 %v1860
        %1881 = vmatpush.msra.mxu0 %v1858
        %1882 = vmatmul.f32.gmra.mxu0 %v1864
        %v1883 = vpop.f32.mrf.mxu0
        %v1884 = vadd.f32 0.0, %v1883
        %1885 = vdwg.mxu0
        %v1887 = vsel %vm637, %v1884, 0
        %1889 = vmatpush.msra.mxu0 0.0
        %1890 = vmatpush.msra.mxu0 0.0
        %1891 = vmatpush.msra.mxu0 0.0
        %1892 = vmatpush.msra.mxu0 0.0
        %1893 = vmatpush.msra.mxu0 0.0
        %1894 = vmatpush.msra.mxu0 0.0
        %1895 = vmatpush.msra.mxu0 0.0
        %1896 = vmatpush.msra.mxu0 0.0
        %1897 = vmatpush.msra.mxu0 0.0
        %1898 = vmatpush.msra.mxu0 0.0
        %1899 = vmatpush.msra.mxu0 0.0
        %1900 = vmatpush.msra.mxu0 0.0
        %1901 = vmatpush.msra.mxu0 0.0
        %1902 = vmatpush.msra.mxu0 0.0
        %1903 = vmatpush.msra.mxu0 0.0
        %1904 = vmatpush.msra.mxu0 %v1434
        %1905 = vmatmul.f32.gmra.mxu0 %v1887
        %v1906 = vpop.f32.mrf.mxu0
        %v1907 = vadd.f32 0.0, %v1906
        %1908 = vdwg.mxu0
        %v1909 = vadd.f32 %v1812, %v1907
        %1910 = vst.msk [vmem:[#allocation2] sm:$0xff] %vm604, %v1909
        %v1912 = vsel %vm637, %v1463, 0
        %v1915 = vsel %vm637, %v1521, 0
        %v1918 = vsel %vm637, %v1524, 0
        %1920 = vmatpush.xpose.msra.mxu0 0.0
        %1921 = vmatpush.xpose.msra.mxu0 0.0
        %1922 = vmatpush.xpose.msra.mxu0 0.0
        %1923 = vmatpush.xpose.msra.mxu0 0.0
        %1924 = vmatpush.xpose.msra.mxu0 0.0
        %1925 = vmatpush.xpose.msra.mxu0 0.0
        %1926 = vmatpush.xpose.msra.mxu0 0.0
        %1927 = vmatpush.xpose.msra.mxu0 0.0
        %1928 = vmatpush.xpose.msra.mxu0 0.0
        %1929 = vmatpush.xpose.msra.mxu0 0.0
        %1930 = vmatpush.xpose.msra.mxu0 0.0
        %1931 = vmatpush.xpose.msra.mxu0 0.0
        %1932 = vmatpush.xpose.msra.mxu0 0.0
        %1933 = vmatpush.xpose.msra.mxu0 0.0
        %1934 = vmatpush.xpose.msra.mxu0 %v1918
        %1935 = vmatpush.xpose.msra.mxu0 %v1915
        %1936 = vmatmul.f32.gmra.mxu0 %v1912
        %v1937 = vpop.f32.mrf.mxu0
        %v1938 = vadd.f32 0.0, %v1937
        %1939 = vdwg.mxu0
        %v1940 = vmul.f32 %v1938, 0.35355338
        %v1941 = vsel %vm1556, %v1940, -inf
        %1942 = vmax.xlane.f32.xlu0 %v1941
        %v1943 = vpop.xlane.xlu0 %1942
        %v1944 = vsub.f32 %v1940, %v1943
        %v1945 = vmul.f32 %v1944, 1.442695
        %v1946 = vpow.pop %v1945
        %v1947 = vsel %vm1556, %v1946, 0.0
        %1948 = vadd.xlane.f32.xlu0 %v1947
        %v1949 = vpop.xlane.xlu0 %1948
        %v1950 = vrcp.pop %v1949
        %v1951 = vmul.f32 %v1946, %v1950
        %1952 = vrot.lane.b32.xlu0 %v1521, 96
        %v1953 = vpop.permute.xlu0 %1952
        %1954 = vrot.lane.b32.xlu0 %v1524, 96
        %v1955 = vpop.permute.xlu0 %1954
        %v1959 = vsel %vm1556, %v1951, 0
        %1961 = vmatpush.msra.mxu0 0.0
        %1962 = vmatpush.msra.mxu0 0.0
        %1963 = vmatpush.msra.mxu0 0.0
        %1964 = vmatpush.msra.mxu0 0.0
        %1965 = vmatpush.msra.mxu0 0.0
        %1966 = vmatpush.msra.mxu0 0.0
        %1967 = vmatpush.msra.mxu0 0.0
        %1968 = vmatpush.msra.mxu0 0.0
        %1969 = vmatpush.msra.mxu0 0.0
        %1970 = vmatpush.msra.mxu0 0.0
        %1971 = vmatpush.msra.mxu0 0.0
        %1972 = vmatpush.msra.mxu0 0.0
        %1973 = vmatpush.msra.mxu0 0.0
        %1974 = vmatpush.msra.mxu0 0.0
        %1975 = vmatpush.msra.mxu0 %v1955
        %1976 = vmatpush.msra.mxu0 %v1953
        %1977 = vmatmul.f32.gmra.mxu0 %v1959
        %v1978 = vpop.f32.mrf.mxu0
        %v1979 = vadd.f32 0.0, %v1978
        %1980 = vdwg.mxu0
        %1981 = vrot.lane.b32.xlu0 %v1463, 120
        %v1982 = vpop.permute.xlu0 %1981
        %1983 = vrot.lane.b32.xlu0 %v1521, 120
        %v1984 = vpop.permute.xlu0 %1983
        %1985 = vrot.lane.b32.xlu0 %v1524, 120
        %v1986 = vpop.permute.xlu0 %1985
        %v1987 = vsel %vm637, %v1982, 0
        %v1989 = vsel %vm637, %v1984, 0
        %v1991 = vsel %vm637, %v1986, 0
        %1993 = vmatpush.xpose.msra.mxu0 0.0
        %1994 = vmatpush.xpose.msra.mxu0 0.0
        %1995 = vmatpush.xpose.msra.mxu0 0.0
        %1996 = vmatpush.xpose.msra.mxu0 0.0
        %1997 = vmatpush.xpose.msra.mxu0 0.0
        %1998 = vmatpush.xpose.msra.mxu0 0.0
        %1999 = vmatpush.xpose.msra.mxu0 0.0
        %2000 = vmatpush.xpose.msra.mxu0 0.0
        %2001 = vmatpush.xpose.msra.mxu0 0.0
        %2002 = vmatpush.xpose.msra.mxu0 0.0
        %2003 = vmatpush.xpose.msra.mxu0 0.0
        %2004 = vmatpush.xpose.msra.mxu0 0.0
        %2005 = vmatpush.xpose.msra.mxu0 0.0
        %2006 = vmatpush.xpose.msra.mxu0 0.0
        %2007 = vmatpush.xpose.msra.mxu0 %v1991
        %2008 = vmatpush.xpose.msra.mxu0 %v1989
        %2009 = vmatmul.f32.gmra.mxu0 %v1987
        %v2010 = vpop.f32.mrf.mxu0
        %v2011 = vadd.f32 0.0, %v2010
        %2012 = vdwg.mxu0
        %v2013 = vmul.f32 %v2011, 0.35355338
        %v2014 = vsel %vm1556, %v2013, -inf
        %2015 = vmax.xlane.f32.xlu0 %v2014
        %v2016 = vpop.xlane.xlu0 %2015
        %v2017 = vsub.f32 %v2013, %v2016
        %v2018 = vmul.f32 %v2017, 1.442695
        %v2019 = vpow.pop %v2018
        %v2020 = vsel %vm1556, %v2019, 0.0
        %2021 = vadd.xlane.f32.xlu0 %v2020
        %v2022 = vpop.xlane.xlu0 %2021
        %v2023 = vrcp.pop %v2022
        %v2024 = vmul.f32 %v2019, %v2023
        %2025 = vrot.lane.b32.xlu0 %v1521, 88
        %v2026 = vpop.permute.xlu0 %2025
        %2027 = vrot.lane.b32.xlu0 %v1524, 88
        %v2028 = vpop.permute.xlu0 %2027
        %v2032 = vsel %vm1556, %v2024, 0
        %2034 = vmatpush.msra.mxu0 0.0
        %2035 = vmatpush.msra.mxu0 0.0
        %2036 = vmatpush.msra.mxu0 0.0
        %2037 = vmatpush.msra.mxu0 0.0
        %2038 = vmatpush.msra.mxu0 0.0
        %2039 = vmatpush.msra.mxu0 0.0
        %2040 = vmatpush.msra.mxu0 0.0
        %2041 = vmatpush.msra.mxu0 0.0
        %2042 = vmatpush.msra.mxu0 0.0
        %2043 = vmatpush.msra.mxu0 0.0
        %2044 = vmatpush.msra.mxu0 0.0
        %2045 = vmatpush.msra.mxu0 0.0
        %2046 = vmatpush.msra.mxu0 0.0
        %2047 = vmatpush.msra.mxu0 0.0
        %2048 = vmatpush.msra.mxu0 %v2028
        %2049 = vmatpush.msra.mxu0 %v2026
        %2050 = vmatmul.f32.gmra.mxu0 %v2032
        %v2051 = vpop.f32.mrf.mxu0
        %v2052 = vadd.f32 0.0, %v2051
        %2053 = vdwg.mxu0
        %v2055 = vsel %vm637, %v2052, 0
        %2057 = vmatpush.msra.mxu0 0.0
        %2058 = vmatpush.msra.mxu0 0.0
        %2059 = vmatpush.msra.mxu0 0.0
        %2060 = vmatpush.msra.mxu0 0.0
        %2061 = vmatpush.msra.mxu0 0.0
        %2062 = vmatpush.msra.mxu0 0.0
        %2063 = vmatpush.msra.mxu0 0.0
        %2064 = vmatpush.msra.mxu0 0.0
        %2065 = vmatpush.msra.mxu0 0.0
        %2066 = vmatpush.msra.mxu0 0.0
        %2067 = vmatpush.msra.mxu0 0.0
        %2068 = vmatpush.msra.mxu0 0.0
        %2069 = vmatpush.msra.mxu0 0.0
        %2070 = vmatpush.msra.mxu0 0.0
        %2071 = vmatpush.msra.mxu0 0.0
        %2072 = vmatpush.msra.mxu0 %v1432
        %2073 = vmatmul.f32.gmra.mxu0 %v2055
        %v2074 = vpop.f32.mrf.mxu0
        %v2075 = vadd.f32 0.0, %v2074
        %2076 = vdwg.mxu0
        %v2078 = vsel %vm637, %v1979, 0
        %2080 = vmatpush.msra.mxu0 0.0
        %2081 = vmatpush.msra.mxu0 0.0
        %2082 = vmatpush.msra.mxu0 0.0
        %2083 = vmatpush.msra.mxu0 0.0
        %2084 = vmatpush.msra.mxu0 0.0
        %2085 = vmatpush.msra.mxu0 0.0
        %2086 = vmatpush.msra.mxu0 0.0
        %2087 = vmatpush.msra.mxu0 0.0
        %2088 = vmatpush.msra.mxu0 0.0
        %2089 = vmatpush.msra.mxu0 0.0
        %2090 = vmatpush.msra.mxu0 0.0
        %2091 = vmatpush.msra.mxu0 0.0
        %2092 = vmatpush.msra.mxu0 0.0
        %2093 = vmatpush.msra.mxu0 0.0
        %2094 = vmatpush.msra.mxu0 0.0
        %2095 = vmatpush.msra.mxu0 %v1431
        %2096 = vmatmul.f32.gmra.mxu0 %v2078
        %v2097 = vpop.f32.mrf.mxu0
        %v2098 = vadd.f32 %v2075, %v2097
        %2099 = vdwg.mxu0
        %2100 = vrot.lane.b32.xlu0 %v1463, 112
        %v2101 = vpop.permute.xlu0 %2100
        %2102 = vrot.lane.b32.xlu0 %v1521, 112
        %v2103 = vpop.permute.xlu0 %2102
        %2104 = vrot.lane.b32.xlu0 %v1524, 112
        %v2105 = vpop.permute.xlu0 %2104
        %v2106 = vsel %vm637, %v2101, 0
        %v2108 = vsel %vm637, %v2103, 0
        %v2110 = vsel %vm637, %v2105, 0
        %2112 = vmatpush.xpose.msra.mxu0 0.0
        %2113 = vmatpush.xpose.msra.mxu0 0.0
        %2114 = vmatpush.xpose.msra.mxu0 0.0
        %2115 = vmatpush.xpose.msra.mxu0 0.0
        %2116 = vmatpush.xpose.msra.mxu0 0.0
        %2117 = vmatpush.xpose.msra.mxu0 0.0
        %2118 = vmatpush.xpose.msra.mxu0 0.0
        %2119 = vmatpush.xpose.msra.mxu0 0.0
        %2120 = vmatpush.xpose.msra.mxu0 0.0
        %2121 = vmatpush.xpose.msra.mxu0 0.0
        %2122 = vmatpush.xpose.msra.mxu0 0.0
        %2123 = vmatpush.xpose.msra.mxu0 0.0
        %2124 = vmatpush.xpose.msra.mxu0 0.0
        %2125 = vmatpush.xpose.msra.mxu0 0.0
        %2126 = vmatpush.xpose.msra.mxu0 %v2110
        %2127 = vmatpush.xpose.msra.mxu0 %v2108
        %2128 = vmatmul.f32.gmra.mxu0 %v2106
        %v2129 = vpop.f32.mrf.mxu0
        %v2130 = vadd.f32 0.0, %v2129
        %2131 = vdwg.mxu0
        %v2132 = vmul.f32 %v2130, 0.35355338
        %v2133 = vsel %vm1556, %v2132, -inf
        %2134 = vmax.xlane.f32.xlu0 %v2133
        %v2135 = vpop.xlane.xlu0 %2134
        %v2136 = vsub.f32 %v2132, %v2135
        %v2137 = vmul.f32 %v2136, 1.442695
        %v2138 = vpow.pop %v2137
        %v2139 = vsel %vm1556, %v2138, 0.0
        %2140 = vadd.xlane.f32.xlu0 %v2139
        %v2141 = vpop.xlane.xlu0 %2140
        %v2142 = vrcp.pop %v2141
        %v2143 = vmul.f32 %v2138, %v2142
        %2144 = vrot.lane.b32.xlu0 %v1521, 80
        %v2145 = vpop.permute.xlu0 %2144
        %2146 = vrot.lane.b32.xlu0 %v1524, 80
        %v2147 = vpop.permute.xlu0 %2146
        %v2151 = vsel %vm1556, %v2143, 0
        %2153 = vmatpush.msra.mxu0 0.0
        %2154 = vmatpush.msra.mxu0 0.0
        %2155 = vmatpush.msra.mxu0 0.0
        %2156 = vmatpush.msra.mxu0 0.0
        %2157 = vmatpush.msra.mxu0 0.0
        %2158 = vmatpush.msra.mxu0 0.0
        %2159 = vmatpush.msra.mxu0 0.0
        %2160 = vmatpush.msra.mxu0 0.0
        %2161 = vmatpush.msra.mxu0 0.0
        %2162 = vmatpush.msra.mxu0 0.0
        %2163 = vmatpush.msra.mxu0 0.0
        %2164 = vmatpush.msra.mxu0 0.0
        %2165 = vmatpush.msra.mxu0 0.0
        %2166 = vmatpush.msra.mxu0 0.0
        %2167 = vmatpush.msra.mxu0 %v2147
        %2168 = vmatpush.msra.mxu0 %v2145
        %2169 = vmatmul.f32.gmra.mxu0 %v2151
        %v2170 = vpop.f32.mrf.mxu0
        %v2171 = vadd.f32 0.0, %v2170
        %2172 = vdwg.mxu0
        %v2174 = vsel %vm637, %v2171, 0
        %2176 = vmatpush.msra.mxu0 0.0
        %2177 = vmatpush.msra.mxu0 0.0
        %2178 = vmatpush.msra.mxu0 0.0
        %2179 = vmatpush.msra.mxu0 0.0
        %2180 = vmatpush.msra.mxu0 0.0
        %2181 = vmatpush.msra.mxu0 0.0
        %2182 = vmatpush.msra.mxu0 0.0
        %2183 = vmatpush.msra.mxu0 0.0
        %2184 = vmatpush.msra.mxu0 0.0
        %2185 = vmatpush.msra.mxu0 0.0
        %2186 = vmatpush.msra.mxu0 0.0
        %2187 = vmatpush.msra.mxu0 0.0
        %2188 = vmatpush.msra.mxu0 0.0
        %2189 = vmatpush.msra.mxu0 0.0
        %2190 = vmatpush.msra.mxu0 0.0
        %2191 = vmatpush.msra.mxu0 %v1433
        %2192 = vmatmul.f32.gmra.mxu0 %v2174
        %v2193 = vpop.f32.mrf.mxu0
        %v2194 = vadd.f32 0.0, %v2193
        %2195 = vdwg.mxu0
        %v2196 = vadd.f32 %v2098, %v2194
        %2197 = vrot.lane.b32.xlu0 %v1463, 104
        %v2198 = vpop.permute.xlu0 %2197
        %2199 = vrot.lane.b32.xlu0 %v1521, 104
        %v2200 = vpop.permute.xlu0 %2199
        %2201 = vrot.lane.b32.xlu0 %v1524, 104
        %v2202 = vpop.permute.xlu0 %2201
        %v2203 = vsel %vm637, %v2198, 0
        %v2205 = vsel %vm637, %v2200, 0
        %v2207 = vsel %vm637, %v2202, 0
        %2209 = vmatpush.xpose.msra.mxu0 0.0
        %2210 = vmatpush.xpose.msra.mxu0 0.0
        %2211 = vmatpush.xpose.msra.mxu0 0.0
        %2212 = vmatpush.xpose.msra.mxu0 0.0
        %2213 = vmatpush.xpose.msra.mxu0 0.0
        %2214 = vmatpush.xpose.msra.mxu0 0.0
        %2215 = vmatpush.xpose.msra.mxu0 0.0
        %2216 = vmatpush.xpose.msra.mxu0 0.0
        %2217 = vmatpush.xpose.msra.mxu0 0.0
        %2218 = vmatpush.xpose.msra.mxu0 0.0
        %2219 = vmatpush.xpose.msra.mxu0 0.0
        %2220 = vmatpush.xpose.msra.mxu0 0.0
        %2221 = vmatpush.xpose.msra.mxu0 0.0
        %2222 = vmatpush.xpose.msra.mxu0 0.0
        %2223 = vmatpush.xpose.msra.mxu0 %v2207
        %2224 = vmatpush.xpose.msra.mxu0 %v2205
        %2225 = vmatmul.f32.gmra.mxu0 %v2203
        %v2226 = vpop.f32.mrf.mxu0
        %v2227 = vadd.f32 0.0, %v2226
        %2228 = vdwg.mxu0
        %v2229 = vmul.f32 %v2227, 0.35355338
        %v2230 = vsel %vm1556, %v2229, -inf
        %2231 = vmax.xlane.f32.xlu0 %v2230
        %v2232 = vpop.xlane.xlu0 %2231
        %v2233 = vsub.f32 %v2229, %v2232
        %v2234 = vmul.f32 %v2233, 1.442695
        %v2235 = vpow.pop %v2234
        %v2236 = vsel %vm1556, %v2235, 0.0
        %2237 = vadd.xlane.f32.xlu0 %v2236
        %v2238 = vpop.xlane.xlu0 %2237
        %v2239 = vrcp.pop %v2238
        %v2240 = vmul.f32 %v2235, %v2239
        %2241 = vrot.lane.b32.xlu0 %v1521, 72
        %v2242 = vpop.permute.xlu0 %2241
        %2243 = vrot.lane.b32.xlu0 %v1524, 72
        %v2244 = vpop.permute.xlu0 %2243
        %v2248 = vsel %vm1556, %v2240, 0
        %2250 = vmatpush.msra.mxu0 0.0
        %2251 = vmatpush.msra.mxu0 0.0
        %2252 = vmatpush.msra.mxu0 0.0
        %2253 = vmatpush.msra.mxu0 0.0
        %2254 = vmatpush.msra.mxu0 0.0
        %2255 = vmatpush.msra.mxu0 0.0
        %2256 = vmatpush.msra.mxu0 0.0
        %2257 = vmatpush.msra.mxu0 0.0
        %2258 = vmatpush.msra.mxu0 0.0
        %2259 = vmatpush.msra.mxu0 0.0
        %2260 = vmatpush.msra.mxu0 0.0
        %2261 = vmatpush.msra.mxu0 0.0
        %2262 = vmatpush.msra.mxu0 0.0
        %2263 = vmatpush.msra.mxu0 0.0
        %2264 = vmatpush.msra.mxu0 %v2244
        %2265 = vmatpush.msra.mxu0 %v2242
        %2266 = vmatmul.f32.gmra.mxu0 %v2248
        %v2267 = vpop.f32.mrf.mxu0
        %v2268 = vadd.f32 0.0, %v2267
        %2269 = vdwg.mxu0
        %v2271 = vsel %vm637, %v2268, 0
        %2273 = vmatpush.msra.mxu0 0.0
        %2274 = vmatpush.msra.mxu0 0.0
        %2275 = vmatpush.msra.mxu0 0.0
        %2276 = vmatpush.msra.mxu0 0.0
        %2277 = vmatpush.msra.mxu0 0.0
        %2278 = vmatpush.msra.mxu0 0.0
        %2279 = vmatpush.msra.mxu0 0.0
        %2280 = vmatpush.msra.mxu0 0.0
        %2281 = vmatpush.msra.mxu0 0.0
        %2282 = vmatpush.msra.mxu0 0.0
        %2283 = vmatpush.msra.mxu0 0.0
        %2284 = vmatpush.msra.mxu0 0.0
        %2285 = vmatpush.msra.mxu0 0.0
        %2286 = vmatpush.msra.mxu0 0.0
        %2287 = vmatpush.msra.mxu0 0.0
        %2288 = vmatpush.msra.mxu0 %v1434
        %2289 = vmatmul.f32.gmra.mxu0 %v2271
        %v2290 = vpop.f32.mrf.mxu0
        %v2291 = vadd.f32 0.0, %v2290
        %2292 = vdwg.mxu0
        %v2293 = vadd.f32 %v2196, %v2291
        %2294 = vst.msk [vmem:[#allocation2 + $0x8] sm:$0xff] %vm604, %v2293
        %v2295 = vld [vmem:[#allocation2] sm:$0xff]
        %v2296 = vld [vmem:[#allocation2 + $0x8] sm:$0xff]
        %v2297 = vperm.slane %v593, 3
        %v2298 = vadd.f32 %v2295, %v2297
        %v2299 = vadd.f32 %v2296, %v2297
        %v2300 = vadd.f32 %v1425, %v2298
        %v2301 = vadd.f32 %v1426, %v2299
        %v2302 = vsel %vm604, %v2300, 0.0
        %2303 = vadd.xlane.f32.xlu0 %v2302
        %v2304 = vpop.xlane.xlu0 %2303
        %v2305 = vsel %vm604, %v2301, 0.0
        %2306 = vadd.xlane.f32.xlu0 %v2305
        %v2307 = vpop.xlane.xlu0 %2306
        %v2308 = vmul.f32 %v2304, %v1378
        %v2309 = vmul.f32 %v2307, %v1378
        %v2310 = vmul.f32 %v2300, %v2300
        %v2311 = vmul.f32 %v2301, %v2301
        %v2312 = vsel %vm604, %v2310, 0.0
        %2313 = vadd.xlane.f32.xlu0 %v2312
        %v2314 = vpop.xlane.xlu0 %2313
        %v2315 = vsel %vm604, %v2311, 0.0
        %2316 = vadd.xlane.f32.xlu0 %v2315
        %v2317 = vpop.xlane.xlu0 %2316
        %v2318 = vmul.f32 %v2314, %v1378
        %v2319 = vmul.f32 %v2317, %v1378
        %v2320 = vmul.f32 %v2308, %v2308
        %v2321 = vmul.f32 %v2309, %v2309
        %v2322 = vsub.f32 %v2318, %v2320
        %v2323 = vsub.f32 %v2319, %v2321
        %v2324 = vsub.f32 %v2300, %v2308
        %v2325 = vsub.f32 %v2301, %v2309
        %v2326 = vadd.f32 %v2322, 1e-05
        %v2327 = vadd.f32 %v2323, 1e-05
        %v2328 = vrsqrt.pop %v2326
        %v2329 = vmul.f32 %v2328, %v2326
        %v2330 = vmul.f32 %v2329, %v2328
        %v2331 = vmul.f32 0.5, %v2330
        %v2332 = vsub.f32 1.5, %v2331
        %v2333 = vmul.f32 %v2328, %v2332
        %vm2334 = vweird.f32 %v2326
        %vm2335 = vweird.f32 %v2328
        %vm2336 = vmor %vm2334, %vm2335
        %v2337 = vsel %vm2336, %v2328, %v2333
        %v2338 = vrsqrt.pop %v2327
        %v2339 = vmul.f32 %v2338, %v2327
        %v2340 = vmul.f32 %v2339, %v2338
        %v2341 = vmul.f32 0.5, %v2340
        %v2342 = vsub.f32 1.5, %v2341
        %v2343 = vmul.f32 %v2338, %v2342
        %vm2344 = vweird.f32 %v2327
        %vm2345 = vweird.f32 %v2338
        %vm2346 = vmor %vm2344, %vm2345
        %v2347 = vsel %vm2346, %v2338, %v2343
        %v2348 = vmul.f32 %v2324, %v2337
        %v2349 = vmul.f32 %v2325, %v2347
        %v2350 = vperm.slane %v593, 7
        %v2351 = vmul.f32 %v2348, %v2350
        %v2352 = vmul.f32 %v2349, %v2350
        %v2353 = vperm.slane %v594, 2
        %v2354 = vadd.f32 %v2351, %v2353
        %v2355 = vadd.f32 %v2352, %v2353
        %v2356 = vld [vmem:[%s484] sm:$0xff]
        %v2357 = vld [vmem:[%s484 + $0x8] sm:$0xff]
        %v2358 = vld [vmem:[%s484 + $0x10] sm:$0xff]
        %v2359 = vld [vmem:[%s484 + $0x18] sm:$0xff]
        %v2360 = vperm.slane %v593, 4
        %v2362 = vsel %vm604, %v2354, 0
        %v2365 = vsel %vm604, %v2355, 0
        %2367 = vmatpush.msra.mxu0 0.0
        %2368 = vmatpush.msra.mxu0 0.0
        %2369 = vmatpush.msra.mxu0 0.0
        %2370 = vmatpush.msra.mxu0 0.0
        %2371 = vmatpush.msra.mxu0 0.0
        %2372 = vmatpush.msra.mxu0 0.0
        %2373 = vmatpush.msra.mxu0 0.0
        %2374 = vmatpush.msra.mxu0 0.0
        %2375 = vmatpush.msra.mxu0 0.0
        %2376 = vmatpush.msra.mxu0 0.0
        %2377 = vmatpush.msra.mxu0 0.0
        %2378 = vmatpush.msra.mxu0 0.0
        %2379 = vmatpush.msra.mxu0 %v2359
        %2380 = vmatpush.msra.mxu0 %v2358
        %2381 = vmatpush.msra.mxu0 %v2357
        %2382 = vmatpush.msra.mxu0 %v2356
        %2383 = vmatmul.f32.gmra.mxu0 %v2362
        %v2384 = vpop.f32.mrf.mxu0
        %v2385 = vadd.f32 %v2360, %v2384
        %2386 = vmatmul.f32.gmra.mxu0 %v2365
        %v2387 = vpop.f32.mrf.mxu0
        %v2388 = vadd.f32 %v2360, %v2387
        %2389 = vdwg.mxu0
        %v2390 = vmax.f32 %v2385, 0.0
        %v2391 = vmax.f32 %v2388, 0.0
        %v2392 = vld [vmem:[%s576] sm:$0xff]
        %v2393 = vld [vmem:[%s576 + $0x8] sm:$0xff]
        %v2394 = vld [vmem:[%s576 + $0x10] sm:$0xff]
        %v2395 = vld [vmem:[%s576 + $0x18] sm:$0xff]
        %v2396 = vld [vmem:[%s576 + $0x20] sm:$0xff]
        %v2397 = vld [vmem:[%s576 + $0x28] sm:$0xff]
        %v2398 = vld [vmem:[%s576 + $0x30] sm:$0xff]
        %v2399 = vld [vmem:[%s576 + $0x38] sm:$0xff]
        %v2400 = vperm.slane %v593, 5
        %vm2401 = vcmask 523264
        %v2403 = vsel %vm2401, %v2390, 0
        %v2406 = vsel %vm2401, %v2391, 0
        %2408 = vmatpush.msra.mxu0 0.0
        %2409 = vmatpush.msra.mxu0 0.0
        %2410 = vmatpush.msra.mxu0 0.0
        %2411 = vmatpush.msra.mxu0 0.0
        %2412 = vmatpush.msra.mxu0 0.0
        %2413 = vmatpush.msra.mxu0 0.0
        %2414 = vmatpush.msra.mxu0 0.0
        %2415 = vmatpush.msra.mxu0 0.0
        %2416 = vmatpush.msra.mxu0 %v2399
        %2417 = vmatpush.msra.mxu0 %v2398
        %2418 = vmatpush.msra.mxu0 %v2397
        %2419 = vmatpush.msra.mxu0 %v2396
        %2420 = vmatpush.msra.mxu0 %v2395
        %2421 = vmatpush.msra.mxu0 %v2394
        %2422 = vmatpush.msra.mxu0 %v2393
        %2423 = vmatpush.msra.mxu0 %v2392
        %2424 = vmatmul.f32.gmra.mxu0 %v2403
        %v2425 = vpop.f32.mrf.mxu0
        %v2426 = vadd.f32 %v2400, %v2425
        %2427 = vmatmul.f32.gmra.mxu0 %v2406
        %v2428 = vpop.f32.mrf.mxu0
        %v2429 = vadd.f32 %v2400, %v2428
        %2430 = vdwg.mxu0
        %v2431 = vadd.f32 %v2354, %v2426
        %v2432 = vadd.f32 %v2355, %v2429
        %v2433 = vsel %vm604, %v2431, 0.0
        %2434 = vadd.xlane.f32.xlu0 %v2433
        %v2435 = vpop.xlane.xlu0 %2434
        %v2436 = vsel %vm604, %v2432, 0.0
        %2437 = vadd.xlane.f32.xlu0 %v2436
        %v2438 = vpop.xlane.xlu0 %2437
        %v2439 = vmul.f32 %v2435, %v1378
        %v2440 = vmul.f32 %v2438, %v1378
        %v2441 = vmul.f32 %v2431, %v2431
        %v2442 = vmul.f32 %v2432, %v2432
        %v2443 = vsel %vm604, %v2441, 0.0
        %2444 = vadd.xlane.f32.xlu0 %v2443
        %v2445 = vpop.xlane.xlu0 %2444
        %v2446 = vsel %vm604, %v2442, 0.0
        %2447 = vadd.xlane.f32.xlu0 %v2446
        %v2448 = vpop.xlane.xlu0 %2447
        %v2449 = vmul.f32 %v2445, %v1378
        %v2450 = vmul.f32 %v2448, %v1378
        %v2451 = vmul.f32 %v2439, %v2439
        %v2452 = vmul.f32 %v2440, %v2440
        %v2453 = vsub.f32 %v2449, %v2451
        %v2454 = vsub.f32 %v2450, %v2452
        %v2455 = vsub.f32 %v2431, %v2439
        %v2456 = vsub.f32 %v2432, %v2440
        %v2457 = vadd.f32 %v2453, 1e-05
        %v2458 = vadd.f32 %v2454, 1e-05
        %v2459 = vrsqrt.pop %v2457
        %v2460 = vmul.f32 %v2459, %v2457
        %v2461 = vmul.f32 %v2460, %v2459
        %v2462 = vmul.f32 0.5, %v2461
        %v2463 = vsub.f32 1.5, %v2462
        %v2464 = vmul.f32 %v2459, %v2463
        %vm2465 = vweird.f32 %v2457
        %vm2466 = vweird.f32 %v2459
        %vm2467 = vmor %vm2465, %vm2466
        %v2468 = vsel %vm2467, %v2459, %v2464
        %v2469 = vrsqrt.pop %v2458
        %v2470 = vmul.f32 %v2469, %v2458
        %v2471 = vmul.f32 %v2470, %v2469
        %v2472 = vmul.f32 0.5, %v2471
        %v2473 = vsub.f32 1.5, %v2472
        %v2474 = vmul.f32 %v2469, %v2473
        %vm2475 = vweird.f32 %v2458
        %vm2476 = vweird.f32 %v2469
        %vm2477 = vmor %vm2475, %vm2476
        %v2478 = vsel %vm2477, %v2469, %v2474
        %v2479 = vmul.f32 %v2455, %v2468
        %v2480 = vmul.f32 %v2456, %v2478
        %v2481 = vperm.slane %v594, 0
        %v2482 = vmul.f32 %v2479, %v2481
        %v2483 = vmul.f32 %v2480, %v2481
        %v2484 = vperm.slane %v594, 3
        %v2485 = vadd.f32 %v2482, %v2484
        %v2486 = vadd.f32 %v2483, %v2484
        %2487 = vst.msk [vmem:[#allocation14] sm:$0xff] %vm604, %v2485
        %2488 = vst.msk [vmem:[#allocation14 + $0x8] sm:$0xff] %vm604, %v2486
        // Predicated region
        $region89: #{tpu_custom_call.1} parent=59 // pred_check
          %p2489 = pneg %p288
        $region90: #{tpu_custom_call.1} parent=59 // pred_check_branch
          %2491 = sbr.rel (%p2489) target = $region92
        $region91: #{tpu_custom_call.1} parent=59 // pred_region
          %2493 = vsyncadd [#allocation5], 0
          %s2494 = sshll.u32 [#allocation14], 4
          %s2495 = int_to_ptr.vmem [resolvable:$true] %s2494
          %s2496 = sshll.u32 %s10, 4
          %s2497 = int_to_ptr.hbm [resolvable:$true] %s2496
          %2502 = dma.vmem_to_hbm [thread:$0]  %s2495, 256, %s2497, [#allocation5], 128, 128, 8
        $region92: #{tpu_custom_call.1} parent=59 // pred_fallthru
          _
        // Predicated region
        $region93: #{tpu_custom_call.1} parent=59 // pred_check
          %p2503 = pneg %p288
        $region94: #{tpu_custom_call.1} parent=59 // pred_check_branch
          %2505 = sbr.rel (%p2503) target = $region96
        $region95: #{tpu_custom_call.1} parent=59 // pred_region
          %2507 = dma.done [#allocation5], 256
        $region96: #{tpu_custom_call.1} parent=59 // pred_fallthru
          _
      $region60: #{tpu_custom_call.1} parent=5 // pred_fallthru
        _
      %p2508 = scmp.le.s32.totalorder 2, %s25
      // Predicated region
      $region97: #{tpu_custom_call.1} parent=5 // pred_check
        %p2509 = pneg %p2508
      $region98: #{tpu_custom_call.1} parent=5 // pred_check_branch
        %2511 = sbr.rel (%p2509) target = $region100
      $region99: #{tpu_custom_call.1} parent=5 // pred_region
        %s2512 = ssub.s32 %s25, 2
      $region100: #{tpu_custom_call.1} parent=5 // pred_fallthru
        _
    $region6: #{tpu_custom_call.1} parent=1 // loop_footer
      %s29 = sadd.s32 1, %s25
    $region7: #{tpu_custom_call.1} parent=1 // loop_footer_branch
      %24 = sbr.rel target = $region3
    $region8: #{tpu_custom_call.1} parent=1 // loop_exit
      _
    %2513 = vsyncpa [#allocation4], 1
    %s2514 = scalar_lea.sflag [#allocation4], 1
    %2515 = vsyncpa %s2514, 1
    %2516 = vsyncpa [#allocation7], 1
    %2517 = vsyncpa [#allocation10], 1
    %s2518 = scalar_lea.sflag [#allocation10], 1
    %2519 = vsyncpa %s2518, 1
    %2520 = vsyncpa [#allocation13], 1
    %s2521 = scalar_lea.sflag [#allocation13], 1
    %2522 = vsyncpa %s2521, 1
    %2523 = vsyncpa [#allocation5], 1
    %s2524 = scalar_lea.sflag [#allocation5], 1
    %2525 = vsyncpa %s2524, 1

</llo_original>
